<compile_context>
chip_gen: v6e
topology: v6e:2x2x1
jax: 0.10.0
libtpu: 0.0.40
codegen_flags: <defaults>
</compile_context>

<pallas_src>
import functools

import jax
import jax.numpy as jnp
from jax.experimental import pallas as pl
from jax.experimental.pallas import tpu as pltpu


def _se1d_kernel(x_ref, w1t_ref, w2t_ref, o_ref, *, inv_l):
    """One batch tile: global pool over L, SE MLP, channel-wise rescale.

    x_ref  : (TB, C, Lp) input tile (Lp = L padded to a multiple of 128)
    w1t_ref: (C, H)      = W1.T   (W1: (H, C), bias-free)
    w2t_ref: (H, C)      = W2.T   (W2: (C, H), bias-free)
    o_ref  : (TB, C, Lp) output tile
    """
    # AdaptiveAvgPool1d(1): sum over L in f32 (only the (TB, C) accumulator is
    # f32; no full-block f32 copy), then scale by 1/L_original.  Padded zeros
    # contribute nothing to the sum.
    pooled = jnp.sum(x_ref[...], axis=-1, dtype=jnp.float32) * inv_l      # (TB, C)

    # se_block: Linear -> ReLU -> Linear -> Sigmoid (both bias-free).  These
    # matmuls are tiny and off the HBM-bound critical path, so run them at full
    # f32 precision for an exact match with the reference.
    h = jnp.dot(pooled, w1t_ref[...],
                preferred_element_type=jnp.float32,
                precision=jax.lax.Precision.HIGHEST)
    h = jnp.maximum(h, 0.0)
    s = jnp.dot(h, w2t_ref[...],
                preferred_element_type=jnp.float32,
                precision=jax.lax.Precision.HIGHEST)
    alpha = jax.nn.sigmoid(s)                                             # (TB, C)

    # Streamed channel-wise rescale (the HBM-bound hot path).  Re-index x_ref so
    # Mosaic reloads from the already-resident VMEM block instead of keeping the
    # whole tile live in vregs across the pool -> matmul -> sigmoid chain.
    o_ref[...] = x_ref[...] * alpha[:, :, None].astype(o_ref.dtype)


def prepare_se_params(w1, w2):
    """One-time prep: pre-transpose nn.Linear weights so there are no per-call
    XLA transposes.  w1: (H, C), w2: (C, H) in nn.Linear (out, in) layout."""
    return jnp.asarray(w1, jnp.float32).T, jnp.asarray(w2, jnp.float32).T


def _tpu_generation_info():
    """(min pipeline grid steps, physical VMEM bytes per TensorCore)."""
    kind = ""
    try:
        kind = jax.devices()[0].device_kind.lower()
    except Exception:
        pass
    is_v7 = "v7" in kind
    min_grid_steps = 4 if is_v7 else 2          # 2 TCs x double-buffering on v7x
    physical_vmem = (64 if is_v7 else 128) * 1024 * 1024
    return min_grid_steps, physical_vmem


def se_layer_1d(x, w1t, w2t, *, vmem_budget_bytes=24 * 1024 * 1024):
    """x: (B, C, L); w1t: (C, H) = W1.T; w2t: (H, C) = W2.T (both f32)."""
    B, C, L = x.shape
    itemsize = x.dtype.itemsize

    # ---- lane-density guard (as code): pad L to a multiple of 128 ------------
    # Lane-sparse output blocks fall back to masked vst.msk partial stores
    # (measured ~4.5x slower store stream).  Zero padding keeps the pooled sum
    # exact since 1/L uses the original length.
    LANE = 128
    Lp = pl.cdiv(L, LANE) * LANE
    x_in = x if Lp == L else jnp.pad(x, ((0, 0), (0, 0), (0, Lp - L)))
    # TODO(synk): for L << 128 a flattened (B, C*L) rescale path would avoid the
    # padding traffic entirely.
    # (bf16 note: full-C blocks are always legal; C a multiple of 16 only matters
    #  for sublane-packing efficiency.)

    row_bytes = C * Lp * itemsize
    min_steps, physical_vmem = _tpu_generation_info()

    # ---- tile-size heuristic: ~1 MiB blocks first, grid steps second ---------
    target_block_bytes = 1 * 1024 * 1024
    tb_target = max(1, pl.cdiv(target_block_bytes, row_bytes))   # >= ~1 MiB block
    tb_budget = max(1, vmem_budget_bytes // (4 * row_bytes))     # 2 in + 2 out bufs
    tb_steps = pl.cdiv(B, min_steps)                             # rows for min steps
    # Only shrink below the ~1 MiB target if B itself (or the budget) forces it;
    # create extra grid steps only while blocks stay at/above the target.
    tb = int(min(tb_budget, B, max(tb_target, tb_steps)))
    num_steps = pl.cdiv(B, tb)                                   # partial last block OK
    grid = (num_steps,)
    block_bytes = tb * row_bytes

    # Deeper input buffering only when per-step blocks are small (exposed DMA
    # issue latency) and there are enough steps to pipeline; keep VMEM accounting
    # in sync via n_x_bufs below.
    use_deep_buffering = (block_bytes < 512 * 1024) and (num_steps >= 3)
    n_x_bufs = 3 if use_deep_buffering else 2

    x_block = (tb, C, Lp)
    x_index = lambda b: (b, 0, 0)
    if use_deep_buffering:
        x_spec = pl.BlockSpec(x_block, x_index, pipeline_mode=pl.Buffered(3))
    else:
        x_spec = pl.BlockSpec(x_block, x_index)

    # ---- VMEM limit derived from the actual footprint ------------------------
    weight_bytes = 2 * int(w1t.size + w2t.size) * w1t.dtype.itemsize
    footprint = (n_x_bufs + 2) * block_bytes + weight_bytes
    vmem_limit = int(min(physical_vmem - 8 * 1024 * 1024,          # leave Mosaic headroom
                         max(32 * 1024 * 1024, footprint + 8 * 1024 * 1024)))

    # TODO(synk): on v7x, if the batch grid collapses to 1-2 steps with huge C*L,
    # a two-pass split (pooled-alpha pass, then an L-tiled "parallel" rescale
    # pass) would give the second TensorCore work; not needed for typical shapes.

    H = int(w1t.shape[1])
    cost = pl.CostEstimate(
        flops=int(2 * B * C * Lp + 4 * B * C * H),
        transcendentals=int(B * C),
        bytes_accessed=int(2 * B * C * Lp * itemsize
                           + int(w1t.size + w2t.size) * w1t.dtype.itemsize),
    )

    kernel = functools.partial(_se1d_kernel, inv_l=float(1.0 / L))

    out = pl.pallas_call(
        kernel,
        out_shape=jax.ShapeDtypeStruct((B, C, Lp), x.dtype),
        grid=grid,
        in_specs=[
            x_spec,
            # Constant block index across the grid -> fetched once, kept resident.
            pl.BlockSpec(w1t.shape, lambda b: (0, 0)),
            pl.BlockSpec(w2t.shape, lambda b: (0, 0)),
        ],
        out_specs=pl.BlockSpec(x_block, x_index),
        compiler_params=pltpu.CompilerParams(
            # Batch axis is embarrassingly parallel: lets v7x shard the grid
            # across its 2 TensorCores; no-op on single-core v5e/v6e.
            dimension_semantics=("parallel",),
            vmem_limit_bytes=vmem_limit,
        ),
        cost_estimate=cost,
    )(x_in, w1t, w2t)

    return out if Lp == L else out[:, :, :L]


if __name__ == "__main__":
    # Shapes consistent with SELayer1D(nChannels=32, reduction=16).
    # B=33 exercises the partial trailing batch block; L=200 exercises the
    # lane-padding path (padded to 256).
    B, C, L = 33, 32, 200
    reduction = 16
    H = C // reduction  # 2

    key = jax.random.PRNGKey(0)
    kx, k1, k2 = jax.random.split(key, 3)

    x = jax.random.normal(kx, (B, C, L), dtype=jnp.float32)
    # nn.Linear weight layout: (out_features, in_features), bias-free.
    bound1 = 1.0 / (C ** 0.5)
    bound2 = 1.0 / (H ** 0.5)
    w1 = jax.random.uniform(k1, (H, C), jnp.float32, -bound1, bound1)
    w2 = jax.random.uniform(k2, (C, H), jnp.float32, -bound2, bound2)

    w1t, w2t = prepare_se_params(w1, w2)   # one-time prep, not per-call
    out = se_layer_1d(x, w1t, w2t)
    jax.block_until_ready(out)

    # Pure-JAX reference (exactly the PyTorch forward: mean -> Linear -> ReLU ->
    # Linear -> Sigmoid -> broadcast multiply), with full-precision matmuls so
    # the comparison can be tight.
    pooled = jnp.mean(x, axis=-1)
    h_ref = jnp.maximum(jnp.dot(pooled, w1.T, precision=jax.lax.Precision.HIGHEST), 0.0)
    alpha = jax.nn.sigmoid(jnp.dot(h_ref, w2.T, precision=jax.lax.Precision.HIGHEST))
    ref = x * alpha[:, :, None]

    assert out.shape == ref.shape and out.dtype == ref.dtype
    max_err = float(jnp.max(jnp.abs(out - ref)))
    assert jnp.allclose(out, ref, atol=1e-5, rtol=1e-5), max_err

    print("KERNEL_OK")
</pallas_src>

<mosaic_0001>
module attributes {stable_mosaic.version = 11 : i64} {
  func.func @_se1d_kernel(%arg0: i32, %arg1: memref<32x32x256xf32, #tpu.memory_space<vmem>>, %arg2: memref<32x2xf32, #tpu.memory_space<vmem>>, %arg3: memref<2x32xf32, #tpu.memory_space<vmem>>, %arg4: memref<32x32x256xf32, #tpu.memory_space<vmem>>) attributes {dimension_semantics = [#tpu.dimension_semantics<parallel>], iteration_bounds = array<i64: 2>, scalar_prefetch = 0 : i64, scratch_operands = 0 : i64, tpu.core_type = #tpu.core_type<tc>, window_params = [{transform_indices = @transform_0, window_bounds = array<i64: 32, 32, 256>}, {pipeline_mode = #tpu.pipeline_mode<synchronous>, transform_indices = @transform_1, window_bounds = array<i64: 32, 2>}, {pipeline_mode = #tpu.pipeline_mode<synchronous>, transform_indices = @transform_2, window_bounds = array<i64: 2, 32>}, {transform_indices = @transform_3, window_bounds = array<i64: 32, 32, 256>}]} {
    %c0 = arith.constant 0 : index
    %c0_0 = arith.constant 0 : index
    %c0_1 = arith.constant 0 : index
    %0 = vector.load %arg1[%c0, %c0_0, %c0_1] : memref<32x32x256xf32, #tpu.memory_space<vmem>>, vector<32x32x256xf32>
    %cst = arith.constant dense<0.000000e+00> : vector<32x32xf32>
    %1 = vector.multi_reduction <add>, %0, %cst [2] : vector<32x32x256xf32> to vector<32x32xf32>
    %cst_2 = arith.constant 5.000000e-03 : f32
    %2 = vector.broadcast %cst_2 : f32 to vector<32x32xf32>
    %3 = arith.mulf %1, %2 : vector<32x32xf32>
    %c0_3 = arith.constant 0 : index
    %c0_4 = arith.constant 0 : index
    %4 = vector.load %arg2[%c0_3, %c0_4] : memref<32x2xf32, #tpu.memory_space<vmem>>, vector<32x2xf32>
    %cst_5 = arith.constant dense<0.000000e+00> : vector<32x2xf32>
    %5 = tpu.matmul %3, %4, %cst_5 {dimension_numbers = #tpu.dot_dimension_numbers<[1], [0], [0], [1], [0, 0, 1, 1], [], []>, precision = #tpu.contract_precision<fp32>} : vector<32x32xf32>, vector<32x2xf32>, vector<32x2xf32> -> vector<32x2xf32>
    %cst_6 = arith.constant 0.000000e+00 : f32
    %6 = vector.broadcast %cst_6 : f32 to vector<32x2xf32>
    %7 = arith.maximumf %5, %6 : vector<32x2xf32>
    %c0_7 = arith.constant 0 : index
    %c0_8 = arith.constant 0 : index
    %8 = vector.load %arg3[%c0_7, %c0_8] : memref<2x32xf32, #tpu.memory_space<vmem>>, vector<2x32xf32>
    %cst_9 = arith.constant dense<0.000000e+00> : vector<32x32xf32>
    %9 = tpu.matmul %7, %8, %cst_9 {dimension_numbers = #tpu.dot_dimension_numbers<[1], [0], [0], [1], [0, 0, 1, 1], [], []>, precision = #tpu.contract_precision<fp32>} : vector<32x2xf32>, vector<2x32xf32>, vector<32x32xf32> -> vector<32x32xf32>
    %10 = arith.negf %9 : vector<32x32xf32>
    %11 = math.exp %10 : vector<32x32xf32>
    %cst_10 = arith.constant 1.000000e+00 : f32
    %12 = vector.broadcast %cst_10 : f32 to vector<32x32xf32>
    %13 = arith.addf %12, %11 : vector<32x32xf32>
    %14 = arith.divf %12, %13 : vector<32x32xf32>
    %c0_11 = arith.constant 0 : index
    %c0_12 = arith.constant 0 : index
    %c0_13 = arith.constant 0 : index
    %15 = vector.load %arg1[%c0_11, %c0_12, %c0_13] : memref<32x32x256xf32, #tpu.memory_space<vmem>>, vector<32x32x256xf32>
    %16 = vector.shape_cast %14 : vector<32x32xf32> to vector<32x32x1xf32>
    %17 = vector.broadcast %16 : vector<32x32x1xf32> to vector<32x32x256xf32>
    %18 = arith.mulf %15, %17 : vector<32x32x256xf32>
    %c0_14 = arith.constant 0 : index
    %c0_15 = arith.constant 0 : index
    %c0_16 = arith.constant 0 : index
    %19 = vector.load %arg4[%c0_14, %c0_15, %c0_16] : memref<32x32x256xf32, #tpu.memory_space<vmem>>, vector<32x32x256xf32>
    tpu.vector_store %arg4[%c0_14, %c0_15, %c0_16], %18 {strides = array<i32>} : memref<32x32x256xf32, #tpu.memory_space<vmem>>, vector<32x32x256xf32>,
    return
  }
  func.func @transform_0(%arg0: i32) -> (i32, i32, i32) {
    %c0_i32 = arith.constant 0 : i32
    %c0_i32_0 = arith.constant 0 : i32
    %c0_i32_1 = arith.constant 0 : i32
    return %arg0, %c0_i32, %c0_i32_0 : i32, i32, i32
  }
  func.func @transform_1(%arg0: i32) -> (i32, i32) {
    %c0_i32 = arith.constant 0 : i32
    %c0_i32_0 = arith.constant 0 : i32
    %c0_i32_1 = arith.constant 0 : i32
    return %c0_i32, %c0_i32_0 : i32, i32
  }
  func.func @transform_2(%arg0: i32) -> (i32, i32) {
    %c0_i32 = arith.constant 0 : i32
    %c0_i32_0 = arith.constant 0 : i32
    %c0_i32_1 = arith.constant 0 : i32
    return %c0_i32, %c0_i32_0 : i32, i32
  }
  func.func @transform_3(%arg0: i32) -> (i32, i32, i32) {
    %c0_i32 = arith.constant 0 : i32
    %c0_i32_0 = arith.constant 0 : i32
    %c0_i32_1 = arith.constant 0 : i32
    return %arg0, %c0_i32, %c0_i32_0 : i32, i32, i32
  }
}

</mosaic_0001>

<llo_original>
// kernel: tpu_custom_call.1
$region0: #{tpu_custom_call.1}
  #allocation0 [shape = 'u32[]', space=smem, size = 0x4, offset = 0x4, fixed_abs, tag = 'smem constant byte address 0x4 - core index']
  #allocation1 [shape = 'u32[144,128]{1,0:T(1,128)}', space=vmem, size = 0x12000, scoped, tag = 'internal scratch']
  %s0 = inlined_call_operand.hbm [shape: f32[33,32,256], index: 0, kind: input, shape index: {}]
  %s1 = inlined_call_operand.vmem [shape: f32[32,2], index: 1, kind: input, shape index: {}]
  %s2 = inlined_call_operand.hbm [shape: f32[2,32], index: 2, kind: input, shape index: {}]
  %s3 = inlined_call_operand.hbm [shape: f32[33,32,256], index: 3, kind: output, shape index: {}]
  %s4 = sld [smem:[#allocation0]]
  $region53: #{tpu_custom_call.1} parent=0
    _
  %s6 = ssub.s32 1, %s4
  %s7 = scalar_select 0, %s6, %s4
  $region1: #{tpu_custom_call.1} parent=0
    #allocation2 [shape = 'u8[2097152]{0}', space=vmem, size = 0x200000, scoped, tag = 'input window, operand 0']
    #allocation3 [shape = 's32[2]{0}', space=sflag, size = 0x8, scoped, tag = 'scoped memory for tpu_custom_call.1']
    #allocation4 [shape = 's32[2]{0}', space=sflag, size = 0x8, scoped, tag = 'scoped memory for tpu_custom_call.1']
    #allocation5 [shape = 'u8[1024]{0}', space=vmem, size = 0x400, scoped, tag = 'input window, operand 2, single buffered']
    #allocation6 [shape = 's32[1]{0}', space=sflag, size = 0x4, scoped, tag = 'scoped memory for tpu_custom_call.1']
    #allocation7 [shape = 'u8[2097152]{0}', space=vmem, size = 0x200000, scoped, tag = 'output window, operand 0']
    %8 = vsyncpa [#allocation3], 0
    %s9 = scalar_lea.sflag [#allocation3], 1
    %10 = vsyncpa %s9, 0
    %11 = vsyncpa [#allocation6], 0
    %12 = vsyncpa [#allocation4], 0
    %s13 = scalar_lea.sflag [#allocation4], 1
    %14 = vsyncpa %s13, 0
    loop: start=0, step=1, limit=4
    $region2: #{tpu_custom_call.1} parent=1 // loop_pre_header
      _
    $region3: #{tpu_custom_call.1} parent=1 // loop_header
      %s16 = sphi 0, %s20
      %p17 = scmp.ge.s32.totalorder %s16, 4
      %s26 = sphi 0, %s28
      %s29 = sphi 0, %s26
      %s30 = sphi 0, %s29
      %s46 = sphi 0, %s30
      %s50 = sphi 0, %s50
      %s52 = sphi 0, %s50
      %s53 = sphi 0, %s52
      %s67 = sphi 0, %s53
      %s71 = sphi 0, %s71
      %s73 = sphi 0, %s71
      %s74 = sphi 0, %s73
      %s88 = sphi 0, %s74
      %s94 = sphi 0, %s96
      %s97 = sphi 0, %s94
      %s98 = sphi 0, %s97
      %s114 = sphi 0, %s98
    $region4: #{tpu_custom_call.1} parent=1 // loop_header_branch
      %19 = sbr.rel (%p17) target = $region8
    $region5: #{tpu_custom_call.1} parent=1 // loop_body
      %s21 = ssub.s32 %s16, 1
      %s22 = ssub.s32 %s16, 2
      %s23 = sadd.s32 %s16, 1
      %s24 = ssub.s32 %s16, %s23
      %p25 = scmp.eq.s32.totalorder %s24, 0
      %s27 = sadd.s32 %s26, 1
      %s28 = scalar_select %p25, %s26, %s27
      %p31 = pneg %p25
      %p32 = scmp.eq.s32.totalorder %s16, 1
      %p33 = por %p31, %p32
      %p34 = scmp.ne.s32.totalorder %s26, %s29
      %p35 = scmp.eq.s32.totalorder %s16, 0
      %p36 = por %p34, %p35
      %p37 = scmp.ne.s32.totalorder %s26, %s29
      %p38 = scmp.eq.s32.totalorder %s21, 1
      %p39 = por %p37, %p38
      %p40 = scmp.ne.s32.totalorder %s29, %s30
      %p41 = scmp.eq.s32.totalorder %s21, 0
      %p42 = por %p40, %p41
      %p43 = scmp.ne.s32.totalorder %s29, %s30
      %p44 = scmp.eq.s32.totalorder %s22, 1
      %p45 = por %p43, %p44
      %p47 = scmp.ne.s32.totalorder %s30, %s46
      %p48 = scmp.eq.s32.totalorder %s22, 0
      %p49 = por %p47, %p48
      %s51 = sadd.s32 %s50, 1
      %p54 = scmp.eq.s32.totalorder %s16, 1
      %p55 = scmp.ne.s32.totalorder %s50, %s52
      %p56 = scmp.eq.s32.totalorder %s16, 0
      %p57 = por %p55, %p56
      %p58 = scmp.ne.s32.totalorder %s50, %s52
      %p59 = scmp.eq.s32.totalorder %s21, 1
      %p60 = por %p58, %p59
      %p61 = scmp.ne.s32.totalorder %s52, %s53
      %p62 = scmp.eq.s32.totalorder %s21, 0
      %p63 = por %p61, %p62
      %p64 = scmp.ne.s32.totalorder %s52, %s53
      %p65 = scmp.eq.s32.totalorder %s22, 1
      %p66 = por %p64, %p65
      %p68 = scmp.ne.s32.totalorder %s53, %s67
      %p69 = scmp.eq.s32.totalorder %s22, 0
      %p70 = por %p68, %p69
      %s72 = sadd.s32 %s71, 1
      %p75 = scmp.eq.s32.totalorder %s16, 1
      %p76 = scmp.ne.s32.totalorder %s71, %s73
      %p77 = scmp.eq.s32.totalorder %s16, 0
      %p78 = por %p76, %p77
      %p79 = scmp.ne.s32.totalorder %s71, %s73
      %p80 = scmp.eq.s32.totalorder %s21, 1
      %p81 = por %p79, %p80
      %p82 = scmp.ne.s32.totalorder %s73, %s74
      %p83 = scmp.eq.s32.totalorder %s21, 0
      %p84 = por %p82, %p83
      %p85 = scmp.ne.s32.totalorder %s73, %s74
      %p86 = scmp.eq.s32.totalorder %s22, 1
      %p87 = por %p85, %p86
      %p89 = scmp.ne.s32.totalorder %s74, %s88
      %p90 = scmp.eq.s32.totalorder %s22, 0
      %p91 = por %p89, %p90
      %s92 = ssub.s32 %s16, %s23
      %p93 = scmp.eq.s32.totalorder %s92, 0
      %s95 = sadd.s32 %s94, 1
      %s96 = scalar_select %p93, %s94, %s95
      %p99 = pneg %p93
      %p100 = scmp.eq.s32.totalorder %s16, 1
      %p101 = por %p99, %p100
      %p102 = scmp.ne.s32.totalorder %s94, %s97
      %p103 = scmp.eq.s32.totalorder %s16, 0
      %p104 = por %p102, %p103
      %p105 = scmp.ne.s32.totalorder %s94, %s97
      %p106 = scmp.eq.s32.totalorder %s21, 1
      %p107 = por %p105, %p106
      %p108 = scmp.ne.s32.totalorder %s97, %s98
      %p109 = scmp.eq.s32.totalorder %s21, 0
      %p110 = por %p108, %p109
      %p111 = scmp.ne.s32.totalorder %s97, %s98
      %p112 = scmp.eq.s32.totalorder %s22, 1
      %p113 = por %p111, %p112
      %p115 = scmp.ne.s32.totalorder %s98, %s114
      %p116 = scmp.eq.s32.totalorder %s22, 0
      %p117 = por %p115, %p116
      %p118 = scmp.le.s32.totalorder 1, %s16
      %p119 = scmp.lt.s32.totalorder %s16, 3
      %p120 = pnand %p118, %p119
      %p121 = pneg %p120
      // Predicated region
      $region9: #{tpu_custom_call.1} parent=5 // pred_check
        _
      $region10: #{tpu_custom_call.1} parent=5 // pred_check_branch
        %123 = sbr.rel (%p120) target = $region12
      $region11: #{tpu_custom_call.1} parent=5 // pred_region
        %s124 = ssub.s32 %s16, 1
        // Predicated region
        $region13: #{tpu_custom_call.1} parent=11 // pred_check
          %p125 = pneg %p63
        $region14: #{tpu_custom_call.1} parent=11 // pred_check_branch
          %127 = sbr.rel (%p125) target = $region16
        $region15: #{tpu_custom_call.1} parent=11 // pred_region
          _
        $region16: #{tpu_custom_call.1} parent=11 // pred_fallthru
          _
        // Predicated region
        $region17: #{tpu_custom_call.1} parent=11 // pred_check
          %p128 = pneg %p84
        $region18: #{tpu_custom_call.1} parent=11 // pred_check_branch
          %130 = sbr.rel (%p128) target = $region20
        $region19: #{tpu_custom_call.1} parent=11 // pred_region
          %s132 = ssub.s32 32, 32
          %133 = vsyncadd [#allocation6], %s132
          %s135 = sshll.u32 [#allocation5], 4
          %s136 = int_to_ptr.vmem [resolvable:$true] %s135
          %138 = dma.hbm_to_vmem [thread:$0]  %s2, 32, %s136, [#allocation6]
        $region20: #{tpu_custom_call.1} parent=11 // pred_fallthru
          _
      $region12: #{tpu_custom_call.1} parent=5 // pred_fallthru
        _
      %p139 = scmp.lt.s32.totalorder %s16, 2
      // Predicated region
      $region21: #{tpu_custom_call.1} parent=5 // pred_check
        %p140 = pneg %p139
      $region22: #{tpu_custom_call.1} parent=5 // pred_check_branch
        %142 = sbr.rel (%p140) target = $region24
      $region23: #{tpu_custom_call.1} parent=5 // pred_region
        // Predicated region
        $region25: #{tpu_custom_call.1} parent=23 // pred_check
          %p143 = pneg %p36
        $region26: #{tpu_custom_call.1} parent=23 // pred_check_branch
          %145 = sbr.rel (%p143) target = $region28
        $region27: #{tpu_custom_call.1} parent=23 // pred_region
          %s146 = sand.u32 %s26, 1
          %s147 = scalar_lea.sflag [#allocation3], %s146
          %s148 = sand.u32 %s26, 1
          %s149 = smul.addr %s148, 2048
          %s150 = scalar_lea.vmem [#allocation2], %s149
          %s151 = smul.u32 32, %s16
          %s152 = ssub.s32 33, %s151
          %p153 = scmp.lt.s32.totalorder %s152, 32
          %s154 = scalar_select %p153, %s152, 32
          %s155 = smul.u32 128, %s154
          %s156 = smul.u32 %s155, 4
          %s157 = smul.u32 %s156, 2
          %s159 = ssub.s32 32768, %s157
          %160 = vsyncadd %s147, %s159
          %p161 = scmp.ne.s32.totalorder 0, %s157
          %s162 = smul.addr %s151, 8
          %s163 = smul.addr %s162, 128
          %s164 = scalar_lea.hbm %s0, %s163
          %s165 = smul.u32 %s154, 4
          %s166 = smul.u32 16, %s165
          %s167 = sshll.u32 %s150, 4
          %s168 = int_to_ptr.vmem [resolvable:$true] %s167
          %s169 = sshll.u32 %s166, 4
          %173 = dma.hbm_to_vmem [thread:$0]  (%p161), %s164, %s169, %s168, %s147, 256, 256, 16
        $region28: #{tpu_custom_call.1} parent=23 // pred_fallthru
          _
      $region24: #{tpu_custom_call.1} parent=5 // pred_fallthru
        _
      %p174 = scmp.le.s32.totalorder 1, %s16
      %p175 = scmp.lt.s32.totalorder %s16, 3
      %p176 = pnand %p174, %p175
      %p177 = pneg %p176
      // Predicated region
      $region29: #{tpu_custom_call.1} parent=5 // pred_check
        _
      $region30: #{tpu_custom_call.1} parent=5 // pred_check_branch
        %179 = sbr.rel (%p176) target = $region32
      $region31: #{tpu_custom_call.1} parent=5 // pred_region
        %s180 = ssub.s32 %s16, 1
        %s181 = sand.u32 %s29, 1
        %s182 = scalar_lea.sflag [#allocation3], %s181
        %s183 = sand.u32 %s29, 1
        %s184 = smul.addr %s183, 2048
        %s185 = scalar_lea.vmem [#allocation2], %s184
        // Predicated region
        $region33: #{tpu_custom_call.1} parent=31 // pred_check
          %p186 = pneg %p42
        $region34: #{tpu_custom_call.1} parent=31 // pred_check_branch
          %188 = sbr.rel (%p186) target = $region36
        $region35: #{tpu_custom_call.1} parent=31 // pred_region
          %189 = dma.done %s182, 32768
        $region36: #{tpu_custom_call.1} parent=31 // pred_fallthru
          _
        // Predicated region
        $region37: #{tpu_custom_call.1} parent=31 // pred_check
          %p190 = pneg %p84
        $region38: #{tpu_custom_call.1} parent=31 // pred_check_branch
          %192 = sbr.rel (%p190) target = $region40
        $region39: #{tpu_custom_call.1} parent=31 // pred_region
          %193 = dma.done [#allocation6], 32
        $region40: #{tpu_custom_call.1} parent=31 // pred_fallthru
          _
        %s194 = sand.u32 %s29, 1
        %s195 = scalar_lea.sflag [#allocation3], %s194
        %s196 = sand.u32 %s29, 1
        %s197 = smul.addr %s196, 2048
        %s198 = scalar_lea.vmem [#allocation2], %s197
        %p199 = pneg %p42
        %p200 = pneg %p39
        %p201 = pneg %p63
        %p202 = pneg %p60
        %p203 = pneg %p84
        %p204 = pneg %p81
        %p205 = pneg %p110
        %p206 = pneg %p107
        %s207 = sand.u32 %s97, 1
        %s208 = scalar_lea.sflag [#allocation4], %s207
        %s209 = sand.u32 %s97, 1
        %s210 = smul.addr %s209, 2048
        %s211 = scalar_lea.vmem [#allocation7], %s210
        %s212 = smul.u32 32, %s21
        %s213 = ssub.s32 33, %s212
        %p214 = scmp.lt.s32.totalorder %s213, 32
        %s215 = scalar_select %p214, %s213, 32
        %s216 = smul.u32 128, %s215
        %s217 = smul.u32 %s216, 4
        %s218 = smul.u32 %s217, 2
        %s219 = smul.u32 32, %s21
        %s220 = ssub.s32 33, %s219
        %p221 = scmp.lt.s32.totalorder %s220, 32
        %s222 = scalar_select %p221, %s220, 32
        %s223 = smul.u32 128, %s222
        %s224 = smul.u32 %s223, 4
        %s225 = smul.u32 %s224, 2
        %v226 = vld [vmem:[%s185] sm:$0xff]
        %v227 = vld [vmem:[%s185 + $0x8] sm:$0xff]
        %v228 = vld [vmem:[%s185 + $0x10] sm:$0xff]
        %v229 = vld [vmem:[%s185 + $0x18] sm:$0xff]
        %v230 = vld [vmem:[%s185 + $0x20] sm:$0xff]
        %v231 = vld [vmem:[%s185 + $0x28] sm:$0xff]
        %v232 = vld [vmem:[%s185 + $0x30] sm:$0xff]
        %v233 = vld [vmem:[%s185 + $0x38] sm:$0xff]
        %v234 = vld [vmem:[%s185 + $0x40] sm:$0xff]
        %v235 = vld [vmem:[%s185 + $0x48] sm:$0xff]
        %v236 = vld [vmem:[%s185 + $0x50] sm:$0xff]
        %v237 = vld [vmem:[%s185 + $0x58] sm:$0xff]
        %v238 = vld [vmem:[%s185 + $0x60] sm:$0xff]
        %v239 = vld [vmem:[%s185 + $0x68] sm:$0xff]
        %v240 = vld [vmem:[%s185 + $0x70] sm:$0xff]
        %v241 = vld [vmem:[%s185 + $0x78] sm:$0xff]
        %v242 = vld [vmem:[%s185 + $0x80] sm:$0xff]
        %v243 = vld [vmem:[%s185 + $0x88] sm:$0xff]
        %v244 = vld [vmem:[%s185 + $0x90] sm:$0xff]
        %v245 = vld [vmem:[%s185 + $0x98] sm:$0xff]
        %v246 = vld [vmem:[%s185 + $0xa0] sm:$0xff]
        %v247 = vld [vmem:[%s185 + $0xa8] sm:$0xff]
        %v248 = vld [vmem:[%s185 + $0xb0] sm:$0xff]
        %v249 = vld [vmem:[%s185 + $0xb8] sm:$0xff]
        %v250 = vld [vmem:[%s185 + $0xc0] sm:$0xff]
        %v251 = vld [vmem:[%s185 + $0xc8] sm:$0xff]
        %v252 = vld [vmem:[%s185 + $0xd0] sm:$0xff]
        %v253 = vld [vmem:[%s185 + $0xd8] sm:$0xff]
        %v254 = vld [vmem:[%s185 + $0xe0] sm:$0xff]
        %v255 = vld [vmem:[%s185 + $0xe8] sm:$0xff]
        %v256 = vld [vmem:[%s185 + $0xf0] sm:$0xff]
        %v257 = vld [vmem:[%s185 + $0xf8] sm:$0xff]
        %v258 = vld [vmem:[%s185 + $0x100] sm:$0xff]
        %v259 = vld [vmem:[%s185 + $0x108] sm:$0xff]
        %v260 = vld [vmem:[%s185 + $0x110] sm:$0xff]
        %v261 = vld [vmem:[%s185 + $0x118] sm:$0xff]
        %v262 = vld [vmem:[%s185 + $0x120] sm:$0xff]
        %v263 = vld [vmem:[%s185 + $0x128] sm:$0xff]
        %v264 = vld [vmem:[%s185 + $0x130] sm:$0xff]
        %v265 = vld [vmem:[%s185 + $0x138] sm:$0xff]
        %v266 = vld [vmem:[%s185 + $0x140] sm:$0xff]
        %v267 = vld [vmem:[%s185 + $0x148] sm:$0xff]
        %v268 = vld [vmem:[%s185 + $0x150] sm:$0xff]
        %v269 = vld [vmem:[%s185 + $0x158] sm:$0xff]
        %v270 = vld [vmem:[%s185 + $0x160] sm:$0xff]
        %v271 = vld [vmem:[%s185 + $0x168] sm:$0xff]
        %v272 = vld [vmem:[%s185 + $0x170] sm:$0xff]
        %v273 = vld [vmem:[%s185 + $0x178] sm:$0xff]
        %v274 = vld [vmem:[%s185 + $0x180] sm:$0xff]
        %v275 = vld [vmem:[%s185 + $0x188] sm:$0xff]
        %v276 = vld [vmem:[%s185 + $0x190] sm:$0xff]
        %v277 = vld [vmem:[%s185 + $0x198] sm:$0xff]
        %v278 = vld [vmem:[%s185 + $0x1a0] sm:$0xff]
        %v279 = vld [vmem:[%s185 + $0x1a8] sm:$0xff]
        %v280 = vld [vmem:[%s185 + $0x1b0] sm:$0xff]
        %v281 = vld [vmem:[%s185 + $0x1b8] sm:$0xff]
        %v282 = vld [vmem:[%s185 + $0x1c0] sm:$0xff]
        %v283 = vld [vmem:[%s185 + $0x1c8] sm:$0xff]
        %v284 = vld [vmem:[%s185 + $0x1d0] sm:$0xff]
        %v285 = vld [vmem:[%s185 + $0x1d8] sm:$0xff]
        %v286 = vld [vmem:[%s185 + $0x1e0] sm:$0xff]
        %v287 = vld [vmem:[%s185 + $0x1e8] sm:$0xff]
        %v288 = vld [vmem:[%s185 + $0x1f0] sm:$0xff]
        %v289 = vld [vmem:[%s185 + $0x1f8] sm:$0xff]
        %v290 = vld [vmem:[%s185 + $0x200] sm:$0xff]
        %v291 = vld [vmem:[%s185 + $0x208] sm:$0xff]
        %v292 = vld [vmem:[%s185 + $0x210] sm:$0xff]
        %v293 = vld [vmem:[%s185 + $0x218] sm:$0xff]
        %v294 = vld [vmem:[%s185 + $0x220] sm:$0xff]
        %v295 = vld [vmem:[%s185 + $0x228] sm:$0xff]
        %v296 = vld [vmem:[%s185 + $0x230] sm:$0xff]
        %v297 = vld [vmem:[%s185 + $0x238] sm:$0xff]
        %v298 = vld [vmem:[%s185 + $0x240] sm:$0xff]
        %v299 = vld [vmem:[%s185 + $0x248] sm:$0xff]
        %v300 = vld [vmem:[%s185 + $0x250] sm:$0xff]
        %v301 = vld [vmem:[%s185 + $0x258] sm:$0xff]
        %v302 = vld [vmem:[%s185 + $0x260] sm:$0xff]
        %v303 = vld [vmem:[%s185 + $0x268] sm:$0xff]
        %v304 = vld [vmem:[%s185 + $0x270] sm:$0xff]
        %v305 = vld [vmem:[%s185 + $0x278] sm:$0xff]
        %v306 = vld [vmem:[%s185 + $0x280] sm:$0xff]
        %v307 = vld [vmem:[%s185 + $0x288] sm:$0xff]
        %v308 = vld [vmem:[%s185 + $0x290] sm:$0xff]
        %v309 = vld [vmem:[%s185 + $0x298] sm:$0xff]
        %v310 = vld [vmem:[%s185 + $0x2a0] sm:$0xff]
        %v311 = vld [vmem:[%s185 + $0x2a8] sm:$0xff]
        %v312 = vld [vmem:[%s185 + $0x2b0] sm:$0xff]
        %v313 = vld [vmem:[%s185 + $0x2b8] sm:$0xff]
        %v314 = vld [vmem:[%s185 + $0x2c0] sm:$0xff]
        %v315 = vld [vmem:[%s185 + $0x2c8] sm:$0xff]
        %v316 = vld [vmem:[%s185 + $0x2d0] sm:$0xff]
        %v317 = vld [vmem:[%s185 + $0x2d8] sm:$0xff]
        %v318 = vld [vmem:[%s185 + $0x2e0] sm:$0xff]
        %v319 = vld [vmem:[%s185 + $0x2e8] sm:$0xff]
        %v320 = vld [vmem:[%s185 + $0x2f0] sm:$0xff]
        %v321 = vld [vmem:[%s185 + $0x2f8] sm:$0xff]
        %v322 = vld [vmem:[%s185 + $0x300] sm:$0xff]
        %v323 = vld [vmem:[%s185 + $0x308] sm:$0xff]
        %v324 = vld [vmem:[%s185 + $0x310] sm:$0xff]
        %v325 = vld [vmem:[%s185 + $0x318] sm:$0xff]
        %v326 = vld [vmem:[%s185 + $0x320] sm:$0xff]
        %v327 = vld [vmem:[%s185 + $0x328] sm:$0xff]
        %v328 = vld [vmem:[%s185 + $0x330] sm:$0xff]
        %v329 = vld [vmem:[%s185 + $0x338] sm:$0xff]
        %v330 = vld [vmem:[%s185 + $0x340] sm:$0xff]
        %v331 = vld [vmem:[%s185 + $0x348] sm:$0xff]
        %v332 = vld [vmem:[%s185 + $0x350] sm:$0xff]
        %v333 = vld [vmem:[%s185 + $0x358] sm:$0xff]
        %v334 = vld [vmem:[%s185 + $0x360] sm:$0xff]
        %v335 = vld [vmem:[%s185 + $0x368] sm:$0xff]
        %v336 = vld [vmem:[%s185 + $0x370] sm:$0xff]
        %v337 = vld [vmem:[%s185 + $0x378] sm:$0xff]
        %v338 = vld [vmem:[%s185 + $0x380] sm:$0xff]
        %v339 = vld [vmem:[%s185 + $0x388] sm:$0xff]
        %v340 = vld [vmem:[%s185 + $0x390] sm:$0xff]
        %v341 = vld [vmem:[%s185 + $0x398] sm:$0xff]
        %v342 = vld [vmem:[%s185 + $0x3a0] sm:$0xff]
        %v343 = vld [vmem:[%s185 + $0x3a8] sm:$0xff]
        %v344 = vld [vmem:[%s185 + $0x3b0] sm:$0xff]
        %v345 = vld [vmem:[%s185 + $0x3b8] sm:$0xff]
        %v346 = vld [vmem:[%s185 + $0x3c0] sm:$0xff]
        %v347 = vld [vmem:[%s185 + $0x3c8] sm:$0xff]
        %v348 = vld [vmem:[%s185 + $0x3d0] sm:$0xff]
        %v349 = vld [vmem:[%s185 + $0x3d8] sm:$0xff]
        %v350 = vld [vmem:[%s185 + $0x3e0] sm:$0xff]
        %v351 = vld [vmem:[%s185 + $0x3e8] sm:$0xff]
        %v352 = vld [vmem:[%s185 + $0x3f0] sm:$0xff]
        %v353 = vld [vmem:[%s185 + $0x3f8] sm:$0xff]
        %v354 = vld [vmem:[%s185 + $0x400] sm:$0xff]
        %v355 = vld [vmem:[%s185 + $0x408] sm:$0xff]
        %v356 = vld [vmem:[%s185 + $0x410] sm:$0xff]
        %v357 = vld [vmem:[%s185 + $0x418] sm:$0xff]
        %v358 = vld [vmem:[%s185 + $0x420] sm:$0xff]
        %v359 = vld [vmem:[%s185 + $0x428] sm:$0xff]
        %v360 = vld [vmem:[%s185 + $0x430] sm:$0xff]
        %v361 = vld [vmem:[%s185 + $0x438] sm:$0xff]
        %v362 = vld [vmem:[%s185 + $0x440] sm:$0xff]
        %v363 = vld [vmem:[%s185 + $0x448] sm:$0xff]
        %v364 = vld [vmem:[%s185 + $0x450] sm:$0xff]
        %v365 = vld [vmem:[%s185 + $0x458] sm:$0xff]
        %v366 = vld [vmem:[%s185 + $0x460] sm:$0xff]
        %v367 = vld [vmem:[%s185 + $0x468] sm:$0xff]
        %v368 = vld [vmem:[%s185 + $0x470] sm:$0xff]
        %v369 = vld [vmem:[%s185 + $0x478] sm:$0xff]
        %v370 = vld [vmem:[%s185 + $0x480] sm:$0xff]
        %v371 = vld [vmem:[%s185 + $0x488] sm:$0xff]
        %v372 = vld [vmem:[%s185 + $0x490] sm:$0xff]
        %v373 = vld [vmem:[%s185 + $0x498] sm:$0xff]
        %v374 = vld [vmem:[%s185 + $0x4a0] sm:$0xff]
        %v375 = vld [vmem:[%s185 + $0x4a8] sm:$0xff]
        %v376 = vld [vmem:[%s185 + $0x4b0] sm:$0xff]
        %v377 = vld [vmem:[%s185 + $0x4b8] sm:$0xff]
        %v378 = vld [vmem:[%s185 + $0x4c0] sm:$0xff]
        %v379 = vld [vmem:[%s185 + $0x4c8] sm:$0xff]
        %v380 = vld [vmem:[%s185 + $0x4d0] sm:$0xff]
        %v381 = vld [vmem:[%s185 + $0x4d8] sm:$0xff]
        %v382 = vld [vmem:[%s185 + $0x4e0] sm:$0xff]
        %v383 = vld [vmem:[%s185 + $0x4e8] sm:$0xff]
        %v384 = vld [vmem:[%s185 + $0x4f0] sm:$0xff]
        %v385 = vld [vmem:[%s185 + $0x4f8] sm:$0xff]
        %v386 = vld [vmem:[%s185 + $0x500] sm:$0xff]
        %v387 = vld [vmem:[%s185 + $0x508] sm:$0xff]
        %v388 = vld [vmem:[%s185 + $0x510] sm:$0xff]
        %v389 = vld [vmem:[%s185 + $0x518] sm:$0xff]
        %v390 = vld [vmem:[%s185 + $0x520] sm:$0xff]
        %v391 = vld [vmem:[%s185 + $0x528] sm:$0xff]
        %v392 = vld [vmem:[%s185 + $0x530] sm:$0xff]
        %v393 = vld [vmem:[%s185 + $0x538] sm:$0xff]
        %v394 = vld [vmem:[%s185 + $0x540] sm:$0xff]
        %v395 = vld [vmem:[%s185 + $0x548] sm:$0xff]
        %v396 = vld [vmem:[%s185 + $0x550] sm:$0xff]
        %v397 = vld [vmem:[%s185 + $0x558] sm:$0xff]
        %v398 = vld [vmem:[%s185 + $0x560] sm:$0xff]
        %v399 = vld [vmem:[%s185 + $0x568] sm:$0xff]
        %v400 = vld [vmem:[%s185 + $0x570] sm:$0xff]
        %v401 = vld [vmem:[%s185 + $0x578] sm:$0xff]
        %v402 = vld [vmem:[%s185 + $0x580] sm:$0xff]
        %v403 = vld [vmem:[%s185 + $0x588] sm:$0xff]
        %v404 = vld [vmem:[%s185 + $0x590] sm:$0xff]
        %v405 = vld [vmem:[%s185 + $0x598] sm:$0xff]
        %v406 = vld [vmem:[%s185 + $0x5a0] sm:$0xff]
        %v407 = vld [vmem:[%s185 + $0x5a8] sm:$0xff]
        %v408 = vld [vmem:[%s185 + $0x5b0] sm:$0xff]
        %v409 = vld [vmem:[%s185 + $0x5b8] sm:$0xff]
        %v410 = vld [vmem:[%s185 + $0x5c0] sm:$0xff]
        %v411 = vld [vmem:[%s185 + $0x5c8] sm:$0xff]
        %v412 = vld [vmem:[%s185 + $0x5d0] sm:$0xff]
        %v413 = vld [vmem:[%s185 + $0x5d8] sm:$0xff]
        %v414 = vld [vmem:[%s185 + $0x5e0] sm:$0xff]
        %v415 = vld [vmem:[%s185 + $0x5e8] sm:$0xff]
        %v416 = vld [vmem:[%s185 + $0x5f0] sm:$0xff]
        %v417 = vld [vmem:[%s185 + $0x5f8] sm:$0xff]
        %v418 = vld [vmem:[%s185 + $0x600] sm:$0xff]
        %v419 = vld [vmem:[%s185 + $0x608] sm:$0xff]
        %v420 = vld [vmem:[%s185 + $0x610] sm:$0xff]
        %v421 = vld [vmem:[%s185 + $0x618] sm:$0xff]
        %v422 = vld [vmem:[%s185 + $0x620] sm:$0xff]
        %v423 = vld [vmem:[%s185 + $0x628] sm:$0xff]
        %v424 = vld [vmem:[%s185 + $0x630] sm:$0xff]
        %v425 = vld [vmem:[%s185 + $0x638] sm:$0xff]
        %v426 = vld [vmem:[%s185 + $0x640] sm:$0xff]
        %v427 = vld [vmem:[%s185 + $0x648] sm:$0xff]
        %v428 = vld [vmem:[%s185 + $0x650] sm:$0xff]
        %v429 = vld [vmem:[%s185 + $0x658] sm:$0xff]
        %v430 = vld [vmem:[%s185 + $0x660] sm:$0xff]
        %v431 = vld [vmem:[%s185 + $0x668] sm:$0xff]
        %v432 = vld [vmem:[%s185 + $0x670] sm:$0xff]
        %v433 = vld [vmem:[%s185 + $0x678] sm:$0xff]
        %v434 = vld [vmem:[%s185 + $0x680] sm:$0xff]
        %v435 = vld [vmem:[%s185 + $0x688] sm:$0xff]
        %v436 = vld [vmem:[%s185 + $0x690] sm:$0xff]
        %v437 = vld [vmem:[%s185 + $0x698] sm:$0xff]
        %v438 = vld [vmem:[%s185 + $0x6a0] sm:$0xff]
        %v439 = vld [vmem:[%s185 + $0x6a8] sm:$0xff]
        %v440 = vld [vmem:[%s185 + $0x6b0] sm:$0xff]
        %v441 = vld [vmem:[%s185 + $0x6b8] sm:$0xff]
        %v442 = vld [vmem:[%s185 + $0x6c0] sm:$0xff]
        %v443 = vld [vmem:[%s185 + $0x6c8] sm:$0xff]
        %v444 = vld [vmem:[%s185 + $0x6d0] sm:$0xff]
        %v445 = vld [vmem:[%s185 + $0x6d8] sm:$0xff]
        %v446 = vld [vmem:[%s185 + $0x6e0] sm:$0xff]
        %v447 = vld [vmem:[%s185 + $0x6e8] sm:$0xff]
        %v448 = vld [vmem:[%s185 + $0x6f0] sm:$0xff]
        %v449 = vld [vmem:[%s185 + $0x6f8] sm:$0xff]
        %v450 = vld [vmem:[%s185 + $0x700] sm:$0xff]
        %v451 = vld [vmem:[%s185 + $0x708] sm:$0xff]
        %v452 = vld [vmem:[%s185 + $0x710] sm:$0xff]
        %v453 = vld [vmem:[%s185 + $0x718] sm:$0xff]
        %v454 = vld [vmem:[%s185 + $0x720] sm:$0xff]
        %v455 = vld [vmem:[%s185 + $0x728] sm:$0xff]
        %v456 = vld [vmem:[%s185 + $0x730] sm:$0xff]
        %v457 = vld [vmem:[%s185 + $0x738] sm:$0xff]
        %v458 = vld [vmem:[%s185 + $0x740] sm:$0xff]
        %v459 = vld [vmem:[%s185 + $0x748] sm:$0xff]
        %v460 = vld [vmem:[%s185 + $0x750] sm:$0xff]
        %v461 = vld [vmem:[%s185 + $0x758] sm:$0xff]
        %v462 = vld [vmem:[%s185 + $0x760] sm:$0xff]
        %v463 = vld [vmem:[%s185 + $0x768] sm:$0xff]
        %v464 = vld [vmem:[%s185 + $0x770] sm:$0xff]
        %v465 = vld [vmem:[%s185 + $0x778] sm:$0xff]
        %v466 = vld [vmem:[%s185 + $0x780] sm:$0xff]
        %v467 = vld [vmem:[%s185 + $0x788] sm:$0xff]
        %v468 = vld [vmem:[%s185 + $0x790] sm:$0xff]
        %v469 = vld [vmem:[%s185 + $0x798] sm:$0xff]
        %v470 = vld [vmem:[%s185 + $0x7a0] sm:$0xff]
        %v471 = vld [vmem:[%s185 + $0x7a8] sm:$0xff]
        %v472 = vld [vmem:[%s185 + $0x7b0] sm:$0xff]
        %v473 = vld [vmem:[%s185 + $0x7b8] sm:$0xff]
        %v474 = vld [vmem:[%s185 + $0x7c0] sm:$0xff]
        %v475 = vld [vmem:[%s185 + $0x7c8] sm:$0xff]
        %v476 = vld [vmem:[%s185 + $0x7d0] sm:$0xff]
        %v477 = vld [vmem:[%s185 + $0x7d8] sm:$0xff]
        %v478 = vld [vmem:[%s185 + $0x7e0] sm:$0xff]
        %v479 = vld [vmem:[%s185 + $0x7e8] sm:$0xff]
        %v480 = vld [vmem:[%s185 + $0x7f0] sm:$0xff]
        %v481 = vld [vmem:[%s185 + $0x7f8] sm:$0xff]
        %v482 = vadd.f32 %v226, %v227
        %483 = vadd.xlane.f32.xlu0 %v482
        %v484 = vpop.xlane.xlu0 %483
        %v485 = vadd.f32 %v228, %v229
        %486 = vadd.xlane.f32.xlu0 %v485
        %v487 = vpop.xlane.xlu0 %486
        %v488 = vadd.f32 %v230, %v231
        %489 = vadd.xlane.f32.xlu0 %v488
        %v490 = vpop.xlane.xlu0 %489
        %v491 = vadd.f32 %v232, %v233
        %492 = vadd.xlane.f32.xlu0 %v491
        %v493 = vpop.xlane.xlu0 %492
        %v494 = vadd.f32 %v234, %v235
        %495 = vadd.xlane.f32.xlu0 %v494
        %v496 = vpop.xlane.xlu0 %495
        %v497 = vadd.f32 %v236, %v237
        %498 = vadd.xlane.f32.xlu0 %v497
        %v499 = vpop.xlane.xlu0 %498
        %v500 = vadd.f32 %v238, %v239
        %501 = vadd.xlane.f32.xlu0 %v500
        %v502 = vpop.xlane.xlu0 %501
        %v503 = vadd.f32 %v240, %v241
        %504 = vadd.xlane.f32.xlu0 %v503
        %v505 = vpop.xlane.xlu0 %504
        %v506 = vadd.f32 %v242, %v243
        %507 = vadd.xlane.f32.xlu0 %v506
        %v508 = vpop.xlane.xlu0 %507
        %v509 = vadd.f32 %v244, %v245
        %510 = vadd.xlane.f32.xlu0 %v509
        %v511 = vpop.xlane.xlu0 %510
        %v512 = vadd.f32 %v246, %v247
        %513 = vadd.xlane.f32.xlu0 %v512
        %v514 = vpop.xlane.xlu0 %513
        %v515 = vadd.f32 %v248, %v249
        %516 = vadd.xlane.f32.xlu0 %v515
        %v517 = vpop.xlane.xlu0 %516
        %v518 = vadd.f32 %v250, %v251
        %519 = vadd.xlane.f32.xlu0 %v518
        %v520 = vpop.xlane.xlu0 %519
        %v521 = vadd.f32 %v252, %v253
        %522 = vadd.xlane.f32.xlu0 %v521
        %v523 = vpop.xlane.xlu0 %522
        %v524 = vadd.f32 %v254, %v255
        %525 = vadd.xlane.f32.xlu0 %v524
        %v526 = vpop.xlane.xlu0 %525
        %v527 = vadd.f32 %v256, %v257
        %528 = vadd.xlane.f32.xlu0 %v527
        %v529 = vpop.xlane.xlu0 %528
        %v530 = vadd.f32 %v258, %v259
        %531 = vadd.xlane.f32.xlu0 %v530
        %v532 = vpop.xlane.xlu0 %531
        %v533 = vadd.f32 %v260, %v261
        %534 = vadd.xlane.f32.xlu0 %v533
        %v535 = vpop.xlane.xlu0 %534
        %v536 = vadd.f32 %v262, %v263
        %537 = vadd.xlane.f32.xlu0 %v536
        %v538 = vpop.xlane.xlu0 %537
        %v539 = vadd.f32 %v264, %v265
        %540 = vadd.xlane.f32.xlu0 %v539
        %v541 = vpop.xlane.xlu0 %540
        %v542 = vadd.f32 %v266, %v267
        %543 = vadd.xlane.f32.xlu0 %v542
        %v544 = vpop.xlane.xlu0 %543
        %v545 = vadd.f32 %v268, %v269
        %546 = vadd.xlane.f32.xlu0 %v545
        %v547 = vpop.xlane.xlu0 %546
        %v548 = vadd.f32 %v270, %v271
        %549 = vadd.xlane.f32.xlu0 %v548
        %v550 = vpop.xlane.xlu0 %549
        %v551 = vadd.f32 %v272, %v273
        %552 = vadd.xlane.f32.xlu0 %v551
        %v553 = vpop.xlane.xlu0 %552
        %v554 = vadd.f32 %v274, %v275
        %555 = vadd.xlane.f32.xlu0 %v554
        %v556 = vpop.xlane.xlu0 %555
        %v557 = vadd.f32 %v276, %v277
        %558 = vadd.xlane.f32.xlu0 %v557
        %v559 = vpop.xlane.xlu0 %558
        %v560 = vadd.f32 %v278, %v279
        %561 = vadd.xlane.f32.xlu0 %v560
        %v562 = vpop.xlane.xlu0 %561
        %v563 = vadd.f32 %v280, %v281
        %564 = vadd.xlane.f32.xlu0 %v563
        %v565 = vpop.xlane.xlu0 %564
        %v566 = vadd.f32 %v282, %v283
        %567 = vadd.xlane.f32.xlu0 %v566
        %v568 = vpop.xlane.xlu0 %567
        %v569 = vadd.f32 %v284, %v285
        %570 = vadd.xlane.f32.xlu0 %v569
        %v571 = vpop.xlane.xlu0 %570
        %v572 = vadd.f32 %v286, %v287
        %573 = vadd.xlane.f32.xlu0 %v572
        %v574 = vpop.xlane.xlu0 %573
        %v575 = vadd.f32 %v288, %v289
        %576 = vadd.xlane.f32.xlu0 %v575
        %v577 = vpop.xlane.xlu0 %576
        %v578 = vadd.f32 %v290, %v291
        %579 = vadd.xlane.f32.xlu0 %v578
        %v580 = vpop.xlane.xlu0 %579
        %v581 = vadd.f32 %v292, %v293
        %582 = vadd.xlane.f32.xlu0 %v581
        %v583 = vpop.xlane.xlu0 %582
        %v584 = vadd.f32 %v294, %v295
        %585 = vadd.xlane.f32.xlu0 %v584
        %v586 = vpop.xlane.xlu0 %585
        %v587 = vadd.f32 %v296, %v297
        %588 = vadd.xlane.f32.xlu0 %v587
        %v589 = vpop.xlane.xlu0 %588
        %v590 = vadd.f32 %v298, %v299
        %591 = vadd.xlane.f32.xlu0 %v590
        %v592 = vpop.xlane.xlu0 %591
        %v593 = vadd.f32 %v300, %v301
        %594 = vadd.xlane.f32.xlu0 %v593
        %v595 = vpop.xlane.xlu0 %594
        %v596 = vadd.f32 %v302, %v303
        %597 = vadd.xlane.f32.xlu0 %v596
        %v598 = vpop.xlane.xlu0 %597
        %v599 = vadd.f32 %v304, %v305
        %600 = vadd.xlane.f32.xlu0 %v599
        %v601 = vpop.xlane.xlu0 %600
        %v602 = vadd.f32 %v306, %v307
        %603 = vadd.xlane.f32.xlu0 %v602
        %v604 = vpop.xlane.xlu0 %603
        %v605 = vadd.f32 %v308, %v309
        %606 = vadd.xlane.f32.xlu0 %v605
        %v607 = vpop.xlane.xlu0 %606
        %v608 = vadd.f32 %v310, %v311
        %609 = vadd.xlane.f32.xlu0 %v608
        %v610 = vpop.xlane.xlu0 %609
        %v611 = vadd.f32 %v312, %v313
        %612 = vadd.xlane.f32.xlu0 %v611
        %v613 = vpop.xlane.xlu0 %612
        %v614 = vadd.f32 %v314, %v315
        %615 = vadd.xlane.f32.xlu0 %v614
        %v616 = vpop.xlane.xlu0 %615
        %v617 = vadd.f32 %v316, %v317
        %618 = vadd.xlane.f32.xlu0 %v617
        %v619 = vpop.xlane.xlu0 %618
        %v620 = vadd.f32 %v318, %v319
        %621 = vadd.xlane.f32.xlu0 %v620
        %v622 = vpop.xlane.xlu0 %621
        %v623 = vadd.f32 %v320, %v321
        %624 = vadd.xlane.f32.xlu0 %v623
        %v625 = vpop.xlane.xlu0 %624
        %v626 = vadd.f32 %v322, %v323
        %627 = vadd.xlane.f32.xlu0 %v626
        %v628 = vpop.xlane.xlu0 %627
        %v629 = vadd.f32 %v324, %v325
        %630 = vadd.xlane.f32.xlu0 %v629
        %v631 = vpop.xlane.xlu0 %630
        %v632 = vadd.f32 %v326, %v327
        %633 = vadd.xlane.f32.xlu0 %v632
        %v634 = vpop.xlane.xlu0 %633
        %v635 = vadd.f32 %v328, %v329
        %636 = vadd.xlane.f32.xlu0 %v635
        %v637 = vpop.xlane.xlu0 %636
        %v638 = vadd.f32 %v330, %v331
        %639 = vadd.xlane.f32.xlu0 %v638
        %v640 = vpop.xlane.xlu0 %639
        %v641 = vadd.f32 %v332, %v333
        %642 = vadd.xlane.f32.xlu0 %v641
        %v643 = vpop.xlane.xlu0 %642
        %v644 = vadd.f32 %v334, %v335
        %645 = vadd.xlane.f32.xlu0 %v644
        %v646 = vpop.xlane.xlu0 %645
        %v647 = vadd.f32 %v336, %v337
        %648 = vadd.xlane.f32.xlu0 %v647
        %v649 = vpop.xlane.xlu0 %648
        %v650 = vadd.f32 %v338, %v339
        %651 = vadd.xlane.f32.xlu0 %v650
        %v652 = vpop.xlane.xlu0 %651
        %v653 = vadd.f32 %v340, %v341
        %654 = vadd.xlane.f32.xlu0 %v653
        %v655 = vpop.xlane.xlu0 %654
        %v656 = vadd.f32 %v342, %v343
        %657 = vadd.xlane.f32.xlu0 %v656
        %v658 = vpop.xlane.xlu0 %657
        %v659 = vadd.f32 %v344, %v345
        %660 = vadd.xlane.f32.xlu0 %v659
        %v661 = vpop.xlane.xlu0 %660
        %v662 = vadd.f32 %v346, %v347
        %663 = vadd.xlane.f32.xlu0 %v662
        %v664 = vpop.xlane.xlu0 %663
        %v665 = vadd.f32 %v348, %v349
        %666 = vadd.xlane.f32.xlu0 %v665
        %v667 = vpop.xlane.xlu0 %666
        %v668 = vadd.f32 %v350, %v351
        %669 = vadd.xlane.f32.xlu0 %v668
        %v670 = vpop.xlane.xlu0 %669
        %v671 = vadd.f32 %v352, %v353
        %672 = vadd.xlane.f32.xlu0 %v671
        %v673 = vpop.xlane.xlu0 %672
        %v674 = vadd.f32 %v354, %v355
        %675 = vadd.xlane.f32.xlu0 %v674
        %v676 = vpop.xlane.xlu0 %675
        %v677 = vadd.f32 %v356, %v357
        %678 = vadd.xlane.f32.xlu0 %v677
        %v679 = vpop.xlane.xlu0 %678
        %v680 = vadd.f32 %v358, %v359
        %681 = vadd.xlane.f32.xlu0 %v680
        %v682 = vpop.xlane.xlu0 %681
        %v683 = vadd.f32 %v360, %v361
        %684 = vadd.xlane.f32.xlu0 %v683
        %v685 = vpop.xlane.xlu0 %684
        %v686 = vadd.f32 %v362, %v363
        %687 = vadd.xlane.f32.xlu0 %v686
        %v688 = vpop.xlane.xlu0 %687
        %v689 = vadd.f32 %v364, %v365
        %690 = vadd.xlane.f32.xlu0 %v689
        %v691 = vpop.xlane.xlu0 %690
        %v692 = vadd.f32 %v366, %v367
        %693 = vadd.xlane.f32.xlu0 %v692
        %v694 = vpop.xlane.xlu0 %693
        %v695 = vadd.f32 %v368, %v369
        %696 = vadd.xlane.f32.xlu0 %v695
        %v697 = vpop.xlane.xlu0 %696
        %v698 = vadd.f32 %v370, %v371
        %699 = vadd.xlane.f32.xlu0 %v698
        %v700 = vpop.xlane.xlu0 %699
        %v701 = vadd.f32 %v372, %v373
        %702 = vadd.xlane.f32.xlu0 %v701
        %v703 = vpop.xlane.xlu0 %702
        %v704 = vadd.f32 %v374, %v375
        %705 = vadd.xlane.f32.xlu0 %v704
        %v706 = vpop.xlane.xlu0 %705
        %v707 = vadd.f32 %v376, %v377
        %708 = vadd.xlane.f32.xlu0 %v707
        %v709 = vpop.xlane.xlu0 %708
        %v710 = vadd.f32 %v378, %v379
        %711 = vadd.xlane.f32.xlu0 %v710
        %v712 = vpop.xlane.xlu0 %711
        %v713 = vadd.f32 %v380, %v381
        %714 = vadd.xlane.f32.xlu0 %v713
        %v715 = vpop.xlane.xlu0 %714
        %v716 = vadd.f32 %v382, %v383
        %717 = vadd.xlane.f32.xlu0 %v716
        %v718 = vpop.xlane.xlu0 %717
        %v719 = vadd.f32 %v384, %v385
        %720 = vadd.xlane.f32.xlu0 %v719
        %v721 = vpop.xlane.xlu0 %720
        %v722 = vadd.f32 %v386, %v387
        %723 = vadd.xlane.f32.xlu0 %v722
        %v724 = vpop.xlane.xlu0 %723
        %v725 = vadd.f32 %v388, %v389
        %726 = vadd.xlane.f32.xlu0 %v725
        %v727 = vpop.xlane.xlu0 %726
        %v728 = vadd.f32 %v390, %v391
        %729 = vadd.xlane.f32.xlu0 %v728
        %v730 = vpop.xlane.xlu0 %729
        %v731 = vadd.f32 %v392, %v393
        %732 = vadd.xlane.f32.xlu0 %v731
        %v733 = vpop.xlane.xlu0 %732
        %v734 = vadd.f32 %v394, %v395
        %735 = vadd.xlane.f32.xlu0 %v734
        %v736 = vpop.xlane.xlu0 %735
        %v737 = vadd.f32 %v396, %v397
        %738 = vadd.xlane.f32.xlu0 %v737
        %v739 = vpop.xlane.xlu0 %738
        %v740 = vadd.f32 %v398, %v399
        %741 = vadd.xlane.f32.xlu0 %v740
        %v742 = vpop.xlane.xlu0 %741
        %v743 = vadd.f32 %v400, %v401
        %744 = vadd.xlane.f32.xlu0 %v743
        %v745 = vpop.xlane.xlu0 %744
        %v746 = vadd.f32 %v402, %v403
        %747 = vadd.xlane.f32.xlu0 %v746
        %v748 = vpop.xlane.xlu0 %747
        %v749 = vadd.f32 %v404, %v405
        %750 = vadd.xlane.f32.xlu0 %v749
        %v751 = vpop.xlane.xlu0 %750
        %v752 = vadd.f32 %v406, %v407
        %753 = vadd.xlane.f32.xlu0 %v752
        %v754 = vpop.xlane.xlu0 %753
        %v755 = vadd.f32 %v408, %v409
        %756 = vadd.xlane.f32.xlu0 %v755
        %v757 = vpop.xlane.xlu0 %756
        %v758 = vadd.f32 %v410, %v411
        %759 = vadd.xlane.f32.xlu0 %v758
        %v760 = vpop.xlane.xlu0 %759
        %v761 = vadd.f32 %v412, %v413
        %762 = vadd.xlane.f32.xlu0 %v761
        %v763 = vpop.xlane.xlu0 %762
        %v764 = vadd.f32 %v414, %v415
        %765 = vadd.xlane.f32.xlu0 %v764
        %v766 = vpop.xlane.xlu0 %765
        %v767 = vadd.f32 %v416, %v417
        %768 = vadd.xlane.f32.xlu0 %v767
        %v769 = vpop.xlane.xlu0 %768
        %v770 = vadd.f32 %v418, %v419
        %771 = vadd.xlane.f32.xlu0 %v770
        %v772 = vpop.xlane.xlu0 %771
        %v773 = vadd.f32 %v420, %v421
        %774 = vadd.xlane.f32.xlu0 %v773
        %v775 = vpop.xlane.xlu0 %774
        %v776 = vadd.f32 %v422, %v423
        %777 = vadd.xlane.f32.xlu0 %v776
        %v778 = vpop.xlane.xlu0 %777
        %v779 = vadd.f32 %v424, %v425
        %780 = vadd.xlane.f32.xlu0 %v779
        %v781 = vpop.xlane.xlu0 %780
        %v782 = vadd.f32 %v426, %v427
        %783 = vadd.xlane.f32.xlu0 %v782
        %v784 = vpop.xlane.xlu0 %783
        %v785 = vadd.f32 %v428, %v429
        %786 = vadd.xlane.f32.xlu0 %v785
        %v787 = vpop.xlane.xlu0 %786
        %v788 = vadd.f32 %v430, %v431
        %789 = vadd.xlane.f32.xlu0 %v788
        %v790 = vpop.xlane.xlu0 %789
        %v791 = vadd.f32 %v432, %v433
        %792 = vadd.xlane.f32.xlu0 %v791
        %v793 = vpop.xlane.xlu0 %792
        %v794 = vadd.f32 %v434, %v435
        %795 = vadd.xlane.f32.xlu0 %v794
        %v796 = vpop.xlane.xlu0 %795
        %v797 = vadd.f32 %v436, %v437
        %798 = vadd.xlane.f32.xlu0 %v797
        %v799 = vpop.xlane.xlu0 %798
        %v800 = vadd.f32 %v438, %v439
        %801 = vadd.xlane.f32.xlu0 %v800
        %v802 = vpop.xlane.xlu0 %801
        %v803 = vadd.f32 %v440, %v441
        %804 = vadd.xlane.f32.xlu0 %v803
        %v805 = vpop.xlane.xlu0 %804
        %v806 = vadd.f32 %v442, %v443
        %807 = vadd.xlane.f32.xlu0 %v806
        %v808 = vpop.xlane.xlu0 %807
        %v809 = vadd.f32 %v444, %v445
        %810 = vadd.xlane.f32.xlu0 %v809
        %v811 = vpop.xlane.xlu0 %810
        %v812 = vadd.f32 %v446, %v447
        %813 = vadd.xlane.f32.xlu0 %v812
        %v814 = vpop.xlane.xlu0 %813
        %v815 = vadd.f32 %v448, %v449
        %816 = vadd.xlane.f32.xlu0 %v815
        %v817 = vpop.xlane.xlu0 %816
        %v818 = vadd.f32 %v450, %v451
        %819 = vadd.xlane.f32.xlu0 %v818
        %v820 = vpop.xlane.xlu0 %819
        %v821 = vadd.f32 %v452, %v453
        %822 = vadd.xlane.f32.xlu0 %v821
        %v823 = vpop.xlane.xlu0 %822
        %v824 = vadd.f32 %v454, %v455
        %825 = vadd.xlane.f32.xlu0 %v824
        %v826 = vpop.xlane.xlu0 %825
        %v827 = vadd.f32 %v456, %v457
        %828 = vadd.xlane.f32.xlu0 %v827
        %v829 = vpop.xlane.xlu0 %828
        %v830 = vadd.f32 %v458, %v459
        %831 = vadd.xlane.f32.xlu0 %v830
        %v832 = vpop.xlane.xlu0 %831
        %v833 = vadd.f32 %v460, %v461
        %834 = vadd.xlane.f32.xlu0 %v833
        %v835 = vpop.xlane.xlu0 %834
        %v836 = vadd.f32 %v462, %v463
        %837 = vadd.xlane.f32.xlu0 %v836
        %v838 = vpop.xlane.xlu0 %837
        %v839 = vadd.f32 %v464, %v465
        %840 = vadd.xlane.f32.xlu0 %v839
        %v841 = vpop.xlane.xlu0 %840
        %v842 = vadd.f32 %v466, %v467
        %843 = vadd.xlane.f32.xlu0 %v842
        %v844 = vpop.xlane.xlu0 %843
        %v845 = vadd.f32 %v468, %v469
        %846 = vadd.xlane.f32.xlu0 %v845
        %v847 = vpop.xlane.xlu0 %846
        %v848 = vadd.f32 %v470, %v471
        %849 = vadd.xlane.f32.xlu0 %v848
        %v850 = vpop.xlane.xlu0 %849
        %v851 = vadd.f32 %v472, %v473
        %852 = vadd.xlane.f32.xlu0 %v851
        %v853 = vpop.xlane.xlu0 %852
        %v854 = vadd.f32 %v474, %v475
        %855 = vadd.xlane.f32.xlu0 %v854
        %v856 = vpop.xlane.xlu0 %855
        %v857 = vadd.f32 %v476, %v477
        %858 = vadd.xlane.f32.xlu0 %v857
        %v859 = vpop.xlane.xlu0 %858
        %v860 = vadd.f32 %v478, %v479
        %861 = vadd.xlane.f32.xlu0 %v860
        %v862 = vpop.xlane.xlu0 %861
        %v863 = vadd.f32 %v480, %v481
        %864 = vadd.xlane.f32.xlu0 %v863
        %v865 = vpop.xlane.xlu0 %864
        %v866 = vmul.f32 %v484, 0.005
        %v867 = vmul.f32 %v487, 0.005
        %v868 = vmul.f32 %v490, 0.005
        %v869 = vmul.f32 %v493, 0.005
        %v870 = vmul.f32 %v496, 0.005
        %v871 = vmul.f32 %v499, 0.005
        %v872 = vmul.f32 %v502, 0.005
        %v873 = vmul.f32 %v505, 0.005
        %v874 = vmul.f32 %v508, 0.005
        %v875 = vmul.f32 %v511, 0.005
        %v876 = vmul.f32 %v514, 0.005
        %v877 = vmul.f32 %v517, 0.005
        %v878 = vmul.f32 %v520, 0.005
        %v879 = vmul.f32 %v523, 0.005
        %v880 = vmul.f32 %v526, 0.005
        %v881 = vmul.f32 %v529, 0.005
        %v882 = vmul.f32 %v532, 0.005
        %v883 = vmul.f32 %v535, 0.005
        %v884 = vmul.f32 %v538, 0.005
        %v885 = vmul.f32 %v541, 0.005
        %v886 = vmul.f32 %v544, 0.005
        %v887 = vmul.f32 %v547, 0.005
        %v888 = vmul.f32 %v550, 0.005
        %v889 = vmul.f32 %v553, 0.005
        %v890 = vmul.f32 %v556, 0.005
        %v891 = vmul.f32 %v559, 0.005
        %v892 = vmul.f32 %v562, 0.005
        %v893 = vmul.f32 %v565, 0.005
        %v894 = vmul.f32 %v568, 0.005
        %v895 = vmul.f32 %v571, 0.005
        %v896 = vmul.f32 %v574, 0.005
        %v897 = vmul.f32 %v577, 0.005
        %v898 = vmul.f32 %v580, 0.005
        %v899 = vmul.f32 %v583, 0.005
        %v900 = vmul.f32 %v586, 0.005
        %v901 = vmul.f32 %v589, 0.005
        %v902 = vmul.f32 %v592, 0.005
        %v903 = vmul.f32 %v595, 0.005
        %v904 = vmul.f32 %v598, 0.005
        %v905 = vmul.f32 %v601, 0.005
        %v906 = vmul.f32 %v604, 0.005
        %v907 = vmul.f32 %v607, 0.005
        %v908 = vmul.f32 %v610, 0.005
        %v909 = vmul.f32 %v613, 0.005
        %v910 = vmul.f32 %v616, 0.005
        %v911 = vmul.f32 %v619, 0.005
        %v912 = vmul.f32 %v622, 0.005
        %v913 = vmul.f32 %v625, 0.005
        %v914 = vmul.f32 %v628, 0.005
        %v915 = vmul.f32 %v631, 0.005
        %v916 = vmul.f32 %v634, 0.005
        %v917 = vmul.f32 %v637, 0.005
        %v918 = vmul.f32 %v640, 0.005
        %v919 = vmul.f32 %v643, 0.005
        %v920 = vmul.f32 %v646, 0.005
        %v921 = vmul.f32 %v649, 0.005
        %v922 = vmul.f32 %v652, 0.005
        %v923 = vmul.f32 %v655, 0.005
        %v924 = vmul.f32 %v658, 0.005
        %v925 = vmul.f32 %v661, 0.005
        %v926 = vmul.f32 %v664, 0.005
        %v927 = vmul.f32 %v667, 0.005
        %v928 = vmul.f32 %v670, 0.005
        %v929 = vmul.f32 %v673, 0.005
        %v930 = vmul.f32 %v676, 0.005
        %v931 = vmul.f32 %v679, 0.005
        %v932 = vmul.f32 %v682, 0.005
        %v933 = vmul.f32 %v685, 0.005
        %v934 = vmul.f32 %v688, 0.005
        %v935 = vmul.f32 %v691, 0.005
        %v936 = vmul.f32 %v694, 0.005
        %v937 = vmul.f32 %v697, 0.005
        %v938 = vmul.f32 %v700, 0.005
        %v939 = vmul.f32 %v703, 0.005
        %v940 = vmul.f32 %v706, 0.005
        %v941 = vmul.f32 %v709, 0.005
        %v942 = vmul.f32 %v712, 0.005
        %v943 = vmul.f32 %v715, 0.005
        %v944 = vmul.f32 %v718, 0.005
        %v945 = vmul.f32 %v721, 0.005
        %v946 = vmul.f32 %v724, 0.005
        %v947 = vmul.f32 %v727, 0.005
        %v948 = vmul.f32 %v730, 0.005
        %v949 = vmul.f32 %v733, 0.005
        %v950 = vmul.f32 %v736, 0.005
        %v951 = vmul.f32 %v739, 0.005
        %v952 = vmul.f32 %v742, 0.005
        %v953 = vmul.f32 %v745, 0.005
        %v954 = vmul.f32 %v748, 0.005
        %v955 = vmul.f32 %v751, 0.005
        %v956 = vmul.f32 %v754, 0.005
        %v957 = vmul.f32 %v757, 0.005
        %v958 = vmul.f32 %v760, 0.005
        %v959 = vmul.f32 %v763, 0.005
        %v960 = vmul.f32 %v766, 0.005
        %v961 = vmul.f32 %v769, 0.005
        %v962 = vmul.f32 %v772, 0.005
        %v963 = vmul.f32 %v775, 0.005
        %v964 = vmul.f32 %v778, 0.005
        %v965 = vmul.f32 %v781, 0.005
        %v966 = vmul.f32 %v784, 0.005
        %v967 = vmul.f32 %v787, 0.005
        %v968 = vmul.f32 %v790, 0.005
        %v969 = vmul.f32 %v793, 0.005
        %v970 = vmul.f32 %v796, 0.005
        %v971 = vmul.f32 %v799, 0.005
        %v972 = vmul.f32 %v802, 0.005
        %v973 = vmul.f32 %v805, 0.005
        %v974 = vmul.f32 %v808, 0.005
        %v975 = vmul.f32 %v811, 0.005
        %v976 = vmul.f32 %v814, 0.005
        %v977 = vmul.f32 %v817, 0.005
        %v978 = vmul.f32 %v820, 0.005
        %v979 = vmul.f32 %v823, 0.005
        %v980 = vmul.f32 %v826, 0.005
        %v981 = vmul.f32 %v829, 0.005
        %v982 = vmul.f32 %v832, 0.005
        %v983 = vmul.f32 %v835, 0.005
        %v984 = vmul.f32 %v838, 0.005
        %v985 = vmul.f32 %v841, 0.005
        %v986 = vmul.f32 %v844, 0.005
        %v987 = vmul.f32 %v847, 0.005
        %v988 = vmul.f32 %v850, 0.005
        %v989 = vmul.f32 %v853, 0.005
        %v990 = vmul.f32 %v856, 0.005
        %v991 = vmul.f32 %v859, 0.005
        %v992 = vmul.f32 %v862, 0.005
        %v993 = vmul.f32 %v865, 0.005
        %v994 = vld [vmem:[%s1] sm:$0xff]
        %v995 = vld [vmem:[%s1 + $0x8] sm:$0xff]
        %v996 = vld [vmem:[%s1 + $0x10] sm:$0xff]
        %v997 = vld [vmem:[%s1 + $0x18] sm:$0xff]
        %v1126 = vlaneseq
        %v1127 = vand.u32 %v1126, 127
        %v1128 = vlaneseq
        %v1129 = vshrl.u32 %v1128, 7
        %v1130 = vsub.s32 %v1127, %v1129
        %v1131 = vrot.slane %v866, %v1130
        %v1132 = vadd.s32 %v1127, 4294967288
        %v1133 = vlaneseq
        %v1134 = vshrl.u32 %v1133, 7
        %v1135 = vsub.s32 %v1132, %v1134
        %v1136 = vrot.slane %v867, %v1135
        %vm1137 = vcmask 130112
        %v1138 = vsel %vm1137, %v1136, %v1131
        %v1139 = vadd.s32 %v1127, 4294967280
        %v1140 = vlaneseq
        %v1141 = vshrl.u32 %v1140, 7
        %v1142 = vsub.s32 %v1139, %v1141
        %v1143 = vrot.slane %v868, %v1142
        %vm1144 = vcmask 195712
        %v1145 = vsel %vm1144, %v1143, %v1138
        %v1146 = vadd.s32 %v1127, 4294967272
        %v1147 = vlaneseq
        %v1148 = vshrl.u32 %v1147, 7
        %v1149 = vsub.s32 %v1146, %v1148
        %v1150 = vrot.slane %v869, %v1149
        %vm1151 = vcmask 261312
        %v1152 = vsel %vm1151, %v1150, %v1145
        %v1153 = vlaneseq
        %v1154 = vshrl.u32 %v1153, 7
        %v1155 = vsub.s32 %v1127, %v1154
        %v1156 = vrot.slane %v870, %v1155
        %v1157 = vlaneseq
        %v1158 = vshrl.u32 %v1157, 7
        %v1159 = vsub.s32 %v1132, %v1158
        %v1160 = vrot.slane %v871, %v1159
        %v1161 = vsel %vm1137, %v1160, %v1156
        %v1162 = vlaneseq
        %v1163 = vshrl.u32 %v1162, 7
        %v1164 = vsub.s32 %v1139, %v1163
        %v1165 = vrot.slane %v872, %v1164
        %v1166 = vsel %vm1144, %v1165, %v1161
        %v1167 = vlaneseq
        %v1168 = vshrl.u32 %v1167, 7
        %v1169 = vsub.s32 %v1146, %v1168
        %v1170 = vrot.slane %v873, %v1169
        %v1171 = vsel %vm1151, %v1170, %v1166
        %v1172 = vlaneseq
        %v1173 = vshrl.u32 %v1172, 7
        %v1174 = vsub.s32 %v1127, %v1173
        %v1175 = vrot.slane %v874, %v1174
        %v1176 = vlaneseq
        %v1177 = vshrl.u32 %v1176, 7
        %v1178 = vsub.s32 %v1132, %v1177
        %v1179 = vrot.slane %v875, %v1178
        %v1180 = vsel %vm1137, %v1179, %v1175
        %v1181 = vlaneseq
        %v1182 = vshrl.u32 %v1181, 7
        %v1183 = vsub.s32 %v1139, %v1182
        %v1184 = vrot.slane %v876, %v1183
        %v1185 = vsel %vm1144, %v1184, %v1180
        %v1186 = vlaneseq
        %v1187 = vshrl.u32 %v1186, 7
        %v1188 = vsub.s32 %v1146, %v1187
        %v1189 = vrot.slane %v877, %v1188
        %v1190 = vsel %vm1151, %v1189, %v1185
        %v1191 = vlaneseq
        %v1192 = vshrl.u32 %v1191, 7
        %v1193 = vsub.s32 %v1127, %v1192
        %v1194 = vrot.slane %v878, %v1193
        %v1195 = vlaneseq
        %v1196 = vshrl.u32 %v1195, 7
        %v1197 = vsub.s32 %v1132, %v1196
        %v1198 = vrot.slane %v879, %v1197
        %v1199 = vsel %vm1137, %v1198, %v1194
        %v1200 = vlaneseq
        %v1201 = vshrl.u32 %v1200, 7
        %v1202 = vsub.s32 %v1139, %v1201
        %v1203 = vrot.slane %v880, %v1202
        %v1204 = vsel %vm1144, %v1203, %v1199
        %v1205 = vlaneseq
        %v1206 = vshrl.u32 %v1205, 7
        %v1207 = vsub.s32 %v1146, %v1206
        %v1208 = vrot.slane %v881, %v1207
        %v1209 = vsel %vm1151, %v1208, %v1204
        %v1210 = vlaneseq
        %v1211 = vshrl.u32 %v1210, 7
        %v1212 = vsub.s32 %v1127, %v1211
        %v1213 = vrot.slane %v882, %v1212
        %v1214 = vlaneseq
        %v1215 = vshrl.u32 %v1214, 7
        %v1216 = vsub.s32 %v1132, %v1215
        %v1217 = vrot.slane %v883, %v1216
        %v1218 = vsel %vm1137, %v1217, %v1213
        %v1219 = vlaneseq
        %v1220 = vshrl.u32 %v1219, 7
        %v1221 = vsub.s32 %v1139, %v1220
        %v1222 = vrot.slane %v884, %v1221
        %v1223 = vsel %vm1144, %v1222, %v1218
        %v1224 = vlaneseq
        %v1225 = vshrl.u32 %v1224, 7
        %v1226 = vsub.s32 %v1146, %v1225
        %v1227 = vrot.slane %v885, %v1226
        %v1228 = vsel %vm1151, %v1227, %v1223
        %v1229 = vlaneseq
        %v1230 = vshrl.u32 %v1229, 7
        %v1231 = vsub.s32 %v1127, %v1230
        %v1232 = vrot.slane %v886, %v1231
        %v1233 = vlaneseq
        %v1234 = vshrl.u32 %v1233, 7
        %v1235 = vsub.s32 %v1132, %v1234
        %v1236 = vrot.slane %v887, %v1235
        %v1237 = vsel %vm1137, %v1236, %v1232
        %v1238 = vlaneseq
        %v1239 = vshrl.u32 %v1238, 7
        %v1240 = vsub.s32 %v1139, %v1239
        %v1241 = vrot.slane %v888, %v1240
        %v1242 = vsel %vm1144, %v1241, %v1237
        %v1243 = vlaneseq
        %v1244 = vshrl.u32 %v1243, 7
        %v1245 = vsub.s32 %v1146, %v1244
        %v1246 = vrot.slane %v889, %v1245
        %v1247 = vsel %vm1151, %v1246, %v1242
        %v1248 = vlaneseq
        %v1249 = vshrl.u32 %v1248, 7
        %v1250 = vsub.s32 %v1127, %v1249
        %v1251 = vrot.slane %v890, %v1250
        %v1252 = vlaneseq
        %v1253 = vshrl.u32 %v1252, 7
        %v1254 = vsub.s32 %v1132, %v1253
        %v1255 = vrot.slane %v891, %v1254
        %v1256 = vsel %vm1137, %v1255, %v1251
        %v1257 = vlaneseq
        %v1258 = vshrl.u32 %v1257, 7
        %v1259 = vsub.s32 %v1139, %v1258
        %v1260 = vrot.slane %v892, %v1259
        %v1261 = vsel %vm1144, %v1260, %v1256
        %v1262 = vlaneseq
        %v1263 = vshrl.u32 %v1262, 7
        %v1264 = vsub.s32 %v1146, %v1263
        %v1265 = vrot.slane %v893, %v1264
        %v1266 = vsel %vm1151, %v1265, %v1261
        %v1267 = vlaneseq
        %v1268 = vshrl.u32 %v1267, 7
        %v1269 = vsub.s32 %v1127, %v1268
        %v1270 = vrot.slane %v894, %v1269
        %v1271 = vlaneseq
        %v1272 = vshrl.u32 %v1271, 7
        %v1273 = vsub.s32 %v1132, %v1272
        %v1274 = vrot.slane %v895, %v1273
        %v1275 = vsel %vm1137, %v1274, %v1270
        %v1276 = vlaneseq
        %v1277 = vshrl.u32 %v1276, 7
        %v1278 = vsub.s32 %v1139, %v1277
        %v1279 = vrot.slane %v896, %v1278
        %v1280 = vsel %vm1144, %v1279, %v1275
        %v1281 = vlaneseq
        %v1282 = vshrl.u32 %v1281, 7
        %v1283 = vsub.s32 %v1146, %v1282
        %v1284 = vrot.slane %v897, %v1283
        %v1285 = vsel %vm1151, %v1284, %v1280
        %v1286 = vlaneseq
        %v1287 = vshrl.u32 %v1286, 7
        %v1288 = vsub.s32 %v1127, %v1287
        %v1289 = vrot.slane %v898, %v1288
        %v1290 = vlaneseq
        %v1291 = vshrl.u32 %v1290, 7
        %v1292 = vsub.s32 %v1132, %v1291
        %v1293 = vrot.slane %v899, %v1292
        %v1294 = vsel %vm1137, %v1293, %v1289
        %v1295 = vlaneseq
        %v1296 = vshrl.u32 %v1295, 7
        %v1297 = vsub.s32 %v1139, %v1296
        %v1298 = vrot.slane %v900, %v1297
        %v1299 = vsel %vm1144, %v1298, %v1294
        %v1300 = vlaneseq
        %v1301 = vshrl.u32 %v1300, 7
        %v1302 = vsub.s32 %v1146, %v1301
        %v1303 = vrot.slane %v901, %v1302
        %v1304 = vsel %vm1151, %v1303, %v1299
        %v1305 = vlaneseq
        %v1306 = vshrl.u32 %v1305, 7
        %v1307 = vsub.s32 %v1127, %v1306
        %v1308 = vrot.slane %v902, %v1307
        %v1309 = vlaneseq
        %v1310 = vshrl.u32 %v1309, 7
        %v1311 = vsub.s32 %v1132, %v1310
        %v1312 = vrot.slane %v903, %v1311
        %v1313 = vsel %vm1137, %v1312, %v1308
        %v1314 = vlaneseq
        %v1315 = vshrl.u32 %v1314, 7
        %v1316 = vsub.s32 %v1139, %v1315
        %v1317 = vrot.slane %v904, %v1316
        %v1318 = vsel %vm1144, %v1317, %v1313
        %v1319 = vlaneseq
        %v1320 = vshrl.u32 %v1319, 7
        %v1321 = vsub.s32 %v1146, %v1320
        %v1322 = vrot.slane %v905, %v1321
        %v1323 = vsel %vm1151, %v1322, %v1318
        %v1324 = vlaneseq
        %v1325 = vshrl.u32 %v1324, 7
        %v1326 = vsub.s32 %v1127, %v1325
        %v1327 = vrot.slane %v906, %v1326
        %v1328 = vlaneseq
        %v1329 = vshrl.u32 %v1328, 7
        %v1330 = vsub.s32 %v1132, %v1329
        %v1331 = vrot.slane %v907, %v1330
        %v1332 = vsel %vm1137, %v1331, %v1327
        %v1333 = vlaneseq
        %v1334 = vshrl.u32 %v1333, 7
        %v1335 = vsub.s32 %v1139, %v1334
        %v1336 = vrot.slane %v908, %v1335
        %v1337 = vsel %vm1144, %v1336, %v1332
        %v1338 = vlaneseq
        %v1339 = vshrl.u32 %v1338, 7
        %v1340 = vsub.s32 %v1146, %v1339
        %v1341 = vrot.slane %v909, %v1340
        %v1342 = vsel %vm1151, %v1341, %v1337
        %v1343 = vlaneseq
        %v1344 = vshrl.u32 %v1343, 7
        %v1345 = vsub.s32 %v1127, %v1344
        %v1346 = vrot.slane %v910, %v1345
        %v1347 = vlaneseq
        %v1348 = vshrl.u32 %v1347, 7
        %v1349 = vsub.s32 %v1132, %v1348
        %v1350 = vrot.slane %v911, %v1349
        %v1351 = vsel %vm1137, %v1350, %v1346
        %v1352 = vlaneseq
        %v1353 = vshrl.u32 %v1352, 7
        %v1354 = vsub.s32 %v1139, %v1353
        %v1355 = vrot.slane %v912, %v1354
        %v1356 = vsel %vm1144, %v1355, %v1351
        %v1357 = vlaneseq
        %v1358 = vshrl.u32 %v1357, 7
        %v1359 = vsub.s32 %v1146, %v1358
        %v1360 = vrot.slane %v913, %v1359
        %v1361 = vsel %vm1151, %v1360, %v1356
        %v1362 = vlaneseq
        %v1363 = vshrl.u32 %v1362, 7
        %v1364 = vsub.s32 %v1127, %v1363
        %v1365 = vrot.slane %v914, %v1364
        %v1366 = vlaneseq
        %v1367 = vshrl.u32 %v1366, 7
        %v1368 = vsub.s32 %v1132, %v1367
        %v1369 = vrot.slane %v915, %v1368
        %v1370 = vsel %vm1137, %v1369, %v1365
        %v1371 = vlaneseq
        %v1372 = vshrl.u32 %v1371, 7
        %v1373 = vsub.s32 %v1139, %v1372
        %v1374 = vrot.slane %v916, %v1373
        %v1375 = vsel %vm1144, %v1374, %v1370
        %v1376 = vlaneseq
        %v1377 = vshrl.u32 %v1376, 7
        %v1378 = vsub.s32 %v1146, %v1377
        %v1379 = vrot.slane %v917, %v1378
        %v1380 = vsel %vm1151, %v1379, %v1375
        %v1381 = vlaneseq
        %v1382 = vshrl.u32 %v1381, 7
        %v1383 = vsub.s32 %v1127, %v1382
        %v1384 = vrot.slane %v918, %v1383
        %v1385 = vlaneseq
        %v1386 = vshrl.u32 %v1385, 7
        %v1387 = vsub.s32 %v1132, %v1386
        %v1388 = vrot.slane %v919, %v1387
        %v1389 = vsel %vm1137, %v1388, %v1384
        %v1390 = vlaneseq
        %v1391 = vshrl.u32 %v1390, 7
        %v1392 = vsub.s32 %v1139, %v1391
        %v1393 = vrot.slane %v920, %v1392
        %v1394 = vsel %vm1144, %v1393, %v1389
        %v1395 = vlaneseq
        %v1396 = vshrl.u32 %v1395, 7
        %v1397 = vsub.s32 %v1146, %v1396
        %v1398 = vrot.slane %v921, %v1397
        %v1399 = vsel %vm1151, %v1398, %v1394
        %v1400 = vlaneseq
        %v1401 = vshrl.u32 %v1400, 7
        %v1402 = vsub.s32 %v1127, %v1401
        %v1403 = vrot.slane %v922, %v1402
        %v1404 = vlaneseq
        %v1405 = vshrl.u32 %v1404, 7
        %v1406 = vsub.s32 %v1132, %v1405
        %v1407 = vrot.slane %v923, %v1406
        %v1408 = vsel %vm1137, %v1407, %v1403
        %v1409 = vlaneseq
        %v1410 = vshrl.u32 %v1409, 7
        %v1411 = vsub.s32 %v1139, %v1410
        %v1412 = vrot.slane %v924, %v1411
        %v1413 = vsel %vm1144, %v1412, %v1408
        %v1414 = vlaneseq
        %v1415 = vshrl.u32 %v1414, 7
        %v1416 = vsub.s32 %v1146, %v1415
        %v1417 = vrot.slane %v925, %v1416
        %v1418 = vsel %vm1151, %v1417, %v1413
        %v1419 = vlaneseq
        %v1420 = vshrl.u32 %v1419, 7
        %v1421 = vsub.s32 %v1127, %v1420
        %v1422 = vrot.slane %v926, %v1421
        %v1423 = vlaneseq
        %v1424 = vshrl.u32 %v1423, 7
        %v1425 = vsub.s32 %v1132, %v1424
        %v1426 = vrot.slane %v927, %v1425
        %v1427 = vsel %vm1137, %v1426, %v1422
        %v1428 = vlaneseq
        %v1429 = vshrl.u32 %v1428, 7
        %v1430 = vsub.s32 %v1139, %v1429
        %v1431 = vrot.slane %v928, %v1430
        %v1432 = vsel %vm1144, %v1431, %v1427
        %v1433 = vlaneseq
        %v1434 = vshrl.u32 %v1433, 7
        %v1435 = vsub.s32 %v1146, %v1434
        %v1436 = vrot.slane %v929, %v1435
        %v1437 = vsel %vm1151, %v1436, %v1432
        %v1438 = vlaneseq
        %v1439 = vshrl.u32 %v1438, 7
        %v1440 = vsub.s32 %v1127, %v1439
        %v1441 = vrot.slane %v930, %v1440
        %v1442 = vlaneseq
        %v1443 = vshrl.u32 %v1442, 7
        %v1444 = vsub.s32 %v1132, %v1443
        %v1445 = vrot.slane %v931, %v1444
        %v1446 = vsel %vm1137, %v1445, %v1441
        %v1447 = vlaneseq
        %v1448 = vshrl.u32 %v1447, 7
        %v1449 = vsub.s32 %v1139, %v1448
        %v1450 = vrot.slane %v932, %v1449
        %v1451 = vsel %vm1144, %v1450, %v1446
        %v1452 = vlaneseq
        %v1453 = vshrl.u32 %v1452, 7
        %v1454 = vsub.s32 %v1146, %v1453
        %v1455 = vrot.slane %v933, %v1454
        %v1456 = vsel %vm1151, %v1455, %v1451
        %v1457 = vlaneseq
        %v1458 = vshrl.u32 %v1457, 7
        %v1459 = vsub.s32 %v1127, %v1458
        %v1460 = vrot.slane %v934, %v1459
        %v1461 = vlaneseq
        %v1462 = vshrl.u32 %v1461, 7
        %v1463 = vsub.s32 %v1132, %v1462
        %v1464 = vrot.slane %v935, %v1463
        %v1465 = vsel %vm1137, %v1464, %v1460
        %v1466 = vlaneseq
        %v1467 = vshrl.u32 %v1466, 7
        %v1468 = vsub.s32 %v1139, %v1467
        %v1469 = vrot.slane %v936, %v1468
        %v1470 = vsel %vm1144, %v1469, %v1465
        %v1471 = vlaneseq
        %v1472 = vshrl.u32 %v1471, 7
        %v1473 = vsub.s32 %v1146, %v1472
        %v1474 = vrot.slane %v937, %v1473
        %v1475 = vsel %vm1151, %v1474, %v1470
        %v1476 = vlaneseq
        %v1477 = vshrl.u32 %v1476, 7
        %v1478 = vsub.s32 %v1127, %v1477
        %v1479 = vrot.slane %v938, %v1478
        %v1480 = vlaneseq
        %v1481 = vshrl.u32 %v1480, 7
        %v1482 = vsub.s32 %v1132, %v1481
        %v1483 = vrot.slane %v939, %v1482
        %v1484 = vsel %vm1137, %v1483, %v1479
        %v1485 = vlaneseq
        %v1486 = vshrl.u32 %v1485, 7
        %v1487 = vsub.s32 %v1139, %v1486
        %v1488 = vrot.slane %v940, %v1487
        %v1489 = vsel %vm1144, %v1488, %v1484
        %v1490 = vlaneseq
        %v1491 = vshrl.u32 %v1490, 7
        %v1492 = vsub.s32 %v1146, %v1491
        %v1493 = vrot.slane %v941, %v1492
        %v1494 = vsel %vm1151, %v1493, %v1489
        %v1495 = vlaneseq
        %v1496 = vshrl.u32 %v1495, 7
        %v1497 = vsub.s32 %v1127, %v1496
        %v1498 = vrot.slane %v942, %v1497
        %v1499 = vlaneseq
        %v1500 = vshrl.u32 %v1499, 7
        %v1501 = vsub.s32 %v1132, %v1500
        %v1502 = vrot.slane %v943, %v1501
        %v1503 = vsel %vm1137, %v1502, %v1498
        %v1504 = vlaneseq
        %v1505 = vshrl.u32 %v1504, 7
        %v1506 = vsub.s32 %v1139, %v1505
        %v1507 = vrot.slane %v944, %v1506
        %v1508 = vsel %vm1144, %v1507, %v1503
        %v1509 = vlaneseq
        %v1510 = vshrl.u32 %v1509, 7
        %v1511 = vsub.s32 %v1146, %v1510
        %v1512 = vrot.slane %v945, %v1511
        %v1513 = vsel %vm1151, %v1512, %v1508
        %v1514 = vlaneseq
        %v1515 = vshrl.u32 %v1514, 7
        %v1516 = vsub.s32 %v1127, %v1515
        %v1517 = vrot.slane %v946, %v1516
        %v1518 = vlaneseq
        %v1519 = vshrl.u32 %v1518, 7
        %v1520 = vsub.s32 %v1132, %v1519
        %v1521 = vrot.slane %v947, %v1520
        %v1522 = vsel %vm1137, %v1521, %v1517
        %v1523 = vlaneseq
        %v1524 = vshrl.u32 %v1523, 7
        %v1525 = vsub.s32 %v1139, %v1524
        %v1526 = vrot.slane %v948, %v1525
        %v1527 = vsel %vm1144, %v1526, %v1522
        %v1528 = vlaneseq
        %v1529 = vshrl.u32 %v1528, 7
        %v1530 = vsub.s32 %v1146, %v1529
        %v1531 = vrot.slane %v949, %v1530
        %v1532 = vsel %vm1151, %v1531, %v1527
        %v1533 = vlaneseq
        %v1534 = vshrl.u32 %v1533, 7
        %v1535 = vsub.s32 %v1127, %v1534
        %v1536 = vrot.slane %v950, %v1535
        %v1537 = vlaneseq
        %v1538 = vshrl.u32 %v1537, 7
        %v1539 = vsub.s32 %v1132, %v1538
        %v1540 = vrot.slane %v951, %v1539
        %v1541 = vsel %vm1137, %v1540, %v1536
        %v1542 = vlaneseq
        %v1543 = vshrl.u32 %v1542, 7
        %v1544 = vsub.s32 %v1139, %v1543
        %v1545 = vrot.slane %v952, %v1544
        %v1546 = vsel %vm1144, %v1545, %v1541
        %v1547 = vlaneseq
        %v1548 = vshrl.u32 %v1547, 7
        %v1549 = vsub.s32 %v1146, %v1548
        %v1550 = vrot.slane %v953, %v1549
        %v1551 = vsel %vm1151, %v1550, %v1546
        %v1552 = vlaneseq
        %v1553 = vshrl.u32 %v1552, 7
        %v1554 = vsub.s32 %v1127, %v1553
        %v1555 = vrot.slane %v954, %v1554
        %v1556 = vlaneseq
        %v1557 = vshrl.u32 %v1556, 7
        %v1558 = vsub.s32 %v1132, %v1557
        %v1559 = vrot.slane %v955, %v1558
        %v1560 = vsel %vm1137, %v1559, %v1555
        %v1561 = vlaneseq
        %v1562 = vshrl.u32 %v1561, 7
        %v1563 = vsub.s32 %v1139, %v1562
        %v1564 = vrot.slane %v956, %v1563
        %v1565 = vsel %vm1144, %v1564, %v1560
        %v1566 = vlaneseq
        %v1567 = vshrl.u32 %v1566, 7
        %v1568 = vsub.s32 %v1146, %v1567
        %v1569 = vrot.slane %v957, %v1568
        %v1570 = vsel %vm1151, %v1569, %v1565
        %v1571 = vlaneseq
        %v1572 = vshrl.u32 %v1571, 7
        %v1573 = vsub.s32 %v1127, %v1572
        %v1574 = vrot.slane %v958, %v1573
        %v1575 = vlaneseq
        %v1576 = vshrl.u32 %v1575, 7
        %v1577 = vsub.s32 %v1132, %v1576
        %v1578 = vrot.slane %v959, %v1577
        %v1579 = vsel %vm1137, %v1578, %v1574
        %v1580 = vlaneseq
        %v1581 = vshrl.u32 %v1580, 7
        %v1582 = vsub.s32 %v1139, %v1581
        %v1583 = vrot.slane %v960, %v1582
        %v1584 = vsel %vm1144, %v1583, %v1579
        %v1585 = vlaneseq
        %v1586 = vshrl.u32 %v1585, 7
        %v1587 = vsub.s32 %v1146, %v1586
        %v1588 = vrot.slane %v961, %v1587
        %v1589 = vsel %vm1151, %v1588, %v1584
        %v1590 = vlaneseq
        %v1591 = vshrl.u32 %v1590, 7
        %v1592 = vsub.s32 %v1127, %v1591
        %v1593 = vrot.slane %v962, %v1592
        %v1594 = vlaneseq
        %v1595 = vshrl.u32 %v1594, 7
        %v1596 = vsub.s32 %v1132, %v1595
        %v1597 = vrot.slane %v963, %v1596
        %v1598 = vsel %vm1137, %v1597, %v1593
        %v1599 = vlaneseq
        %v1600 = vshrl.u32 %v1599, 7
        %v1601 = vsub.s32 %v1139, %v1600
        %v1602 = vrot.slane %v964, %v1601
        %v1603 = vsel %vm1144, %v1602, %v1598
        %v1604 = vlaneseq
        %v1605 = vshrl.u32 %v1604, 7
        %v1606 = vsub.s32 %v1146, %v1605
        %v1607 = vrot.slane %v965, %v1606
        %v1608 = vsel %vm1151, %v1607, %v1603
        %v1609 = vlaneseq
        %v1610 = vshrl.u32 %v1609, 7
        %v1611 = vsub.s32 %v1127, %v1610
        %v1612 = vrot.slane %v966, %v1611
        %v1613 = vlaneseq
        %v1614 = vshrl.u32 %v1613, 7
        %v1615 = vsub.s32 %v1132, %v1614
        %v1616 = vrot.slane %v967, %v1615
        %v1617 = vsel %vm1137, %v1616, %v1612
        %v1618 = vlaneseq
        %v1619 = vshrl.u32 %v1618, 7
        %v1620 = vsub.s32 %v1139, %v1619
        %v1621 = vrot.slane %v968, %v1620
        %v1622 = vsel %vm1144, %v1621, %v1617
        %v1623 = vlaneseq
        %v1624 = vshrl.u32 %v1623, 7
        %v1625 = vsub.s32 %v1146, %v1624
        %v1626 = vrot.slane %v969, %v1625
        %v1627 = vsel %vm1151, %v1626, %v1622
        %v1628 = vlaneseq
        %v1629 = vshrl.u32 %v1628, 7
        %v1630 = vsub.s32 %v1127, %v1629
        %v1631 = vrot.slane %v970, %v1630
        %v1632 = vlaneseq
        %v1633 = vshrl.u32 %v1632, 7
        %v1634 = vsub.s32 %v1132, %v1633
        %v1635 = vrot.slane %v971, %v1634
        %v1636 = vsel %vm1137, %v1635, %v1631
        %v1637 = vlaneseq
        %v1638 = vshrl.u32 %v1637, 7
        %v1639 = vsub.s32 %v1139, %v1638
        %v1640 = vrot.slane %v972, %v1639
        %v1641 = vsel %vm1144, %v1640, %v1636
        %v1642 = vlaneseq
        %v1643 = vshrl.u32 %v1642, 7
        %v1644 = vsub.s32 %v1146, %v1643
        %v1645 = vrot.slane %v973, %v1644
        %v1646 = vsel %vm1151, %v1645, %v1641
        %v1647 = vlaneseq
        %v1648 = vshrl.u32 %v1647, 7
        %v1649 = vsub.s32 %v1127, %v1648
        %v1650 = vrot.slane %v974, %v1649
        %v1651 = vlaneseq
        %v1652 = vshrl.u32 %v1651, 7
        %v1653 = vsub.s32 %v1132, %v1652
        %v1654 = vrot.slane %v975, %v1653
        %v1655 = vsel %vm1137, %v1654, %v1650
        %v1656 = vlaneseq
        %v1657 = vshrl.u32 %v1656, 7
        %v1658 = vsub.s32 %v1139, %v1657
        %v1659 = vrot.slane %v976, %v1658
        %v1660 = vsel %vm1144, %v1659, %v1655
        %v1661 = vlaneseq
        %v1662 = vshrl.u32 %v1661, 7
        %v1663 = vsub.s32 %v1146, %v1662
        %v1664 = vrot.slane %v977, %v1663
        %v1665 = vsel %vm1151, %v1664, %v1660
        %v1666 = vlaneseq
        %v1667 = vshrl.u32 %v1666, 7
        %v1668 = vsub.s32 %v1127, %v1667
        %v1669 = vrot.slane %v978, %v1668
        %v1670 = vlaneseq
        %v1671 = vshrl.u32 %v1670, 7
        %v1672 = vsub.s32 %v1132, %v1671
        %v1673 = vrot.slane %v979, %v1672
        %v1674 = vsel %vm1137, %v1673, %v1669
        %v1675 = vlaneseq
        %v1676 = vshrl.u32 %v1675, 7
        %v1677 = vsub.s32 %v1139, %v1676
        %v1678 = vrot.slane %v980, %v1677
        %v1679 = vsel %vm1144, %v1678, %v1674
        %v1680 = vlaneseq
        %v1681 = vshrl.u32 %v1680, 7
        %v1682 = vsub.s32 %v1146, %v1681
        %v1683 = vrot.slane %v981, %v1682
        %v1684 = vsel %vm1151, %v1683, %v1679
        %v1685 = vlaneseq
        %v1686 = vshrl.u32 %v1685, 7
        %v1687 = vsub.s32 %v1127, %v1686
        %v1688 = vrot.slane %v982, %v1687
        %v1689 = vlaneseq
        %v1690 = vshrl.u32 %v1689, 7
        %v1691 = vsub.s32 %v1132, %v1690
        %v1692 = vrot.slane %v983, %v1691
        %v1693 = vsel %vm1137, %v1692, %v1688
        %v1694 = vlaneseq
        %v1695 = vshrl.u32 %v1694, 7
        %v1696 = vsub.s32 %v1139, %v1695
        %v1697 = vrot.slane %v984, %v1696
        %v1698 = vsel %vm1144, %v1697, %v1693
        %v1699 = vlaneseq
        %v1700 = vshrl.u32 %v1699, 7
        %v1701 = vsub.s32 %v1146, %v1700
        %v1702 = vrot.slane %v985, %v1701
        %v1703 = vsel %vm1151, %v1702, %v1698
        %v1704 = vlaneseq
        %v1705 = vshrl.u32 %v1704, 7
        %v1706 = vsub.s32 %v1127, %v1705
        %v1707 = vrot.slane %v986, %v1706
        %v1708 = vlaneseq
        %v1709 = vshrl.u32 %v1708, 7
        %v1710 = vsub.s32 %v1132, %v1709
        %v1711 = vrot.slane %v987, %v1710
        %v1712 = vsel %vm1137, %v1711, %v1707
        %v1713 = vlaneseq
        %v1714 = vshrl.u32 %v1713, 7
        %v1715 = vsub.s32 %v1139, %v1714
        %v1716 = vrot.slane %v988, %v1715
        %v1717 = vsel %vm1144, %v1716, %v1712
        %v1718 = vlaneseq
        %v1719 = vshrl.u32 %v1718, 7
        %v1720 = vsub.s32 %v1146, %v1719
        %v1721 = vrot.slane %v989, %v1720
        %v1722 = vsel %vm1151, %v1721, %v1717
        %v1723 = vlaneseq
        %v1724 = vshrl.u32 %v1723, 7
        %v1725 = vsub.s32 %v1127, %v1724
        %v1726 = vrot.slane %v990, %v1725
        %v1727 = vlaneseq
        %v1728 = vshrl.u32 %v1727, 7
        %v1729 = vsub.s32 %v1132, %v1728
        %v1730 = vrot.slane %v991, %v1729
        %v1731 = vsel %vm1137, %v1730, %v1726
        %v1732 = vlaneseq
        %v1733 = vshrl.u32 %v1732, 7
        %v1734 = vsub.s32 %v1139, %v1733
        %v1735 = vrot.slane %v992, %v1734
        %v1736 = vsel %vm1144, %v1735, %v1731
        %v1737 = vlaneseq
        %v1738 = vshrl.u32 %v1737, 7
        %v1739 = vsub.s32 %v1146, %v1738
        %v1740 = vrot.slane %v993, %v1739
        %v1741 = vsel %vm1151, %v1740, %v1736
        %vm1742 = vcmask 1041409
        %v1743 = vsel %vm1742, %v1171, %v1152
        %vm1744 = vcmask 1042434
        %v1745 = vsel %vm1744, %v1190, %v1743
        %vm1746 = vcmask 1043459
        %v1747 = vsel %vm1746, %v1209, %v1745
        %vm1748 = vcmask 1044484
        %v1749 = vsel %vm1748, %v1228, %v1747
        %vm1750 = vcmask 1045509
        %v1751 = vsel %vm1750, %v1247, %v1749
        %vm1752 = vcmask 1046534
        %v1753 = vsel %vm1752, %v1266, %v1751
        %vm1754 = vcmask 1047559
        %v1755 = vsel %vm1754, %v1285, %v1753
        %v1756 = vsel %vm1742, %v1323, %v1304
        %v1757 = vsel %vm1744, %v1342, %v1756
        %v1758 = vsel %vm1746, %v1361, %v1757
        %v1759 = vsel %vm1748, %v1380, %v1758
        %v1760 = vsel %vm1750, %v1399, %v1759
        %v1761 = vsel %vm1752, %v1418, %v1760
        %v1762 = vsel %vm1754, %v1437, %v1761
        %v1763 = vsel %vm1742, %v1475, %v1456
        %v1764 = vsel %vm1744, %v1494, %v1763
        %v1765 = vsel %vm1746, %v1513, %v1764
        %v1766 = vsel %vm1748, %v1532, %v1765
        %v1767 = vsel %vm1750, %v1551, %v1766
        %v1768 = vsel %vm1752, %v1570, %v1767
        %v1769 = vsel %vm1754, %v1589, %v1768
        %v1770 = vsel %vm1742, %v1627, %v1608
        %v1771 = vsel %vm1744, %v1646, %v1770
        %v1772 = vsel %vm1746, %v1665, %v1771
        %v1773 = vsel %vm1748, %v1684, %v1772
        %v1774 = vsel %vm1750, %v1703, %v1773
        %v1775 = vsel %vm1752, %v1722, %v1774
        %v1776 = vsel %vm1754, %v1741, %v1775
        %vm1777 = vcmask 261120
        %v1778 = vsel %vm1777, %v1755, 0
        %v1780 = vsel %vm1777, %v1762, 0
        %v1782 = vsel %vm1777, %v1769, 0
        %v1784 = vsel %vm1777, %v1776, 0
        %1786 = vmatprep.subr.mxu0 0.0
        %1787 = vmatpush1.msra.mxu0 0.0
        %1788 = vmatprep.subr.mxu0 0.0
        %1789 = vmatpush1.msra.mxu0 0.0
        %1790 = vmatprep.subr.mxu0 0.0
        %1791 = vmatpush1.msra.mxu0 0.0
        %1792 = vmatprep.subr.mxu0 0.0
        %1793 = vmatpush1.msra.mxu0 0.0
        %1794 = vmatprep.subr.mxu0 0.0
        %1795 = vmatpush1.msra.mxu0 0.0
        %1796 = vmatprep.subr.mxu0 0.0
        %1797 = vmatpush1.msra.mxu0 0.0
        %1798 = vmatprep.subr.mxu0 0.0
        %1799 = vmatpush1.msra.mxu0 0.0
        %1800 = vmatprep.subr.mxu0 0.0
        %1801 = vmatpush1.msra.mxu0 0.0
        %1802 = vmatprep.subr.mxu0 0.0
        %1803 = vmatpush1.msra.mxu0 0.0
        %1804 = vmatprep.subr.mxu0 0.0
        %1805 = vmatpush1.msra.mxu0 0.0
        %1806 = vmatprep.subr.mxu0 0.0
        %1807 = vmatpush1.msra.mxu0 0.0
        %1808 = vmatprep.subr.mxu0 0.0
        %1809 = vmatpush1.msra.mxu0 0.0
        %1810 = vmatprep.subr.mxu0 0.0
        %v1811 = vand.u32 %v997, 4294901760
        %1812 = vmatpush1.msra.mxu0 %v1811
        %1813 = vmatprep.subr.mxu0 0.0
        %v1814 = vand.u32 %v996, 4294901760
        %1815 = vmatpush1.msra.mxu0 %v1814
        %1816 = vmatprep.subr.mxu0 0.0
        %v1817 = vand.u32 %v995, 4294901760
        %1818 = vmatpush1.msra.mxu0 %v1817
        %1819 = vmatprep.subr.mxu0 0.0
        %v1820 = vand.u32 %v994, 4294901760
        %1821 = vmatpush1.msra.mxu0 %v1820
        %1822 = vmatprep.subr.mxu0 0.0
        %1823 = vmatpush2.msra.mxu0 0.0
        %1824 = vmatprep.subr.mxu0 0.0
        %1825 = vmatpush2.msra.mxu0 0.0
        %1826 = vmatprep.subr.mxu0 0.0
        %1827 = vmatpush2.msra.mxu0 0.0
        %1828 = vmatprep.subr.mxu0 0.0
        %1829 = vmatpush2.msra.mxu0 0.0
        %1830 = vmatprep.subr.mxu0 0.0
        %1831 = vmatpush2.msra.mxu0 0.0
        %1832 = vmatprep.subr.mxu0 0.0
        %1833 = vmatpush2.msra.mxu0 0.0
        %1834 = vmatprep.subr.mxu0 0.0
        %1835 = vmatpush2.msra.mxu0 0.0
        %1836 = vmatprep.subr.mxu0 0.0
        %1837 = vmatpush2.msra.mxu0 0.0
        %1838 = vmatprep.subr.mxu0 0.0
        %1839 = vmatpush2.msra.mxu0 0.0
        %1840 = vmatprep.subr.mxu0 0.0
        %1841 = vmatpush2.msra.mxu0 0.0
        %1842 = vmatprep.subr.mxu0 0.0
        %1843 = vmatpush2.msra.mxu0 0.0
        %1844 = vmatprep.subr.mxu0 0.0
        %1845 = vmatpush2.msra.mxu0 0.0
        %1846 = vmatprep.subr.mxu0 0.0
        %1847 = vmatpush2.msra.mxu0 0.0
        %1848 = vmatprep.subr.mxu0 0.0
        %1849 = vmatpush2.msra.mxu0 0.0
        %1850 = vmatprep.subr.mxu0 0.0
        %1851 = vmatpush2.msra.mxu0 0.0
        %1852 = vmatprep.subr.mxu0 0.0
        %1853 = vmatpush2.msra.mxu0 0.0
        %1854 = vmatprep.mubr.f32.mxu0 0.0
        %v1855 = vand.u32 %v1778, 4294901760
        %v1856 = vsub.f32 %v1778, %v1855
        %v1857 = vand.u32 %v1856, 4294901760
        %v1858 = vsub.f32 %v1856, %v1857
        %v1859 = vand.u32 %v1858, 4294901760
        %1860 = vmatmul.mubr.f32.gmra.mxu0 %v1859
        %v1861 = vpop.f32.mrf.mxu0
        %v1862 = vadd.f32 0.0, %v1861
        %v1863 = vpop.f32.mrf.mxu0
        %1864 = vmatprep.mubr.f32.mxu0 0.0
        %v1865 = vand.u32 %v1780, 4294901760
        %v1866 = vsub.f32 %v1780, %v1865
        %v1867 = vand.u32 %v1866, 4294901760
        %v1868 = vsub.f32 %v1866, %v1867
        %v1869 = vand.u32 %v1868, 4294901760
        %1870 = vmatmul.mubr.f32.gmra.mxu0 %v1869
        %v1871 = vpop.f32.mrf.mxu0
        %v1872 = vadd.f32 0.0, %v1871
        %v1873 = vpop.f32.mrf.mxu0
        %1874 = vmatprep.mubr.f32.mxu0 0.0
        %v1875 = vand.u32 %v1782, 4294901760
        %v1876 = vsub.f32 %v1782, %v1875
        %v1877 = vand.u32 %v1876, 4294901760
        %v1878 = vsub.f32 %v1876, %v1877
        %v1879 = vand.u32 %v1878, 4294901760
        %1880 = vmatmul.mubr.f32.gmra.mxu0 %v1879
        %v1881 = vpop.f32.mrf.mxu0
        %v1882 = vadd.f32 0.0, %v1881
        %v1883 = vpop.f32.mrf.mxu0
        %1884 = vmatprep.mubr.f32.mxu0 0.0
        %v1885 = vand.u32 %v1784, 4294901760
        %v1886 = vsub.f32 %v1784, %v1885
        %v1887 = vand.u32 %v1886, 4294901760
        %v1888 = vsub.f32 %v1886, %v1887
        %v1889 = vand.u32 %v1888, 4294901760
        %1890 = vmatmul.mubr.f32.gmra.mxu0 %v1889
        %v1891 = vpop.f32.mrf.mxu0
        %v1892 = vadd.f32 0.0, %v1891
        %v1893 = vpop.f32.mrf.mxu0
        %1894 = vdwg.mxu0
        %1895 = vmatprep.subr.mxu0 0.0
        %1896 = vmatpush1.msra.mxu0 0.0
        %1897 = vmatprep.subr.mxu0 0.0
        %1898 = vmatpush1.msra.mxu0 0.0
        %1899 = vmatprep.subr.mxu0 0.0
        %1900 = vmatpush1.msra.mxu0 0.0
        %1901 = vmatprep.subr.mxu0 0.0
        %1902 = vmatpush1.msra.mxu0 0.0
        %1903 = vmatprep.subr.mxu0 0.0
        %1904 = vmatpush1.msra.mxu0 0.0
        %1905 = vmatprep.subr.mxu0 0.0
        %1906 = vmatpush1.msra.mxu0 0.0
        %1907 = vmatprep.subr.mxu0 0.0
        %1908 = vmatpush1.msra.mxu0 0.0
        %1909 = vmatprep.subr.mxu0 0.0
        %1910 = vmatpush1.msra.mxu0 0.0
        %1911 = vmatprep.subr.mxu0 0.0
        %1912 = vmatpush1.msra.mxu0 0.0
        %1913 = vmatprep.subr.mxu0 0.0
        %1914 = vmatpush1.msra.mxu0 0.0
        %1915 = vmatprep.subr.mxu0 0.0
        %1916 = vmatpush1.msra.mxu0 0.0
        %1917 = vmatprep.subr.mxu0 0.0
        %1918 = vmatpush1.msra.mxu0 0.0
        %1919 = vmatprep.subr.mxu0 0.0
        %v1920 = vand.u32 %v997, 4294901760
        %v1921 = vsub.f32 %v997, %v1920
        %v1922 = vand.u32 %v1921, 4294901760
        %v1923 = vsub.f32 %v1921, %v1922
        %v1924 = vand.u32 %v1923, 4294901760
        %1925 = vmatpush1.msra.mxu0 %v1924
        %1926 = vmatprep.subr.mxu0 0.0
        %v1927 = vand.u32 %v996, 4294901760
        %v1928 = vsub.f32 %v996, %v1927
        %v1929 = vand.u32 %v1928, 4294901760
        %v1930 = vsub.f32 %v1928, %v1929
        %v1931 = vand.u32 %v1930, 4294901760
        %1932 = vmatpush1.msra.mxu0 %v1931
        %1933 = vmatprep.subr.mxu0 0.0
        %v1934 = vand.u32 %v995, 4294901760
        %v1935 = vsub.f32 %v995, %v1934
        %v1936 = vand.u32 %v1935, 4294901760
        %v1937 = vsub.f32 %v1935, %v1936
        %v1938 = vand.u32 %v1937, 4294901760
        %1939 = vmatpush1.msra.mxu0 %v1938
        %1940 = vmatprep.subr.mxu0 0.0
        %v1941 = vand.u32 %v994, 4294901760
        %v1942 = vsub.f32 %v994, %v1941
        %v1943 = vand.u32 %v1942, 4294901760
        %v1944 = vsub.f32 %v1942, %v1943
        %v1945 = vand.u32 %v1944, 4294901760
        %1946 = vmatpush1.msra.mxu0 %v1945
        %1947 = vmatprep.subr.mxu0 0.0
        %1948 = vmatpush2.msra.mxu0 0.0
        %1949 = vmatprep.subr.mxu0 0.0
        %1950 = vmatpush2.msra.mxu0 0.0
        %1951 = vmatprep.subr.mxu0 0.0
        %1952 = vmatpush2.msra.mxu0 0.0
        %1953 = vmatprep.subr.mxu0 0.0
        %1954 = vmatpush2.msra.mxu0 0.0
        %1955 = vmatprep.subr.mxu0 0.0
        %1956 = vmatpush2.msra.mxu0 0.0
        %1957 = vmatprep.subr.mxu0 0.0
        %1958 = vmatpush2.msra.mxu0 0.0
        %1959 = vmatprep.subr.mxu0 0.0
        %1960 = vmatpush2.msra.mxu0 0.0
        %1961 = vmatprep.subr.mxu0 0.0
        %1962 = vmatpush2.msra.mxu0 0.0
        %1963 = vmatprep.subr.mxu0 0.0
        %1964 = vmatpush2.msra.mxu0 0.0
        %1965 = vmatprep.subr.mxu0 0.0
        %1966 = vmatpush2.msra.mxu0 0.0
        %1967 = vmatprep.subr.mxu0 0.0
        %1968 = vmatpush2.msra.mxu0 0.0
        %1969 = vmatprep.subr.mxu0 0.0
        %1970 = vmatpush2.msra.mxu0 0.0
        %1971 = vmatprep.subr.mxu0 0.0
        %1972 = vmatpush2.msra.mxu0 0.0
        %1973 = vmatprep.subr.mxu0 0.0
        %1974 = vmatpush2.msra.mxu0 0.0
        %1975 = vmatprep.subr.mxu0 0.0
        %1976 = vmatpush2.msra.mxu0 0.0
        %1977 = vmatprep.subr.mxu0 0.0
        %1978 = vmatpush2.msra.mxu0 0.0
        %1979 = vmatprep.mubr.f32.mxu0 0.0
        %v1980 = vand.u32 %v1778, 4294901760
        %1981 = vmatmul.mubr.f32.gmra.mxu0 %v1980
        %v1982 = vpop.f32.mrf.mxu0
        %v1983 = vadd.f32 %v1862, %v1982
        %v1984 = vpop.f32.mrf.mxu0
        %1985 = vmatprep.mubr.f32.mxu0 0.0
        %v1986 = vand.u32 %v1780, 4294901760
        %1987 = vmatmul.mubr.f32.gmra.mxu0 %v1986
        %v1988 = vpop.f32.mrf.mxu0
        %v1989 = vadd.f32 %v1872, %v1988
        %v1990 = vpop.f32.mrf.mxu0
        %1991 = vmatprep.mubr.f32.mxu0 0.0
        %v1992 = vand.u32 %v1782, 4294901760
        %1993 = vmatmul.mubr.f32.gmra.mxu0 %v1992
        %v1994 = vpop.f32.mrf.mxu0
        %v1995 = vadd.f32 %v1882, %v1994
        %v1996 = vpop.f32.mrf.mxu0
        %1997 = vmatprep.mubr.f32.mxu0 0.0
        %v1998 = vand.u32 %v1784, 4294901760
        %1999 = vmatmul.mubr.f32.gmra.mxu0 %v1998
        %v2000 = vpop.f32.mrf.mxu0
        %v2001 = vadd.f32 %v1892, %v2000
        %v2002 = vpop.f32.mrf.mxu0
        %2003 = vdwg.mxu0
        %2004 = vmatprep.subr.mxu0 0.0
        %2005 = vmatpush1.msra.mxu0 0.0
        %2006 = vmatprep.subr.mxu0 0.0
        %2007 = vmatpush1.msra.mxu0 0.0
        %2008 = vmatprep.subr.mxu0 0.0
        %2009 = vmatpush1.msra.mxu0 0.0
        %2010 = vmatprep.subr.mxu0 0.0
        %2011 = vmatpush1.msra.mxu0 0.0
        %2012 = vmatprep.subr.mxu0 0.0
        %2013 = vmatpush1.msra.mxu0 0.0
        %2014 = vmatprep.subr.mxu0 0.0
        %2015 = vmatpush1.msra.mxu0 0.0
        %2016 = vmatprep.subr.mxu0 0.0
        %2017 = vmatpush1.msra.mxu0 0.0
        %2018 = vmatprep.subr.mxu0 0.0
        %2019 = vmatpush1.msra.mxu0 0.0
        %2020 = vmatprep.subr.mxu0 0.0
        %2021 = vmatpush1.msra.mxu0 0.0
        %2022 = vmatprep.subr.mxu0 0.0
        %2023 = vmatpush1.msra.mxu0 0.0
        %2024 = vmatprep.subr.mxu0 0.0
        %2025 = vmatpush1.msra.mxu0 0.0
        %2026 = vmatprep.subr.mxu0 0.0
        %2027 = vmatpush1.msra.mxu0 0.0
        %2028 = vmatprep.subr.mxu0 0.0
        %v2029 = vand.u32 %v997, 4294901760
        %v2030 = vsub.f32 %v997, %v2029
        %2031 = vmatpush1.msra.mxu0 %v2030
        %2032 = vmatprep.subr.mxu0 0.0
        %v2033 = vand.u32 %v996, 4294901760
        %v2034 = vsub.f32 %v996, %v2033
        %2035 = vmatpush1.msra.mxu0 %v2034
        %2036 = vmatprep.subr.mxu0 0.0
        %v2037 = vand.u32 %v995, 4294901760
        %v2038 = vsub.f32 %v995, %v2037
        %2039 = vmatpush1.msra.mxu0 %v2038
        %2040 = vmatprep.subr.mxu0 0.0
        %v2041 = vand.u32 %v994, 4294901760
        %v2042 = vsub.f32 %v994, %v2041
        %2043 = vmatpush1.msra.mxu0 %v2042
        %2044 = vmatprep.subr.mxu0 0.0
        %2045 = vmatpush2.msra.mxu0 0.0
        %2046 = vmatprep.subr.mxu0 0.0
        %2047 = vmatpush2.msra.mxu0 0.0
        %2048 = vmatprep.subr.mxu0 0.0
        %2049 = vmatpush2.msra.mxu0 0.0
        %2050 = vmatprep.subr.mxu0 0.0
        %2051 = vmatpush2.msra.mxu0 0.0
        %2052 = vmatprep.subr.mxu0 0.0
        %2053 = vmatpush2.msra.mxu0 0.0
        %2054 = vmatprep.subr.mxu0 0.0
        %2055 = vmatpush2.msra.mxu0 0.0
        %2056 = vmatprep.subr.mxu0 0.0
        %2057 = vmatpush2.msra.mxu0 0.0
        %2058 = vmatprep.subr.mxu0 0.0
        %2059 = vmatpush2.msra.mxu0 0.0
        %2060 = vmatprep.subr.mxu0 0.0
        %2061 = vmatpush2.msra.mxu0 0.0
        %2062 = vmatprep.subr.mxu0 0.0
        %2063 = vmatpush2.msra.mxu0 0.0
        %2064 = vmatprep.subr.mxu0 0.0
        %2065 = vmatpush2.msra.mxu0 0.0
        %2066 = vmatprep.subr.mxu0 0.0
        %2067 = vmatpush2.msra.mxu0 0.0
        %2068 = vmatprep.subr.mxu0 0.0
        %2069 = vmatpush2.msra.mxu0 0.0
        %2070 = vmatprep.subr.mxu0 0.0
        %2071 = vmatpush2.msra.mxu0 0.0
        %2072 = vmatprep.subr.mxu0 0.0
        %2073 = vmatpush2.msra.mxu0 0.0
        %2074 = vmatprep.subr.mxu0 0.0
        %2075 = vmatpush2.msra.mxu0 0.0
        %2076 = vmatprep.mubr.f32.mxu0 0.0
        %v2077 = vand.u32 %v1778, 4294901760
        %v2078 = vsub.f32 %v1778, %v2077
        %2079 = vmatmul.mubr.f32.gmra.mxu0 %v2078
        %v2080 = vpop.f32.mrf.mxu0
        %v2081 = vadd.f32 %v1983, %v2080
        %v2082 = vpop.f32.mrf.mxu0
        %2083 = vmatprep.mubr.f32.mxu0 0.0
        %v2084 = vand.u32 %v1780, 4294901760
        %v2085 = vsub.f32 %v1780, %v2084
        %2086 = vmatmul.mubr.f32.gmra.mxu0 %v2085
        %v2087 = vpop.f32.mrf.mxu0
        %v2088 = vadd.f32 %v1989, %v2087
        %v2089 = vpop.f32.mrf.mxu0
        %2090 = vmatprep.mubr.f32.mxu0 0.0
        %v2091 = vand.u32 %v1782, 4294901760
        %v2092 = vsub.f32 %v1782, %v2091
        %2093 = vmatmul.mubr.f32.gmra.mxu0 %v2092
        %v2094 = vpop.f32.mrf.mxu0
        %v2095 = vadd.f32 %v1995, %v2094
        %v2096 = vpop.f32.mrf.mxu0
        %2097 = vmatprep.mubr.f32.mxu0 0.0
        %v2098 = vand.u32 %v1784, 4294901760
        %v2099 = vsub.f32 %v1784, %v2098
        %2100 = vmatmul.mubr.f32.gmra.mxu0 %v2099
        %v2101 = vpop.f32.mrf.mxu0
        %v2102 = vadd.f32 %v2001, %v2101
        %v2103 = vpop.f32.mrf.mxu0
        %2104 = vdwg.mxu0
        %2105 = vmatprep.subr.mxu0 0.0
        %2106 = vmatpush1.msra.mxu0 0.0
        %2107 = vmatprep.subr.mxu0 0.0
        %2108 = vmatpush1.msra.mxu0 0.0
        %2109 = vmatprep.subr.mxu0 0.0
        %2110 = vmatpush1.msra.mxu0 0.0
        %2111 = vmatprep.subr.mxu0 0.0
        %2112 = vmatpush1.msra.mxu0 0.0
        %2113 = vmatprep.subr.mxu0 0.0
        %2114 = vmatpush1.msra.mxu0 0.0
        %2115 = vmatprep.subr.mxu0 0.0
        %2116 = vmatpush1.msra.mxu0 0.0
        %2117 = vmatprep.subr.mxu0 0.0
        %2118 = vmatpush1.msra.mxu0 0.0
        %2119 = vmatprep.subr.mxu0 0.0
        %2120 = vmatpush1.msra.mxu0 0.0
        %2121 = vmatprep.subr.mxu0 0.0
        %2122 = vmatpush1.msra.mxu0 0.0
        %2123 = vmatprep.subr.mxu0 0.0
        %2124 = vmatpush1.msra.mxu0 0.0
        %2125 = vmatprep.subr.mxu0 0.0
        %2126 = vmatpush1.msra.mxu0 0.0
        %2127 = vmatprep.subr.mxu0 0.0
        %2128 = vmatpush1.msra.mxu0 0.0
        %2129 = vmatprep.subr.mxu0 0.0
        %v2130 = vand.u32 %v997, 4294901760
        %2131 = vmatpush1.msra.mxu0 %v2130
        %2132 = vmatprep.subr.mxu0 0.0
        %v2133 = vand.u32 %v996, 4294901760
        %2134 = vmatpush1.msra.mxu0 %v2133
        %2135 = vmatprep.subr.mxu0 0.0
        %v2136 = vand.u32 %v995, 4294901760
        %2137 = vmatpush1.msra.mxu0 %v2136
        %2138 = vmatprep.subr.mxu0 0.0
        %v2139 = vand.u32 %v994, 4294901760
        %2140 = vmatpush1.msra.mxu0 %v2139
        %2141 = vmatprep.subr.mxu0 0.0
        %2142 = vmatpush2.msra.mxu0 0.0
        %2143 = vmatprep.subr.mxu0 0.0
        %2144 = vmatpush2.msra.mxu0 0.0
        %2145 = vmatprep.subr.mxu0 0.0
        %2146 = vmatpush2.msra.mxu0 0.0
        %2147 = vmatprep.subr.mxu0 0.0
        %2148 = vmatpush2.msra.mxu0 0.0
        %2149 = vmatprep.subr.mxu0 0.0
        %2150 = vmatpush2.msra.mxu0 0.0
        %2151 = vmatprep.subr.mxu0 0.0
        %2152 = vmatpush2.msra.mxu0 0.0
        %2153 = vmatprep.subr.mxu0 0.0
        %2154 = vmatpush2.msra.mxu0 0.0
        %2155 = vmatprep.subr.mxu0 0.0
        %2156 = vmatpush2.msra.mxu0 0.0
        %2157 = vmatprep.subr.mxu0 0.0
        %2158 = vmatpush2.msra.mxu0 0.0
        %2159 = vmatprep.subr.mxu0 0.0
        %2160 = vmatpush2.msra.mxu0 0.0
        %2161 = vmatprep.subr.mxu0 0.0
        %2162 = vmatpush2.msra.mxu0 0.0
        %2163 = vmatprep.subr.mxu0 0.0
        %2164 = vmatpush2.msra.mxu0 0.0
        %2165 = vmatprep.subr.mxu0 0.0
        %2166 = vmatpush2.msra.mxu0 0.0
        %2167 = vmatprep.subr.mxu0 0.0
        %2168 = vmatpush2.msra.mxu0 0.0
        %2169 = vmatprep.subr.mxu0 0.0
        %2170 = vmatpush2.msra.mxu0 0.0
        %2171 = vmatprep.subr.mxu0 0.0
        %2172 = vmatpush2.msra.mxu0 0.0
        %2173 = vmatprep.mubr.f32.mxu0 0.0
        %v2174 = vand.u32 %v1778, 4294901760
        %v2175 = vsub.f32 %v1778, %v2174
        %v2176 = vand.u32 %v2175, 4294901760
        %2177 = vmatmul.mubr.f32.gmra.mxu0 %v2176
        %v2178 = vpop.f32.mrf.mxu0
        %v2179 = vadd.f32 %v2081, %v2178
        %v2180 = vpop.f32.mrf.mxu0
        %2181 = vmatprep.mubr.f32.mxu0 0.0
        %v2182 = vand.u32 %v1780, 4294901760
        %v2183 = vsub.f32 %v1780, %v2182
        %v2184 = vand.u32 %v2183, 4294901760
        %2185 = vmatmul.mubr.f32.gmra.mxu0 %v2184
        %v2186 = vpop.f32.mrf.mxu0
        %v2187 = vadd.f32 %v2088, %v2186
        %v2188 = vpop.f32.mrf.mxu0
        %2189 = vmatprep.mubr.f32.mxu0 0.0
        %v2190 = vand.u32 %v1782, 4294901760
        %v2191 = vsub.f32 %v1782, %v2190
        %v2192 = vand.u32 %v2191, 4294901760
        %2193 = vmatmul.mubr.f32.gmra.mxu0 %v2192
        %v2194 = vpop.f32.mrf.mxu0
        %v2195 = vadd.f32 %v2095, %v2194
        %v2196 = vpop.f32.mrf.mxu0
        %2197 = vmatprep.mubr.f32.mxu0 0.0
        %v2198 = vand.u32 %v1784, 4294901760
        %v2199 = vsub.f32 %v1784, %v2198
        %v2200 = vand.u32 %v2199, 4294901760
        %2201 = vmatmul.mubr.f32.gmra.mxu0 %v2200
        %v2202 = vpop.f32.mrf.mxu0
        %v2203 = vadd.f32 %v2102, %v2202
        %v2204 = vpop.f32.mrf.mxu0
        %2205 = vdwg.mxu0
        %2206 = vmatprep.subr.mxu0 0.0
        %2207 = vmatpush1.msra.mxu0 0.0
        %2208 = vmatprep.subr.mxu0 0.0
        %2209 = vmatpush1.msra.mxu0 0.0
        %2210 = vmatprep.subr.mxu0 0.0
        %2211 = vmatpush1.msra.mxu0 0.0
        %2212 = vmatprep.subr.mxu0 0.0
        %2213 = vmatpush1.msra.mxu0 0.0
        %2214 = vmatprep.subr.mxu0 0.0
        %2215 = vmatpush1.msra.mxu0 0.0
        %2216 = vmatprep.subr.mxu0 0.0
        %2217 = vmatpush1.msra.mxu0 0.0
        %2218 = vmatprep.subr.mxu0 0.0
        %2219 = vmatpush1.msra.mxu0 0.0
        %2220 = vmatprep.subr.mxu0 0.0
        %2221 = vmatpush1.msra.mxu0 0.0
        %2222 = vmatprep.subr.mxu0 0.0
        %2223 = vmatpush1.msra.mxu0 0.0
        %2224 = vmatprep.subr.mxu0 0.0
        %2225 = vmatpush1.msra.mxu0 0.0
        %2226 = vmatprep.subr.mxu0 0.0
        %2227 = vmatpush1.msra.mxu0 0.0
        %2228 = vmatprep.subr.mxu0 0.0
        %2229 = vmatpush1.msra.mxu0 0.0
        %2230 = vmatprep.subr.mxu0 0.0
        %v2231 = vand.u32 %v997, 4294901760
        %v2232 = vsub.f32 %v997, %v2231
        %v2233 = vand.u32 %v2232, 4294901760
        %2234 = vmatpush1.msra.mxu0 %v2233
        %2235 = vmatprep.subr.mxu0 0.0
        %v2236 = vand.u32 %v996, 4294901760
        %v2237 = vsub.f32 %v996, %v2236
        %v2238 = vand.u32 %v2237, 4294901760
        %2239 = vmatpush1.msra.mxu0 %v2238
        %2240 = vmatprep.subr.mxu0 0.0
        %v2241 = vand.u32 %v995, 4294901760
        %v2242 = vsub.f32 %v995, %v2241
        %v2243 = vand.u32 %v2242, 4294901760
        %2244 = vmatpush1.msra.mxu0 %v2243
        %2245 = vmatprep.subr.mxu0 0.0
        %v2246 = vand.u32 %v994, 4294901760
        %v2247 = vsub.f32 %v994, %v2246
        %v2248 = vand.u32 %v2247, 4294901760
        %2249 = vmatpush1.msra.mxu0 %v2248
        %2250 = vmatprep.subr.mxu0 0.0
        %2251 = vmatpush2.msra.mxu0 0.0
        %2252 = vmatprep.subr.mxu0 0.0
        %2253 = vmatpush2.msra.mxu0 0.0
        %2254 = vmatprep.subr.mxu0 0.0
        %2255 = vmatpush2.msra.mxu0 0.0
        %2256 = vmatprep.subr.mxu0 0.0
        %2257 = vmatpush2.msra.mxu0 0.0
        %2258 = vmatprep.subr.mxu0 0.0
        %2259 = vmatpush2.msra.mxu0 0.0
        %2260 = vmatprep.subr.mxu0 0.0
        %2261 = vmatpush2.msra.mxu0 0.0
        %2262 = vmatprep.subr.mxu0 0.0
        %2263 = vmatpush2.msra.mxu0 0.0
        %2264 = vmatprep.subr.mxu0 0.0
        %2265 = vmatpush2.msra.mxu0 0.0
        %2266 = vmatprep.subr.mxu0 0.0
        %2267 = vmatpush2.msra.mxu0 0.0
        %2268 = vmatprep.subr.mxu0 0.0
        %2269 = vmatpush2.msra.mxu0 0.0
        %2270 = vmatprep.subr.mxu0 0.0
        %2271 = vmatpush2.msra.mxu0 0.0
        %2272 = vmatprep.subr.mxu0 0.0
        %2273 = vmatpush2.msra.mxu0 0.0
        %2274 = vmatprep.subr.mxu0 0.0
        %2275 = vmatpush2.msra.mxu0 0.0
        %2276 = vmatprep.subr.mxu0 0.0
        %2277 = vmatpush2.msra.mxu0 0.0
        %2278 = vmatprep.subr.mxu0 0.0
        %2279 = vmatpush2.msra.mxu0 0.0
        %2280 = vmatprep.subr.mxu0 0.0
        %2281 = vmatpush2.msra.mxu0 0.0
        %2282 = vmatprep.mubr.f32.mxu0 0.0
        %v2283 = vand.u32 %v1778, 4294901760
        %2284 = vmatmul.mubr.f32.gmra.mxu0 %v2283
        %v2285 = vpop.f32.mrf.mxu0
        %v2286 = vadd.f32 %v2179, %v2285
        %v2287 = vpop.f32.mrf.mxu0
        %2288 = vmatprep.mubr.f32.mxu0 0.0
        %v2289 = vand.u32 %v1780, 4294901760
        %2290 = vmatmul.mubr.f32.gmra.mxu0 %v2289
        %v2291 = vpop.f32.mrf.mxu0
        %v2292 = vadd.f32 %v2187, %v2291
        %v2293 = vpop.f32.mrf.mxu0
        %2294 = vmatprep.mubr.f32.mxu0 0.0
        %v2295 = vand.u32 %v1782, 4294901760
        %2296 = vmatmul.mubr.f32.gmra.mxu0 %v2295
        %v2297 = vpop.f32.mrf.mxu0
        %v2298 = vadd.f32 %v2195, %v2297
        %v2299 = vpop.f32.mrf.mxu0
        %2300 = vmatprep.mubr.f32.mxu0 0.0
        %v2301 = vand.u32 %v1784, 4294901760
        %2302 = vmatmul.mubr.f32.gmra.mxu0 %v2301
        %v2303 = vpop.f32.mrf.mxu0
        %v2304 = vadd.f32 %v2203, %v2303
        %v2305 = vpop.f32.mrf.mxu0
        %2306 = vdwg.mxu0
        %2307 = vmatprep.subr.mxu0 0.0
        %2308 = vmatpush1.msra.mxu0 0.0
        %2309 = vmatprep.subr.mxu0 0.0
        %2310 = vmatpush1.msra.mxu0 0.0
        %2311 = vmatprep.subr.mxu0 0.0
        %2312 = vmatpush1.msra.mxu0 0.0
        %2313 = vmatprep.subr.mxu0 0.0
        %2314 = vmatpush1.msra.mxu0 0.0
        %2315 = vmatprep.subr.mxu0 0.0
        %2316 = vmatpush1.msra.mxu0 0.0
        %2317 = vmatprep.subr.mxu0 0.0
        %2318 = vmatpush1.msra.mxu0 0.0
        %2319 = vmatprep.subr.mxu0 0.0
        %2320 = vmatpush1.msra.mxu0 0.0
        %2321 = vmatprep.subr.mxu0 0.0
        %2322 = vmatpush1.msra.mxu0 0.0
        %2323 = vmatprep.subr.mxu0 0.0
        %2324 = vmatpush1.msra.mxu0 0.0
        %2325 = vmatprep.subr.mxu0 0.0
        %2326 = vmatpush1.msra.mxu0 0.0
        %2327 = vmatprep.subr.mxu0 0.0
        %2328 = vmatpush1.msra.mxu0 0.0
        %2329 = vmatprep.subr.mxu0 0.0
        %2330 = vmatpush1.msra.mxu0 0.0
        %2331 = vmatprep.subr.mxu0 0.0
        %v2332 = vand.u32 %v997, 4294901760
        %2333 = vmatpush1.msra.mxu0 %v2332
        %2334 = vmatprep.subr.mxu0 0.0
        %v2335 = vand.u32 %v996, 4294901760
        %2336 = vmatpush1.msra.mxu0 %v2335
        %2337 = vmatprep.subr.mxu0 0.0
        %v2338 = vand.u32 %v995, 4294901760
        %2339 = vmatpush1.msra.mxu0 %v2338
        %2340 = vmatprep.subr.mxu0 0.0
        %v2341 = vand.u32 %v994, 4294901760
        %2342 = vmatpush1.msra.mxu0 %v2341
        %2343 = vmatprep.subr.mxu0 0.0
        %2344 = vmatpush2.msra.mxu0 0.0
        %2345 = vmatprep.subr.mxu0 0.0
        %2346 = vmatpush2.msra.mxu0 0.0
        %2347 = vmatprep.subr.mxu0 0.0
        %2348 = vmatpush2.msra.mxu0 0.0
        %2349 = vmatprep.subr.mxu0 0.0
        %2350 = vmatpush2.msra.mxu0 0.0
        %2351 = vmatprep.subr.mxu0 0.0
        %2352 = vmatpush2.msra.mxu0 0.0
        %2353 = vmatprep.subr.mxu0 0.0
        %2354 = vmatpush2.msra.mxu0 0.0
        %2355 = vmatprep.subr.mxu0 0.0
        %2356 = vmatpush2.msra.mxu0 0.0
        %2357 = vmatprep.subr.mxu0 0.0
        %2358 = vmatpush2.msra.mxu0 0.0
        %2359 = vmatprep.subr.mxu0 0.0
        %2360 = vmatpush2.msra.mxu0 0.0
        %2361 = vmatprep.subr.mxu0 0.0
        %2362 = vmatpush2.msra.mxu0 0.0
        %2363 = vmatprep.subr.mxu0 0.0
        %2364 = vmatpush2.msra.mxu0 0.0
        %2365 = vmatprep.subr.mxu0 0.0
        %2366 = vmatpush2.msra.mxu0 0.0
        %2367 = vmatprep.subr.mxu0 0.0
        %2368 = vmatpush2.msra.mxu0 0.0
        %2369 = vmatprep.subr.mxu0 0.0
        %2370 = vmatpush2.msra.mxu0 0.0
        %2371 = vmatprep.subr.mxu0 0.0
        %2372 = vmatpush2.msra.mxu0 0.0
        %2373 = vmatprep.subr.mxu0 0.0
        %2374 = vmatpush2.msra.mxu0 0.0
        %2375 = vmatprep.mubr.f32.mxu0 0.0
        %v2376 = vand.u32 %v1778, 4294901760
        %2377 = vmatmul.mubr.f32.gmra.mxu0 %v2376
        %v2378 = vpop.f32.mrf.mxu0
        %v2379 = vadd.f32 %v2286, %v2378
        %v2380 = vpop.f32.mrf.mxu0
        %2381 = vmatprep.mubr.f32.mxu0 0.0
        %v2382 = vand.u32 %v1780, 4294901760
        %2383 = vmatmul.mubr.f32.gmra.mxu0 %v2382
        %v2384 = vpop.f32.mrf.mxu0
        %v2385 = vadd.f32 %v2292, %v2384
        %v2386 = vpop.f32.mrf.mxu0
        %2387 = vmatprep.mubr.f32.mxu0 0.0
        %v2388 = vand.u32 %v1782, 4294901760
        %2389 = vmatmul.mubr.f32.gmra.mxu0 %v2388
        %v2390 = vpop.f32.mrf.mxu0
        %v2391 = vadd.f32 %v2298, %v2390
        %v2392 = vpop.f32.mrf.mxu0
        %2393 = vmatprep.mubr.f32.mxu0 0.0
        %v2394 = vand.u32 %v1784, 4294901760
        %2395 = vmatmul.mubr.f32.gmra.mxu0 %v2394
        %v2396 = vpop.f32.mrf.mxu0
        %v2397 = vadd.f32 %v2304, %v2396
        %v2398 = vpop.f32.mrf.mxu0
        %2399 = vdwg.mxu0
        %v2400 = vmax.f32 %v2379, 0.0
        %v2401 = vmax.f32 %v2385, 0.0
        %v2402 = vmax.f32 %v2391, 0.0
        %v2403 = vmax.f32 %v2397, 0.0
        %v2404 = vld [vmem:[#allocation5] sm:$0x3]
        %vm2405 = vcmask 15360
        %v2407 = vsel %vm2405, %v2400, 0
        %v2410 = vsel %vm2405, %v2401, 0
        %v2413 = vsel %vm2405, %v2402, 0
        %v2416 = vsel %vm2405, %v2403, 0
        %vm2418 = vcmask 1041408
        %v2420 = vsel %vm2418, %v2404, 0
        %2422 = vmatprep.subr.mxu0 0.0
        %2423 = vmatpush1.msra.mxu0 0.0
        %2424 = vmatprep.subr.mxu0 0.0
        %2425 = vmatpush1.msra.mxu0 0.0
        %2426 = vmatprep.subr.mxu0 0.0
        %2427 = vmatpush1.msra.mxu0 0.0
        %2428 = vmatprep.subr.mxu0 0.0
        %2429 = vmatpush1.msra.mxu0 0.0
        %2430 = vmatprep.subr.mxu0 0.0
        %2431 = vmatpush1.msra.mxu0 0.0
        %2432 = vmatprep.subr.mxu0 0.0
        %2433 = vmatpush1.msra.mxu0 0.0
        %2434 = vmatprep.subr.mxu0 0.0
        %2435 = vmatpush1.msra.mxu0 0.0
        %2436 = vmatprep.subr.mxu0 0.0
        %2437 = vmatpush1.msra.mxu0 0.0
        %2438 = vmatprep.subr.mxu0 0.0
        %2439 = vmatpush1.msra.mxu0 0.0
        %2440 = vmatprep.subr.mxu0 0.0
        %2441 = vmatpush1.msra.mxu0 0.0
        %2442 = vmatprep.subr.mxu0 0.0
        %2443 = vmatpush1.msra.mxu0 0.0
        %2444 = vmatprep.subr.mxu0 0.0
        %2445 = vmatpush1.msra.mxu0 0.0
        %2446 = vmatprep.subr.mxu0 0.0
        %2447 = vmatpush1.msra.mxu0 0.0
        %2448 = vmatprep.subr.mxu0 0.0
        %2449 = vmatpush1.msra.mxu0 0.0
        %2450 = vmatprep.subr.mxu0 0.0
        %2451 = vmatpush1.msra.mxu0 0.0
        %2452 = vmatprep.subr.mxu0 0.0
        %v2453 = vand.u32 %v2420, 4294901760
        %2454 = vmatpush1.msra.mxu0 %v2453
        %2455 = vmatprep.subr.mxu0 0.0
        %2456 = vmatpush2.msra.mxu0 0.0
        %2457 = vmatprep.subr.mxu0 0.0
        %2458 = vmatpush2.msra.mxu0 0.0
        %2459 = vmatprep.subr.mxu0 0.0
        %2460 = vmatpush2.msra.mxu0 0.0
        %2461 = vmatprep.subr.mxu0 0.0
        %2462 = vmatpush2.msra.mxu0 0.0
        %2463 = vmatprep.subr.mxu0 0.0
        %2464 = vmatpush2.msra.mxu0 0.0
        %2465 = vmatprep.subr.mxu0 0.0
        %2466 = vmatpush2.msra.mxu0 0.0
        %2467 = vmatprep.subr.mxu0 0.0
        %2468 = vmatpush2.msra.mxu0 0.0
        %2469 = vmatprep.subr.mxu0 0.0
        %2470 = vmatpush2.msra.mxu0 0.0
        %2471 = vmatprep.subr.mxu0 0.0
        %2472 = vmatpush2.msra.mxu0 0.0
        %2473 = vmatprep.subr.mxu0 0.0
        %2474 = vmatpush2.msra.mxu0 0.0
        %2475 = vmatprep.subr.mxu0 0.0
        %2476 = vmatpush2.msra.mxu0 0.0
        %2477 = vmatprep.subr.mxu0 0.0
        %2478 = vmatpush2.msra.mxu0 0.0
        %2479 = vmatprep.subr.mxu0 0.0
        %2480 = vmatpush2.msra.mxu0 0.0
        %2481 = vmatprep.subr.mxu0 0.0
        %2482 = vmatpush2.msra.mxu0 0.0
        %2483 = vmatprep.subr.mxu0 0.0
        %2484 = vmatpush2.msra.mxu0 0.0
        %2485 = vmatprep.subr.mxu0 0.0
        %2486 = vmatpush2.msra.mxu0 0.0
        %2487 = vmatprep.mubr.f32.mxu0 0.0
        %v2488 = vand.u32 %v2407, 4294901760
        %v2489 = vsub.f32 %v2407, %v2488
        %v2490 = vand.u32 %v2489, 4294901760
        %v2491 = vsub.f32 %v2489, %v2490
        %v2492 = vand.u32 %v2491, 4294901760
        %2493 = vmatmul.mubr.f32.gmra.mxu0 %v2492
        %v2494 = vpop.f32.mrf.mxu0
        %v2495 = vadd.f32 0.0, %v2494
        %v2496 = vpop.f32.mrf.mxu0
        %2497 = vmatprep.mubr.f32.mxu0 0.0
        %v2498 = vand.u32 %v2410, 4294901760
        %v2499 = vsub.f32 %v2410, %v2498
        %v2500 = vand.u32 %v2499, 4294901760
        %v2501 = vsub.f32 %v2499, %v2500
        %v2502 = vand.u32 %v2501, 4294901760
        %2503 = vmatmul.mubr.f32.gmra.mxu0 %v2502
        %v2504 = vpop.f32.mrf.mxu0
        %v2505 = vadd.f32 0.0, %v2504
        %v2506 = vpop.f32.mrf.mxu0
        %2507 = vmatprep.mubr.f32.mxu0 0.0
        %v2508 = vand.u32 %v2413, 4294901760
        %v2509 = vsub.f32 %v2413, %v2508
        %v2510 = vand.u32 %v2509, 4294901760
        %v2511 = vsub.f32 %v2509, %v2510
        %v2512 = vand.u32 %v2511, 4294901760
        %2513 = vmatmul.mubr.f32.gmra.mxu0 %v2512
        %v2514 = vpop.f32.mrf.mxu0
        %v2515 = vadd.f32 0.0, %v2514
        %v2516 = vpop.f32.mrf.mxu0
        %2517 = vmatprep.mubr.f32.mxu0 0.0
        %v2518 = vand.u32 %v2416, 4294901760
        %v2519 = vsub.f32 %v2416, %v2518
        %v2520 = vand.u32 %v2519, 4294901760
        %v2521 = vsub.f32 %v2519, %v2520
        %v2522 = vand.u32 %v2521, 4294901760
        %2523 = vmatmul.mubr.f32.gmra.mxu0 %v2522
        %v2524 = vpop.f32.mrf.mxu0
        %v2525 = vadd.f32 0.0, %v2524
        %v2526 = vpop.f32.mrf.mxu0
        %2527 = vdwg.mxu0
        %2528 = vmatprep.subr.mxu0 0.0
        %2529 = vmatpush1.msra.mxu0 0.0
        %2530 = vmatprep.subr.mxu0 0.0
        %2531 = vmatpush1.msra.mxu0 0.0
        %2532 = vmatprep.subr.mxu0 0.0
        %2533 = vmatpush1.msra.mxu0 0.0
        %2534 = vmatprep.subr.mxu0 0.0
        %2535 = vmatpush1.msra.mxu0 0.0
        %2536 = vmatprep.subr.mxu0 0.0
        %2537 = vmatpush1.msra.mxu0 0.0
        %2538 = vmatprep.subr.mxu0 0.0
        %2539 = vmatpush1.msra.mxu0 0.0
        %2540 = vmatprep.subr.mxu0 0.0
        %2541 = vmatpush1.msra.mxu0 0.0
        %2542 = vmatprep.subr.mxu0 0.0
        %2543 = vmatpush1.msra.mxu0 0.0
        %2544 = vmatprep.subr.mxu0 0.0
        %2545 = vmatpush1.msra.mxu0 0.0
        %2546 = vmatprep.subr.mxu0 0.0
        %2547 = vmatpush1.msra.mxu0 0.0
        %2548 = vmatprep.subr.mxu0 0.0
        %2549 = vmatpush1.msra.mxu0 0.0
        %2550 = vmatprep.subr.mxu0 0.0
        %2551 = vmatpush1.msra.mxu0 0.0
        %2552 = vmatprep.subr.mxu0 0.0
        %2553 = vmatpush1.msra.mxu0 0.0
        %2554 = vmatprep.subr.mxu0 0.0
        %2555 = vmatpush1.msra.mxu0 0.0
        %2556 = vmatprep.subr.mxu0 0.0
        %2557 = vmatpush1.msra.mxu0 0.0
        %2558 = vmatprep.subr.mxu0 0.0
        %v2559 = vand.u32 %v2420, 4294901760
        %v2560 = vsub.f32 %v2420, %v2559
        %v2561 = vand.u32 %v2560, 4294901760
        %v2562 = vsub.f32 %v2560, %v2561
        %v2563 = vand.u32 %v2562, 4294901760
        %2564 = vmatpush1.msra.mxu0 %v2563
        %2565 = vmatprep.subr.mxu0 0.0
        %2566 = vmatpush2.msra.mxu0 0.0
        %2567 = vmatprep.subr.mxu0 0.0
        %2568 = vmatpush2.msra.mxu0 0.0
        %2569 = vmatprep.subr.mxu0 0.0
        %2570 = vmatpush2.msra.mxu0 0.0
        %2571 = vmatprep.subr.mxu0 0.0
        %2572 = vmatpush2.msra.mxu0 0.0
        %2573 = vmatprep.subr.mxu0 0.0
        %2574 = vmatpush2.msra.mxu0 0.0
        %2575 = vmatprep.subr.mxu0 0.0
        %2576 = vmatpush2.msra.mxu0 0.0
        %2577 = vmatprep.subr.mxu0 0.0
        %2578 = vmatpush2.msra.mxu0 0.0
        %2579 = vmatprep.subr.mxu0 0.0
        %2580 = vmatpush2.msra.mxu0 0.0
        %2581 = vmatprep.subr.mxu0 0.0
        %2582 = vmatpush2.msra.mxu0 0.0
        %2583 = vmatprep.subr.mxu0 0.0
        %2584 = vmatpush2.msra.mxu0 0.0
        %2585 = vmatprep.subr.mxu0 0.0
        %2586 = vmatpush2.msra.mxu0 0.0
        %2587 = vmatprep.subr.mxu0 0.0
        %2588 = vmatpush2.msra.mxu0 0.0
        %2589 = vmatprep.subr.mxu0 0.0
        %2590 = vmatpush2.msra.mxu0 0.0
        %2591 = vmatprep.subr.mxu0 0.0
        %2592 = vmatpush2.msra.mxu0 0.0
        %2593 = vmatprep.subr.mxu0 0.0
        %2594 = vmatpush2.msra.mxu0 0.0
        %2595 = vmatprep.subr.mxu0 0.0
        %2596 = vmatpush2.msra.mxu0 0.0
        %2597 = vmatprep.mubr.f32.mxu0 0.0
        %v2598 = vand.u32 %v2407, 4294901760
        %2599 = vmatmul.mubr.f32.gmra.mxu0 %v2598
        %v2600 = vpop.f32.mrf.mxu0
        %v2601 = vadd.f32 %v2495, %v2600
        %v2602 = vpop.f32.mrf.mxu0
        %2603 = vmatprep.mubr.f32.mxu0 0.0
        %v2604 = vand.u32 %v2410, 4294901760
        %2605 = vmatmul.mubr.f32.gmra.mxu0 %v2604
        %v2606 = vpop.f32.mrf.mxu0
        %v2607 = vadd.f32 %v2505, %v2606
        %v2608 = vpop.f32.mrf.mxu0
        %2609 = vmatprep.mubr.f32.mxu0 0.0
        %v2610 = vand.u32 %v2413, 4294901760
        %2611 = vmatmul.mubr.f32.gmra.mxu0 %v2610
        %v2612 = vpop.f32.mrf.mxu0
        %v2613 = vadd.f32 %v2515, %v2612
        %v2614 = vpop.f32.mrf.mxu0
        %2615 = vmatprep.mubr.f32.mxu0 0.0
        %v2616 = vand.u32 %v2416, 4294901760
        %2617 = vmatmul.mubr.f32.gmra.mxu0 %v2616
        %v2618 = vpop.f32.mrf.mxu0
        %v2619 = vadd.f32 %v2525, %v2618
        %v2620 = vpop.f32.mrf.mxu0
        %2621 = vdwg.mxu0
        %2622 = vmatprep.subr.mxu0 0.0
        %2623 = vmatpush1.msra.mxu0 0.0
        %2624 = vmatprep.subr.mxu0 0.0
        %2625 = vmatpush1.msra.mxu0 0.0
        %2626 = vmatprep.subr.mxu0 0.0
        %2627 = vmatpush1.msra.mxu0 0.0
        %2628 = vmatprep.subr.mxu0 0.0
        %2629 = vmatpush1.msra.mxu0 0.0
        %2630 = vmatprep.subr.mxu0 0.0
        %2631 = vmatpush1.msra.mxu0 0.0
        %2632 = vmatprep.subr.mxu0 0.0
        %2633 = vmatpush1.msra.mxu0 0.0
        %2634 = vmatprep.subr.mxu0 0.0
        %2635 = vmatpush1.msra.mxu0 0.0
        %2636 = vmatprep.subr.mxu0 0.0
        %2637 = vmatpush1.msra.mxu0 0.0
        %2638 = vmatprep.subr.mxu0 0.0
        %2639 = vmatpush1.msra.mxu0 0.0
        %2640 = vmatprep.subr.mxu0 0.0
        %2641 = vmatpush1.msra.mxu0 0.0
        %2642 = vmatprep.subr.mxu0 0.0
        %2643 = vmatpush1.msra.mxu0 0.0
        %2644 = vmatprep.subr.mxu0 0.0
        %2645 = vmatpush1.msra.mxu0 0.0
        %2646 = vmatprep.subr.mxu0 0.0
        %2647 = vmatpush1.msra.mxu0 0.0
        %2648 = vmatprep.subr.mxu0 0.0
        %2649 = vmatpush1.msra.mxu0 0.0
        %2650 = vmatprep.subr.mxu0 0.0
        %2651 = vmatpush1.msra.mxu0 0.0
        %2652 = vmatprep.subr.mxu0 0.0
        %v2653 = vand.u32 %v2420, 4294901760
        %v2654 = vsub.f32 %v2420, %v2653
        %2655 = vmatpush1.msra.mxu0 %v2654
        %2656 = vmatprep.subr.mxu0 0.0
        %2657 = vmatpush2.msra.mxu0 0.0
        %2658 = vmatprep.subr.mxu0 0.0
        %2659 = vmatpush2.msra.mxu0 0.0
        %2660 = vmatprep.subr.mxu0 0.0
        %2661 = vmatpush2.msra.mxu0 0.0
        %2662 = vmatprep.subr.mxu0 0.0
        %2663 = vmatpush2.msra.mxu0 0.0
        %2664 = vmatprep.subr.mxu0 0.0
        %2665 = vmatpush2.msra.mxu0 0.0
        %2666 = vmatprep.subr.mxu0 0.0
        %2667 = vmatpush2.msra.mxu0 0.0
        %2668 = vmatprep.subr.mxu0 0.0
        %2669 = vmatpush2.msra.mxu0 0.0
        %2670 = vmatprep.subr.mxu0 0.0
        %2671 = vmatpush2.msra.mxu0 0.0
        %2672 = vmatprep.subr.mxu0 0.0
        %2673 = vmatpush2.msra.mxu0 0.0
        %2674 = vmatprep.subr.mxu0 0.0
        %2675 = vmatpush2.msra.mxu0 0.0
        %2676 = vmatprep.subr.mxu0 0.0
        %2677 = vmatpush2.msra.mxu0 0.0
        %2678 = vmatprep.subr.mxu0 0.0
        %2679 = vmatpush2.msra.mxu0 0.0
        %2680 = vmatprep.subr.mxu0 0.0
        %2681 = vmatpush2.msra.mxu0 0.0
        %2682 = vmatprep.subr.mxu0 0.0
        %2683 = vmatpush2.msra.mxu0 0.0
        %2684 = vmatprep.subr.mxu0 0.0
        %2685 = vmatpush2.msra.mxu0 0.0
        %2686 = vmatprep.subr.mxu0 0.0
        %2687 = vmatpush2.msra.mxu0 0.0
        %2688 = vmatprep.mubr.f32.mxu0 0.0
        %v2689 = vand.u32 %v2407, 4294901760
        %v2690 = vsub.f32 %v2407, %v2689
        %2691 = vmatmul.mubr.f32.gmra.mxu0 %v2690
        %v2692 = vpop.f32.mrf.mxu0
        %v2693 = vadd.f32 %v2601, %v2692
        %v2694 = vpop.f32.mrf.mxu0
        %2695 = vmatprep.mubr.f32.mxu0 0.0
        %v2696 = vand.u32 %v2410, 4294901760
        %v2697 = vsub.f32 %v2410, %v2696
        %2698 = vmatmul.mubr.f32.gmra.mxu0 %v2697
        %v2699 = vpop.f32.mrf.mxu0
        %v2700 = vadd.f32 %v2607, %v2699
        %v2701 = vpop.f32.mrf.mxu0
        %2702 = vmatprep.mubr.f32.mxu0 0.0
        %v2703 = vand.u32 %v2413, 4294901760
        %v2704 = vsub.f32 %v2413, %v2703
        %2705 = vmatmul.mubr.f32.gmra.mxu0 %v2704
        %v2706 = vpop.f32.mrf.mxu0
        %v2707 = vadd.f32 %v2613, %v2706
        %v2708 = vpop.f32.mrf.mxu0
        %2709 = vmatprep.mubr.f32.mxu0 0.0
        %v2710 = vand.u32 %v2416, 4294901760
        %v2711 = vsub.f32 %v2416, %v2710
        %2712 = vmatmul.mubr.f32.gmra.mxu0 %v2711
        %v2713 = vpop.f32.mrf.mxu0
        %v2714 = vadd.f32 %v2619, %v2713
        %v2715 = vpop.f32.mrf.mxu0
        %2716 = vdwg.mxu0
        %2717 = vmatprep.subr.mxu0 0.0
        %2718 = vmatpush1.msra.mxu0 0.0
        %2719 = vmatprep.subr.mxu0 0.0
        %2720 = vmatpush1.msra.mxu0 0.0
        %2721 = vmatprep.subr.mxu0 0.0
        %2722 = vmatpush1.msra.mxu0 0.0
        %2723 = vmatprep.subr.mxu0 0.0
        %2724 = vmatpush1.msra.mxu0 0.0
        %2725 = vmatprep.subr.mxu0 0.0
        %2726 = vmatpush1.msra.mxu0 0.0
        %2727 = vmatprep.subr.mxu0 0.0
        %2728 = vmatpush1.msra.mxu0 0.0
        %2729 = vmatprep.subr.mxu0 0.0
        %2730 = vmatpush1.msra.mxu0 0.0
        %2731 = vmatprep.subr.mxu0 0.0
        %2732 = vmatpush1.msra.mxu0 0.0
        %2733 = vmatprep.subr.mxu0 0.0
        %2734 = vmatpush1.msra.mxu0 0.0
        %2735 = vmatprep.subr.mxu0 0.0
        %2736 = vmatpush1.msra.mxu0 0.0
        %2737 = vmatprep.subr.mxu0 0.0
        %2738 = vmatpush1.msra.mxu0 0.0
        %2739 = vmatprep.subr.mxu0 0.0
        %2740 = vmatpush1.msra.mxu0 0.0
        %2741 = vmatprep.subr.mxu0 0.0
        %2742 = vmatpush1.msra.mxu0 0.0
        %2743 = vmatprep.subr.mxu0 0.0
        %2744 = vmatpush1.msra.mxu0 0.0
        %2745 = vmatprep.subr.mxu0 0.0
        %2746 = vmatpush1.msra.mxu0 0.0
        %2747 = vmatprep.subr.mxu0 0.0
        %v2748 = vand.u32 %v2420, 4294901760
        %2749 = vmatpush1.msra.mxu0 %v2748
        %2750 = vmatprep.subr.mxu0 0.0
        %2751 = vmatpush2.msra.mxu0 0.0
        %2752 = vmatprep.subr.mxu0 0.0
        %2753 = vmatpush2.msra.mxu0 0.0
        %2754 = vmatprep.subr.mxu0 0.0
        %2755 = vmatpush2.msra.mxu0 0.0
        %2756 = vmatprep.subr.mxu0 0.0
        %2757 = vmatpush2.msra.mxu0 0.0
        %2758 = vmatprep.subr.mxu0 0.0
        %2759 = vmatpush2.msra.mxu0 0.0
        %2760 = vmatprep.subr.mxu0 0.0
        %2761 = vmatpush2.msra.mxu0 0.0
        %2762 = vmatprep.subr.mxu0 0.0
        %2763 = vmatpush2.msra.mxu0 0.0
        %2764 = vmatprep.subr.mxu0 0.0
        %2765 = vmatpush2.msra.mxu0 0.0
        %2766 = vmatprep.subr.mxu0 0.0
        %2767 = vmatpush2.msra.mxu0 0.0
        %2768 = vmatprep.subr.mxu0 0.0
        %2769 = vmatpush2.msra.mxu0 0.0
        %2770 = vmatprep.subr.mxu0 0.0
        %2771 = vmatpush2.msra.mxu0 0.0
        %2772 = vmatprep.subr.mxu0 0.0
        %2773 = vmatpush2.msra.mxu0 0.0
        %2774 = vmatprep.subr.mxu0 0.0
        %2775 = vmatpush2.msra.mxu0 0.0
        %2776 = vmatprep.subr.mxu0 0.0
        %2777 = vmatpush2.msra.mxu0 0.0
        %2778 = vmatprep.subr.mxu0 0.0
        %2779 = vmatpush2.msra.mxu0 0.0
        %2780 = vmatprep.subr.mxu0 0.0
        %2781 = vmatpush2.msra.mxu0 0.0
        %2782 = vmatprep.mubr.f32.mxu0 0.0
        %v2783 = vand.u32 %v2407, 4294901760
        %v2784 = vsub.f32 %v2407, %v2783
        %v2785 = vand.u32 %v2784, 4294901760
        %2786 = vmatmul.mubr.f32.gmra.mxu0 %v2785
        %v2787 = vpop.f32.mrf.mxu0
        %v2788 = vadd.f32 %v2693, %v2787
        %v2789 = vpop.f32.mrf.mxu0
        %2790 = vmatprep.mubr.f32.mxu0 0.0
        %v2791 = vand.u32 %v2410, 4294901760
        %v2792 = vsub.f32 %v2410, %v2791
        %v2793 = vand.u32 %v2792, 4294901760
        %2794 = vmatmul.mubr.f32.gmra.mxu0 %v2793
        %v2795 = vpop.f32.mrf.mxu0
        %v2796 = vadd.f32 %v2700, %v2795
        %v2797 = vpop.f32.mrf.mxu0
        %2798 = vmatprep.mubr.f32.mxu0 0.0
        %v2799 = vand.u32 %v2413, 4294901760
        %v2800 = vsub.f32 %v2413, %v2799
        %v2801 = vand.u32 %v2800, 4294901760
        %2802 = vmatmul.mubr.f32.gmra.mxu0 %v2801
        %v2803 = vpop.f32.mrf.mxu0
        %v2804 = vadd.f32 %v2707, %v2803
        %v2805 = vpop.f32.mrf.mxu0
        %2806 = vmatprep.mubr.f32.mxu0 0.0
        %v2807 = vand.u32 %v2416, 4294901760
        %v2808 = vsub.f32 %v2416, %v2807
        %v2809 = vand.u32 %v2808, 4294901760
        %2810 = vmatmul.mubr.f32.gmra.mxu0 %v2809
        %v2811 = vpop.f32.mrf.mxu0
        %v2812 = vadd.f32 %v2714, %v2811
        %v2813 = vpop.f32.mrf.mxu0
        %2814 = vdwg.mxu0
        %2815 = vmatprep.subr.mxu0 0.0
        %2816 = vmatpush1.msra.mxu0 0.0
        %2817 = vmatprep.subr.mxu0 0.0
        %2818 = vmatpush1.msra.mxu0 0.0
        %2819 = vmatprep.subr.mxu0 0.0
        %2820 = vmatpush1.msra.mxu0 0.0
        %2821 = vmatprep.subr.mxu0 0.0
        %2822 = vmatpush1.msra.mxu0 0.0
        %2823 = vmatprep.subr.mxu0 0.0
        %2824 = vmatpush1.msra.mxu0 0.0
        %2825 = vmatprep.subr.mxu0 0.0
        %2826 = vmatpush1.msra.mxu0 0.0
        %2827 = vmatprep.subr.mxu0 0.0
        %2828 = vmatpush1.msra.mxu0 0.0
        %2829 = vmatprep.subr.mxu0 0.0
        %2830 = vmatpush1.msra.mxu0 0.0
        %2831 = vmatprep.subr.mxu0 0.0
        %2832 = vmatpush1.msra.mxu0 0.0
        %2833 = vmatprep.subr.mxu0 0.0
        %2834 = vmatpush1.msra.mxu0 0.0
        %2835 = vmatprep.subr.mxu0 0.0
        %2836 = vmatpush1.msra.mxu0 0.0
        %2837 = vmatprep.subr.mxu0 0.0
        %2838 = vmatpush1.msra.mxu0 0.0
        %2839 = vmatprep.subr.mxu0 0.0
        %2840 = vmatpush1.msra.mxu0 0.0
        %2841 = vmatprep.subr.mxu0 0.0
        %2842 = vmatpush1.msra.mxu0 0.0
        %2843 = vmatprep.subr.mxu0 0.0
        %2844 = vmatpush1.msra.mxu0 0.0
        %2845 = vmatprep.subr.mxu0 0.0
        %v2846 = vand.u32 %v2420, 4294901760
        %v2847 = vsub.f32 %v2420, %v2846
        %v2848 = vand.u32 %v2847, 4294901760
        %2849 = vmatpush1.msra.mxu0 %v2848
        %2850 = vmatprep.subr.mxu0 0.0
        %2851 = vmatpush2.msra.mxu0 0.0
        %2852 = vmatprep.subr.mxu0 0.0
        %2853 = vmatpush2.msra.mxu0 0.0
        %2854 = vmatprep.subr.mxu0 0.0
        %2855 = vmatpush2.msra.mxu0 0.0
        %2856 = vmatprep.subr.mxu0 0.0
        %2857 = vmatpush2.msra.mxu0 0.0
        %2858 = vmatprep.subr.mxu0 0.0
        %2859 = vmatpush2.msra.mxu0 0.0
        %2860 = vmatprep.subr.mxu0 0.0
        %2861 = vmatpush2.msra.mxu0 0.0
        %2862 = vmatprep.subr.mxu0 0.0
        %2863 = vmatpush2.msra.mxu0 0.0
        %2864 = vmatprep.subr.mxu0 0.0
        %2865 = vmatpush2.msra.mxu0 0.0
        %2866 = vmatprep.subr.mxu0 0.0
        %2867 = vmatpush2.msra.mxu0 0.0
        %2868 = vmatprep.subr.mxu0 0.0
        %2869 = vmatpush2.msra.mxu0 0.0
        %2870 = vmatprep.subr.mxu0 0.0
        %2871 = vmatpush2.msra.mxu0 0.0
        %2872 = vmatprep.subr.mxu0 0.0
        %2873 = vmatpush2.msra.mxu0 0.0
        %2874 = vmatprep.subr.mxu0 0.0
        %2875 = vmatpush2.msra.mxu0 0.0
        %2876 = vmatprep.subr.mxu0 0.0
        %2877 = vmatpush2.msra.mxu0 0.0
        %2878 = vmatprep.subr.mxu0 0.0
        %2879 = vmatpush2.msra.mxu0 0.0
        %2880 = vmatprep.subr.mxu0 0.0
        %2881 = vmatpush2.msra.mxu0 0.0
        %2882 = vmatprep.mubr.f32.mxu0 0.0
        %v2883 = vand.u32 %v2407, 4294901760
        %2884 = vmatmul.mubr.f32.gmra.mxu0 %v2883
        %v2885 = vpop.f32.mrf.mxu0
        %v2886 = vadd.f32 %v2788, %v2885
        %v2887 = vpop.f32.mrf.mxu0
        %2888 = vmatprep.mubr.f32.mxu0 0.0
        %v2889 = vand.u32 %v2410, 4294901760
        %2890 = vmatmul.mubr.f32.gmra.mxu0 %v2889
        %v2891 = vpop.f32.mrf.mxu0
        %v2892 = vadd.f32 %v2796, %v2891
        %v2893 = vpop.f32.mrf.mxu0
        %2894 = vmatprep.mubr.f32.mxu0 0.0
        %v2895 = vand.u32 %v2413, 4294901760
        %2896 = vmatmul.mubr.f32.gmra.mxu0 %v2895
        %v2897 = vpop.f32.mrf.mxu0
        %v2898 = vadd.f32 %v2804, %v2897
        %v2899 = vpop.f32.mrf.mxu0
        %2900 = vmatprep.mubr.f32.mxu0 0.0
        %v2901 = vand.u32 %v2416, 4294901760
        %2902 = vmatmul.mubr.f32.gmra.mxu0 %v2901
        %v2903 = vpop.f32.mrf.mxu0
        %v2904 = vadd.f32 %v2812, %v2903
        %v2905 = vpop.f32.mrf.mxu0
        %2906 = vdwg.mxu0
        %2907 = vmatprep.subr.mxu0 0.0
        %2908 = vmatpush1.msra.mxu0 0.0
        %2909 = vmatprep.subr.mxu0 0.0
        %2910 = vmatpush1.msra.mxu0 0.0
        %2911 = vmatprep.subr.mxu0 0.0
        %2912 = vmatpush1.msra.mxu0 0.0
        %2913 = vmatprep.subr.mxu0 0.0
        %2914 = vmatpush1.msra.mxu0 0.0
        %2915 = vmatprep.subr.mxu0 0.0
        %2916 = vmatpush1.msra.mxu0 0.0
        %2917 = vmatprep.subr.mxu0 0.0
        %2918 = vmatpush1.msra.mxu0 0.0
        %2919 = vmatprep.subr.mxu0 0.0
        %2920 = vmatpush1.msra.mxu0 0.0
        %2921 = vmatprep.subr.mxu0 0.0
        %2922 = vmatpush1.msra.mxu0 0.0
        %2923 = vmatprep.subr.mxu0 0.0
        %2924 = vmatpush1.msra.mxu0 0.0
        %2925 = vmatprep.subr.mxu0 0.0
        %2926 = vmatpush1.msra.mxu0 0.0
        %2927 = vmatprep.subr.mxu0 0.0
        %2928 = vmatpush1.msra.mxu0 0.0
        %2929 = vmatprep.subr.mxu0 0.0
        %2930 = vmatpush1.msra.mxu0 0.0
        %2931 = vmatprep.subr.mxu0 0.0
        %2932 = vmatpush1.msra.mxu0 0.0
        %2933 = vmatprep.subr.mxu0 0.0
        %2934 = vmatpush1.msra.mxu0 0.0
        %2935 = vmatprep.subr.mxu0 0.0
        %2936 = vmatpush1.msra.mxu0 0.0
        %2937 = vmatprep.subr.mxu0 0.0
        %v2938 = vand.u32 %v2420, 4294901760
        %2939 = vmatpush1.msra.mxu0 %v2938
        %2940 = vmatprep.subr.mxu0 0.0
        %2941 = vmatpush2.msra.mxu0 0.0
        %2942 = vmatprep.subr.mxu0 0.0
        %2943 = vmatpush2.msra.mxu0 0.0
        %2944 = vmatprep.subr.mxu0 0.0
        %2945 = vmatpush2.msra.mxu0 0.0
        %2946 = vmatprep.subr.mxu0 0.0
        %2947 = vmatpush2.msra.mxu0 0.0
        %2948 = vmatprep.subr.mxu0 0.0
        %2949 = vmatpush2.msra.mxu0 0.0
        %2950 = vmatprep.subr.mxu0 0.0
        %2951 = vmatpush2.msra.mxu0 0.0
        %2952 = vmatprep.subr.mxu0 0.0
        %2953 = vmatpush2.msra.mxu0 0.0
        %2954 = vmatprep.subr.mxu0 0.0
        %2955 = vmatpush2.msra.mxu0 0.0
        %2956 = vmatprep.subr.mxu0 0.0
        %2957 = vmatpush2.msra.mxu0 0.0
        %2958 = vmatprep.subr.mxu0 0.0
        %2959 = vmatpush2.msra.mxu0 0.0
        %2960 = vmatprep.subr.mxu0 0.0
        %2961 = vmatpush2.msra.mxu0 0.0
        %2962 = vmatprep.subr.mxu0 0.0
        %2963 = vmatpush2.msra.mxu0 0.0
        %2964 = vmatprep.subr.mxu0 0.0
        %2965 = vmatpush2.msra.mxu0 0.0
        %2966 = vmatprep.subr.mxu0 0.0
        %2967 = vmatpush2.msra.mxu0 0.0
        %2968 = vmatprep.subr.mxu0 0.0
        %2969 = vmatpush2.msra.mxu0 0.0
        %2970 = vmatprep.subr.mxu0 0.0
        %2971 = vmatpush2.msra.mxu0 0.0
        %2972 = vmatprep.mubr.f32.mxu0 0.0
        %v2973 = vand.u32 %v2407, 4294901760
        %2974 = vmatmul.mubr.f32.gmra.mxu0 %v2973
        %v2975 = vpop.f32.mrf.mxu0
        %v2976 = vadd.f32 %v2886, %v2975
        %v2977 = vpop.f32.mrf.mxu0
        %2978 = vmatprep.mubr.f32.mxu0 0.0
        %v2979 = vand.u32 %v2410, 4294901760
        %2980 = vmatmul.mubr.f32.gmra.mxu0 %v2979
        %v2981 = vpop.f32.mrf.mxu0
        %v2982 = vadd.f32 %v2892, %v2981
        %v2983 = vpop.f32.mrf.mxu0
        %2984 = vmatprep.mubr.f32.mxu0 0.0
        %v2985 = vand.u32 %v2413, 4294901760
        %2986 = vmatmul.mubr.f32.gmra.mxu0 %v2985
        %v2987 = vpop.f32.mrf.mxu0
        %v2988 = vadd.f32 %v2898, %v2987
        %v2989 = vpop.f32.mrf.mxu0
        %2990 = vmatprep.mubr.f32.mxu0 0.0
        %v2991 = vand.u32 %v2416, 4294901760
        %2992 = vmatmul.mubr.f32.gmra.mxu0 %v2991
        %v2993 = vpop.f32.mrf.mxu0
        %v2994 = vadd.f32 %v2904, %v2993
        %v2995 = vpop.f32.mrf.mxu0
        %2996 = vdwg.mxu0
        %v2997 = vxor.u32 %v2976, 2147483648
        %v2998 = vxor.u32 %v2982, 2147483648
        %v2999 = vxor.u32 %v2988, 2147483648
        %v3000 = vxor.u32 %v2994, 2147483648
        %v3001 = vmul.f32 %v2997, 1.442695
        %v3002 = vpow.pop %v3001
        %v3003 = vmul.f32 %v2998, 1.442695
        %v3004 = vpow.pop %v3003
        %v3005 = vmul.f32 %v2999, 1.442695
        %v3006 = vpow.pop %v3005
        %v3007 = vmul.f32 %v3000, 1.442695
        %v3008 = vpow.pop %v3007
        %v3009 = vadd.f32 %v3002, 1.0
        %v3010 = vadd.f32 %v3004, 1.0
        %v3011 = vadd.f32 %v3006, 1.0
        %v3012 = vadd.f32 %v3008, 1.0
        %v3013 = vrcp.pop %v3009
        %v3014 = vmul.f32 1.0, %v3013
        %v3015 = vrcp.pop %v3010
        %v3016 = vmul.f32 1.0, %v3015
        %v3017 = vrcp.pop %v3011
        %v3018 = vmul.f32 1.0, %v3017
        %v3019 = vrcp.pop %v3012
        %v3020 = vmul.f32 1.0, %v3019
        %v3021 = vlaneseq
        %v3022 = vshrl.u32 %v3021, 7
        %v3023 = vsub.s32 0, %v3022
        %v3024 = vrot.slane %v3014, %v3023
        %3026 = vbcast.lane.b32.xlu0 %v3024, 256
        %v3027 = vpop.permute.xlu0 %3026
        %s3029 = sor.u32 256, 8
        %3030 = vbcast.lane.b32.xlu0 %v3024, %s3029
        %v3031 = vpop.permute.xlu0 %3030
        %s3033 = sor.u32 256, 16
        %3034 = vbcast.lane.b32.xlu0 %v3024, %s3033
        %v3035 = vpop.permute.xlu0 %3034
        %s3037 = sor.u32 256, 24
        %3038 = vbcast.lane.b32.xlu0 %v3024, %s3037
        %v3039 = vpop.permute.xlu0 %3038
        %v3040 = vlaneseq
        %v3041 = vshrl.u32 %v3040, 7
        %v3042 = vsub.s32 1, %v3041
        %v3043 = vrot.slane %v3014, %v3042
        %3045 = vbcast.lane.b32.xlu0 %v3043, 256
        %v3046 = vpop.permute.xlu0 %3045
        %s3048 = sor.u32 256, 8
        %3049 = vbcast.lane.b32.xlu0 %v3043, %s3048
        %v3050 = vpop.permute.xlu0 %3049
        %s3052 = sor.u32 256, 16
        %3053 = vbcast.lane.b32.xlu0 %v3043, %s3052
        %v3054 = vpop.permute.xlu0 %3053
        %s3056 = sor.u32 256, 24
        %3057 = vbcast.lane.b32.xlu0 %v3043, %s3056
        %v3058 = vpop.permute.xlu0 %3057
        %v3059 = vlaneseq
        %v3060 = vshrl.u32 %v3059, 7
        %v3061 = vsub.s32 2, %v3060
        %v3062 = vrot.slane %v3014, %v3061
        %3064 = vbcast.lane.b32.xlu0 %v3062, 256
        %v3065 = vpop.permute.xlu0 %3064
        %s3067 = sor.u32 256, 8
        %3068 = vbcast.lane.b32.xlu0 %v3062, %s3067
        %v3069 = vpop.permute.xlu0 %3068
        %s3071 = sor.u32 256, 16
        %3072 = vbcast.lane.b32.xlu0 %v3062, %s3071
        %v3073 = vpop.permute.xlu0 %3072
        %s3075 = sor.u32 256, 24
        %3076 = vbcast.lane.b32.xlu0 %v3062, %s3075
        %v3077 = vpop.permute.xlu0 %3076
        %v3078 = vlaneseq
        %v3079 = vshrl.u32 %v3078, 7
        %v3080 = vsub.s32 3, %v3079
        %v3081 = vrot.slane %v3014, %v3080
        %3083 = vbcast.lane.b32.xlu0 %v3081, 256
        %v3084 = vpop.permute.xlu0 %3083
        %s3086 = sor.u32 256, 8
        %3087 = vbcast.lane.b32.xlu0 %v3081, %s3086
        %v3088 = vpop.permute.xlu0 %3087
        %s3090 = sor.u32 256, 16
        %3091 = vbcast.lane.b32.xlu0 %v3081, %s3090
        %v3092 = vpop.permute.xlu0 %3091
        %s3094 = sor.u32 256, 24
        %3095 = vbcast.lane.b32.xlu0 %v3081, %s3094
        %v3096 = vpop.permute.xlu0 %3095
        %v3097 = vlaneseq
        %v3098 = vshrl.u32 %v3097, 7
        %v3099 = vsub.s32 4, %v3098
        %v3100 = vrot.slane %v3014, %v3099
        %3102 = vbcast.lane.b32.xlu0 %v3100, 256
        %v3103 = vpop.permute.xlu0 %3102
        %s3105 = sor.u32 256, 8
        %3106 = vbcast.lane.b32.xlu0 %v3100, %s3105
        %v3107 = vpop.permute.xlu0 %3106
        %s3109 = sor.u32 256, 16
        %3110 = vbcast.lane.b32.xlu0 %v3100, %s3109
        %v3111 = vpop.permute.xlu0 %3110
        %s3113 = sor.u32 256, 24
        %3114 = vbcast.lane.b32.xlu0 %v3100, %s3113
        %v3115 = vpop.permute.xlu0 %3114
        %v3116 = vlaneseq
        %v3117 = vshrl.u32 %v3116, 7
        %v3118 = vsub.s32 5, %v3117
        %v3119 = vrot.slane %v3014, %v3118
        %3121 = vbcast.lane.b32.xlu0 %v3119, 256
        %v3122 = vpop.permute.xlu0 %3121
        %s3124 = sor.u32 256, 8
        %3125 = vbcast.lane.b32.xlu0 %v3119, %s3124
        %v3126 = vpop.permute.xlu0 %3125
        %s3128 = sor.u32 256, 16
        %3129 = vbcast.lane.b32.xlu0 %v3119, %s3128
        %v3130 = vpop.permute.xlu0 %3129
        %s3132 = sor.u32 256, 24
        %3133 = vbcast.lane.b32.xlu0 %v3119, %s3132
        %v3134 = vpop.permute.xlu0 %3133
        %v3135 = vlaneseq
        %v3136 = vshrl.u32 %v3135, 7
        %v3137 = vsub.s32 6, %v3136
        %v3138 = vrot.slane %v3014, %v3137
        %3140 = vbcast.lane.b32.xlu0 %v3138, 256
        %v3141 = vpop.permute.xlu0 %3140
        %s3143 = sor.u32 256, 8
        %3144 = vbcast.lane.b32.xlu0 %v3138, %s3143
        %v3145 = vpop.permute.xlu0 %3144
        %s3147 = sor.u32 256, 16
        %3148 = vbcast.lane.b32.xlu0 %v3138, %s3147
        %v3149 = vpop.permute.xlu0 %3148
        %s3151 = sor.u32 256, 24
        %3152 = vbcast.lane.b32.xlu0 %v3138, %s3151
        %v3153 = vpop.permute.xlu0 %3152
        %v3154 = vlaneseq
        %v3155 = vshrl.u32 %v3154, 7
        %v3156 = vsub.s32 7, %v3155
        %v3157 = vrot.slane %v3014, %v3156
        %3159 = vbcast.lane.b32.xlu0 %v3157, 256
        %v3160 = vpop.permute.xlu0 %3159
        %s3162 = sor.u32 256, 8
        %3163 = vbcast.lane.b32.xlu0 %v3157, %s3162
        %v3164 = vpop.permute.xlu0 %3163
        %s3166 = sor.u32 256, 16
        %3167 = vbcast.lane.b32.xlu0 %v3157, %s3166
        %v3168 = vpop.permute.xlu0 %3167
        %s3170 = sor.u32 256, 24
        %3171 = vbcast.lane.b32.xlu0 %v3157, %s3170
        %v3172 = vpop.permute.xlu0 %3171
        %v3173 = vlaneseq
        %v3174 = vshrl.u32 %v3173, 7
        %v3175 = vsub.s32 0, %v3174
        %v3176 = vrot.slane %v3016, %v3175
        %3178 = vbcast.lane.b32.xlu0 %v3176, 256
        %v3179 = vpop.permute.xlu0 %3178
        %s3181 = sor.u32 256, 8
        %3182 = vbcast.lane.b32.xlu0 %v3176, %s3181
        %v3183 = vpop.permute.xlu0 %3182
        %s3185 = sor.u32 256, 16
        %3186 = vbcast.lane.b32.xlu0 %v3176, %s3185
        %v3187 = vpop.permute.xlu0 %3186
        %s3189 = sor.u32 256, 24
        %3190 = vbcast.lane.b32.xlu0 %v3176, %s3189
        %v3191 = vpop.permute.xlu0 %3190
        %v3192 = vlaneseq
        %v3193 = vshrl.u32 %v3192, 7
        %v3194 = vsub.s32 1, %v3193
        %v3195 = vrot.slane %v3016, %v3194
        %3197 = vbcast.lane.b32.xlu0 %v3195, 256
        %v3198 = vpop.permute.xlu0 %3197
        %s3200 = sor.u32 256, 8
        %3201 = vbcast.lane.b32.xlu0 %v3195, %s3200
        %v3202 = vpop.permute.xlu0 %3201
        %s3204 = sor.u32 256, 16
        %3205 = vbcast.lane.b32.xlu0 %v3195, %s3204
        %v3206 = vpop.permute.xlu0 %3205
        %s3208 = sor.u32 256, 24
        %3209 = vbcast.lane.b32.xlu0 %v3195, %s3208
        %v3210 = vpop.permute.xlu0 %3209
        %v3211 = vlaneseq
        %v3212 = vshrl.u32 %v3211, 7
        %v3213 = vsub.s32 2, %v3212
        %v3214 = vrot.slane %v3016, %v3213
        %3216 = vbcast.lane.b32.xlu0 %v3214, 256
        %v3217 = vpop.permute.xlu0 %3216
        %s3219 = sor.u32 256, 8
        %3220 = vbcast.lane.b32.xlu0 %v3214, %s3219
        %v3221 = vpop.permute.xlu0 %3220
        %s3223 = sor.u32 256, 16
        %3224 = vbcast.lane.b32.xlu0 %v3214, %s3223
        %v3225 = vpop.permute.xlu0 %3224
        %s3227 = sor.u32 256, 24
        %3228 = vbcast.lane.b32.xlu0 %v3214, %s3227
        %v3229 = vpop.permute.xlu0 %3228
        %v3230 = vlaneseq
        %v3231 = vshrl.u32 %v3230, 7
        %v3232 = vsub.s32 3, %v3231
        %v3233 = vrot.slane %v3016, %v3232
        %3235 = vbcast.lane.b32.xlu0 %v3233, 256
        %v3236 = vpop.permute.xlu0 %3235
        %s3238 = sor.u32 256, 8
        %3239 = vbcast.lane.b32.xlu0 %v3233, %s3238
        %v3240 = vpop.permute.xlu0 %3239
        %s3242 = sor.u32 256, 16
        %3243 = vbcast.lane.b32.xlu0 %v3233, %s3242
        %v3244 = vpop.permute.xlu0 %3243
        %s3246 = sor.u32 256, 24
        %3247 = vbcast.lane.b32.xlu0 %v3233, %s3246
        %v3248 = vpop.permute.xlu0 %3247
        %v3249 = vlaneseq
        %v3250 = vshrl.u32 %v3249, 7
        %v3251 = vsub.s32 4, %v3250
        %v3252 = vrot.slane %v3016, %v3251
        %3254 = vbcast.lane.b32.xlu0 %v3252, 256
        %v3255 = vpop.permute.xlu0 %3254
        %s3257 = sor.u32 256, 8
        %3258 = vbcast.lane.b32.xlu0 %v3252, %s3257
        %v3259 = vpop.permute.xlu0 %3258
        %s3261 = sor.u32 256, 16
        %3262 = vbcast.lane.b32.xlu0 %v3252, %s3261
        %v3263 = vpop.permute.xlu0 %3262
        %s3265 = sor.u32 256, 24
        %3266 = vbcast.lane.b32.xlu0 %v3252, %s3265
        %v3267 = vpop.permute.xlu0 %3266
        %v3268 = vlaneseq
        %v3269 = vshrl.u32 %v3268, 7
        %v3270 = vsub.s32 5, %v3269
        %v3271 = vrot.slane %v3016, %v3270
        %3273 = vbcast.lane.b32.xlu0 %v3271, 256
        %v3274 = vpop.permute.xlu0 %3273
        %s3276 = sor.u32 256, 8
        %3277 = vbcast.lane.b32.xlu0 %v3271, %s3276
        %v3278 = vpop.permute.xlu0 %3277
        %s3280 = sor.u32 256, 16
        %3281 = vbcast.lane.b32.xlu0 %v3271, %s3280
        %v3282 = vpop.permute.xlu0 %3281
        %s3284 = sor.u32 256, 24
        %3285 = vbcast.lane.b32.xlu0 %v3271, %s3284
        %v3286 = vpop.permute.xlu0 %3285
        %v3287 = vlaneseq
        %v3288 = vshrl.u32 %v3287, 7
        %v3289 = vsub.s32 6, %v3288
        %v3290 = vrot.slane %v3016, %v3289
        %3292 = vbcast.lane.b32.xlu0 %v3290, 256
        %v3293 = vpop.permute.xlu0 %3292
        %s3295 = sor.u32 256, 8
        %3296 = vbcast.lane.b32.xlu0 %v3290, %s3295
        %v3297 = vpop.permute.xlu0 %3296
        %s3299 = sor.u32 256, 16
        %3300 = vbcast.lane.b32.xlu0 %v3290, %s3299
        %v3301 = vpop.permute.xlu0 %3300
        %s3303 = sor.u32 256, 24
        %3304 = vbcast.lane.b32.xlu0 %v3290, %s3303
        %v3305 = vpop.permute.xlu0 %3304
        %v3306 = vlaneseq
        %v3307 = vshrl.u32 %v3306, 7
        %v3308 = vsub.s32 7, %v3307
        %v3309 = vrot.slane %v3016, %v3308
        %3311 = vbcast.lane.b32.xlu0 %v3309, 256
        %v3312 = vpop.permute.xlu0 %3311
        %s3314 = sor.u32 256, 8
        %3315 = vbcast.lane.b32.xlu0 %v3309, %s3314
        %v3316 = vpop.permute.xlu0 %3315
        %s3318 = sor.u32 256, 16
        %3319 = vbcast.lane.b32.xlu0 %v3309, %s3318
        %v3320 = vpop.permute.xlu0 %3319
        %s3322 = sor.u32 256, 24
        %3323 = vbcast.lane.b32.xlu0 %v3309, %s3322
        %v3324 = vpop.permute.xlu0 %3323
        %v3325 = vlaneseq
        %v3326 = vshrl.u32 %v3325, 7
        %v3327 = vsub.s32 0, %v3326
        %v3328 = vrot.slane %v3018, %v3327
        %3330 = vbcast.lane.b32.xlu0 %v3328, 256
        %v3331 = vpop.permute.xlu0 %3330
        %s3333 = sor.u32 256, 8
        %3334 = vbcast.lane.b32.xlu0 %v3328, %s3333
        %v3335 = vpop.permute.xlu0 %3334
        %s3337 = sor.u32 256, 16
        %3338 = vbcast.lane.b32.xlu0 %v3328, %s3337
        %v3339 = vpop.permute.xlu0 %3338
        %s3341 = sor.u32 256, 24
        %3342 = vbcast.lane.b32.xlu0 %v3328, %s3341
        %v3343 = vpop.permute.xlu0 %3342
        %v3344 = vlaneseq
        %v3345 = vshrl.u32 %v3344, 7
        %v3346 = vsub.s32 1, %v3345
        %v3347 = vrot.slane %v3018, %v3346
        %3349 = vbcast.lane.b32.xlu0 %v3347, 256
        %v3350 = vpop.permute.xlu0 %3349
        %s3352 = sor.u32 256, 8
        %3353 = vbcast.lane.b32.xlu0 %v3347, %s3352
        %v3354 = vpop.permute.xlu0 %3353
        %s3356 = sor.u32 256, 16
        %3357 = vbcast.lane.b32.xlu0 %v3347, %s3356
        %v3358 = vpop.permute.xlu0 %3357
        %s3360 = sor.u32 256, 24
        %3361 = vbcast.lane.b32.xlu0 %v3347, %s3360
        %v3362 = vpop.permute.xlu0 %3361
        %v3363 = vlaneseq
        %v3364 = vshrl.u32 %v3363, 7
        %v3365 = vsub.s32 2, %v3364
        %v3366 = vrot.slane %v3018, %v3365
        %3368 = vbcast.lane.b32.xlu0 %v3366, 256
        %v3369 = vpop.permute.xlu0 %3368
        %s3371 = sor.u32 256, 8
        %3372 = vbcast.lane.b32.xlu0 %v3366, %s3371
        %v3373 = vpop.permute.xlu0 %3372
        %s3375 = sor.u32 256, 16
        %3376 = vbcast.lane.b32.xlu0 %v3366, %s3375
        %v3377 = vpop.permute.xlu0 %3376
        %s3379 = sor.u32 256, 24
        %3380 = vbcast.lane.b32.xlu0 %v3366, %s3379
        %v3381 = vpop.permute.xlu0 %3380
        %v3382 = vlaneseq
        %v3383 = vshrl.u32 %v3382, 7
        %v3384 = vsub.s32 3, %v3383
        %v3385 = vrot.slane %v3018, %v3384
        %3387 = vbcast.lane.b32.xlu0 %v3385, 256
        %v3388 = vpop.permute.xlu0 %3387
        %s3390 = sor.u32 256, 8
        %3391 = vbcast.lane.b32.xlu0 %v3385, %s3390
        %v3392 = vpop.permute.xlu0 %3391
        %s3394 = sor.u32 256, 16
        %3395 = vbcast.lane.b32.xlu0 %v3385, %s3394
        %v3396 = vpop.permute.xlu0 %3395
        %s3398 = sor.u32 256, 24
        %3399 = vbcast.lane.b32.xlu0 %v3385, %s3398
        %v3400 = vpop.permute.xlu0 %3399
        %v3401 = vlaneseq
        %v3402 = vshrl.u32 %v3401, 7
        %v3403 = vsub.s32 4, %v3402
        %v3404 = vrot.slane %v3018, %v3403
        %3406 = vbcast.lane.b32.xlu0 %v3404, 256
        %v3407 = vpop.permute.xlu0 %3406
        %s3409 = sor.u32 256, 8
        %3410 = vbcast.lane.b32.xlu0 %v3404, %s3409
        %v3411 = vpop.permute.xlu0 %3410
        %s3413 = sor.u32 256, 16
        %3414 = vbcast.lane.b32.xlu0 %v3404, %s3413
        %v3415 = vpop.permute.xlu0 %3414
        %s3417 = sor.u32 256, 24
        %3418 = vbcast.lane.b32.xlu0 %v3404, %s3417
        %v3419 = vpop.permute.xlu0 %3418
        %v3420 = vlaneseq
        %v3421 = vshrl.u32 %v3420, 7
        %v3422 = vsub.s32 5, %v3421
        %v3423 = vrot.slane %v3018, %v3422
        %3425 = vbcast.lane.b32.xlu0 %v3423, 256
        %v3426 = vpop.permute.xlu0 %3425
        %s3428 = sor.u32 256, 8
        %3429 = vbcast.lane.b32.xlu0 %v3423, %s3428
        %v3430 = vpop.permute.xlu0 %3429
        %s3432 = sor.u32 256, 16
        %3433 = vbcast.lane.b32.xlu0 %v3423, %s3432
        %v3434 = vpop.permute.xlu0 %3433
        %s3436 = sor.u32 256, 24
        %3437 = vbcast.lane.b32.xlu0 %v3423, %s3436
        %v3438 = vpop.permute.xlu0 %3437
        %v3439 = vlaneseq
        %v3440 = vshrl.u32 %v3439, 7
        %v3441 = vsub.s32 6, %v3440
        %v3442 = vrot.slane %v3018, %v3441
        %3444 = vbcast.lane.b32.xlu0 %v3442, 256
        %v3445 = vpop.permute.xlu0 %3444
        %s3447 = sor.u32 256, 8
        %3448 = vbcast.lane.b32.xlu0 %v3442, %s3447
        %v3449 = vpop.permute.xlu0 %3448
        %s3451 = sor.u32 256, 16
        %3452 = vbcast.lane.b32.xlu0 %v3442, %s3451
        %v3453 = vpop.permute.xlu0 %3452
        %s3455 = sor.u32 256, 24
        %3456 = vbcast.lane.b32.xlu0 %v3442, %s3455
        %v3457 = vpop.permute.xlu0 %3456
        %v3458 = vlaneseq
        %v3459 = vshrl.u32 %v3458, 7
        %v3460 = vsub.s32 7, %v3459
        %v3461 = vrot.slane %v3018, %v3460
        %3463 = vbcast.lane.b32.xlu0 %v3461, 256
        %v3464 = vpop.permute.xlu0 %3463
        %s3466 = sor.u32 256, 8
        %3467 = vbcast.lane.b32.xlu0 %v3461, %s3466
        %v3468 = vpop.permute.xlu0 %3467
        %s3470 = sor.u32 256, 16
        %3471 = vbcast.lane.b32.xlu0 %v3461, %s3470
        %v3472 = vpop.permute.xlu0 %3471
        %s3474 = sor.u32 256, 24
        %3475 = vbcast.lane.b32.xlu0 %v3461, %s3474
        %v3476 = vpop.permute.xlu0 %3475
        %v3477 = vlaneseq
        %v3478 = vshrl.u32 %v3477, 7
        %v3479 = vsub.s32 0, %v3478
        %v3480 = vrot.slane %v3020, %v3479
        %3482 = vbcast.lane.b32.xlu0 %v3480, 256
        %v3483 = vpop.permute.xlu0 %3482
        %s3485 = sor.u32 256, 8
        %3486 = vbcast.lane.b32.xlu0 %v3480, %s3485
        %v3487 = vpop.permute.xlu0 %3486
        %s3489 = sor.u32 256, 16
        %3490 = vbcast.lane.b32.xlu0 %v3480, %s3489
        %v3491 = vpop.permute.xlu0 %3490
        %s3493 = sor.u32 256, 24
        %3494 = vbcast.lane.b32.xlu0 %v3480, %s3493
        %v3495 = vpop.permute.xlu0 %3494
        %v3496 = vlaneseq
        %v3497 = vshrl.u32 %v3496, 7
        %v3498 = vsub.s32 1, %v3497
        %v3499 = vrot.slane %v3020, %v3498
        %3501 = vbcast.lane.b32.xlu0 %v3499, 256
        %v3502 = vpop.permute.xlu0 %3501
        %s3504 = sor.u32 256, 8
        %3505 = vbcast.lane.b32.xlu0 %v3499, %s3504
        %v3506 = vpop.permute.xlu0 %3505
        %s3508 = sor.u32 256, 16
        %3509 = vbcast.lane.b32.xlu0 %v3499, %s3508
        %v3510 = vpop.permute.xlu0 %3509
        %s3512 = sor.u32 256, 24
        %3513 = vbcast.lane.b32.xlu0 %v3499, %s3512
        %v3514 = vpop.permute.xlu0 %3513
        %v3515 = vlaneseq
        %v3516 = vshrl.u32 %v3515, 7
        %v3517 = vsub.s32 2, %v3516
        %v3518 = vrot.slane %v3020, %v3517
        %3520 = vbcast.lane.b32.xlu0 %v3518, 256
        %v3521 = vpop.permute.xlu0 %3520
        %s3523 = sor.u32 256, 8
        %3524 = vbcast.lane.b32.xlu0 %v3518, %s3523
        %v3525 = vpop.permute.xlu0 %3524
        %s3527 = sor.u32 256, 16
        %3528 = vbcast.lane.b32.xlu0 %v3518, %s3527
        %v3529 = vpop.permute.xlu0 %3528
        %s3531 = sor.u32 256, 24
        %3532 = vbcast.lane.b32.xlu0 %v3518, %s3531
        %v3533 = vpop.permute.xlu0 %3532
        %v3534 = vlaneseq
        %v3535 = vshrl.u32 %v3534, 7
        %v3536 = vsub.s32 3, %v3535
        %v3537 = vrot.slane %v3020, %v3536
        %3539 = vbcast.lane.b32.xlu0 %v3537, 256
        %v3540 = vpop.permute.xlu0 %3539
        %s3542 = sor.u32 256, 8
        %3543 = vbcast.lane.b32.xlu0 %v3537, %s3542
        %v3544 = vpop.permute.xlu0 %3543
        %s3546 = sor.u32 256, 16
        %3547 = vbcast.lane.b32.xlu0 %v3537, %s3546
        %v3548 = vpop.permute.xlu0 %3547
        %s3550 = sor.u32 256, 24
        %3551 = vbcast.lane.b32.xlu0 %v3537, %s3550
        %v3552 = vpop.permute.xlu0 %3551
        %v3553 = vlaneseq
        %v3554 = vshrl.u32 %v3553, 7
        %v3555 = vsub.s32 4, %v3554
        %v3556 = vrot.slane %v3020, %v3555
        %3558 = vbcast.lane.b32.xlu0 %v3556, 256
        %v3559 = vpop.permute.xlu0 %3558
        %s3561 = sor.u32 256, 8
        %3562 = vbcast.lane.b32.xlu0 %v3556, %s3561
        %v3563 = vpop.permute.xlu0 %3562
        %s3565 = sor.u32 256, 16
        %3566 = vbcast.lane.b32.xlu0 %v3556, %s3565
        %v3567 = vpop.permute.xlu0 %3566
        %s3569 = sor.u32 256, 24
        %3570 = vbcast.lane.b32.xlu0 %v3556, %s3569
        %v3571 = vpop.permute.xlu0 %3570
        %v3572 = vlaneseq
        %v3573 = vshrl.u32 %v3572, 7
        %v3574 = vsub.s32 5, %v3573
        %v3575 = vrot.slane %v3020, %v3574
        %3577 = vbcast.lane.b32.xlu0 %v3575, 256
        %v3578 = vpop.permute.xlu0 %3577
        %s3580 = sor.u32 256, 8
        %3581 = vbcast.lane.b32.xlu0 %v3575, %s3580
        %v3582 = vpop.permute.xlu0 %3581
        %s3584 = sor.u32 256, 16
        %3585 = vbcast.lane.b32.xlu0 %v3575, %s3584
        %v3586 = vpop.permute.xlu0 %3585
        %s3588 = sor.u32 256, 24
        %3589 = vbcast.lane.b32.xlu0 %v3575, %s3588
        %v3590 = vpop.permute.xlu0 %3589
        %v3591 = vlaneseq
        %v3592 = vshrl.u32 %v3591, 7
        %v3593 = vsub.s32 6, %v3592
        %v3594 = vrot.slane %v3020, %v3593
        %3596 = vbcast.lane.b32.xlu0 %v3594, 256
        %v3597 = vpop.permute.xlu0 %3596
        %s3599 = sor.u32 256, 8
        %3600 = vbcast.lane.b32.xlu0 %v3594, %s3599
        %v3601 = vpop.permute.xlu0 %3600
        %s3603 = sor.u32 256, 16
        %3604 = vbcast.lane.b32.xlu0 %v3594, %s3603
        %v3605 = vpop.permute.xlu0 %3604
        %s3607 = sor.u32 256, 24
        %3608 = vbcast.lane.b32.xlu0 %v3594, %s3607
        %v3609 = vpop.permute.xlu0 %3608
        %v3610 = vlaneseq
        %v3611 = vshrl.u32 %v3610, 7
        %v3612 = vsub.s32 7, %v3611
        %v3613 = vrot.slane %v3020, %v3612
        %3615 = vbcast.lane.b32.xlu0 %v3613, 256
        %v3616 = vpop.permute.xlu0 %3615
        %s3618 = sor.u32 256, 8
        %3619 = vbcast.lane.b32.xlu0 %v3613, %s3618
        %v3620 = vpop.permute.xlu0 %3619
        %s3622 = sor.u32 256, 16
        %3623 = vbcast.lane.b32.xlu0 %v3613, %s3622
        %v3624 = vpop.permute.xlu0 %3623
        %s3626 = sor.u32 256, 24
        %3627 = vbcast.lane.b32.xlu0 %v3613, %s3626
        %v3628 = vpop.permute.xlu0 %3627
        %v3629 = vmul.f32 %v226, %v3027
        %v3630 = vmul.f32 %v227, %v3027
        %v3631 = vmul.f32 %v228, %v3031
        %v3632 = vmul.f32 %v229, %v3031
        %v3633 = vmul.f32 %v230, %v3035
        %v3634 = vmul.f32 %v231, %v3035
        %v3635 = vmul.f32 %v232, %v3039
        %v3636 = vmul.f32 %v233, %v3039
        %v3637 = vmul.f32 %v234, %v3046
        %v3638 = vmul.f32 %v235, %v3046
        %v3639 = vmul.f32 %v236, %v3050
        %v3640 = vmul.f32 %v237, %v3050
        %v3641 = vmul.f32 %v238, %v3054
        %v3642 = vmul.f32 %v239, %v3054
        %v3643 = vmul.f32 %v240, %v3058
        %v3644 = vmul.f32 %v241, %v3058
        %v3645 = vmul.f32 %v242, %v3065
        %v3646 = vmul.f32 %v243, %v3065
        %v3647 = vmul.f32 %v244, %v3069
        %v3648 = vmul.f32 %v245, %v3069
        %v3649 = vmul.f32 %v246, %v3073
        %v3650 = vmul.f32 %v247, %v3073
        %v3651 = vmul.f32 %v248, %v3077
        %v3652 = vmul.f32 %v249, %v3077
        %v3653 = vmul.f32 %v250, %v3084
        %v3654 = vmul.f32 %v251, %v3084
        %v3655 = vmul.f32 %v252, %v3088
        %v3656 = vmul.f32 %v253, %v3088
        %v3657 = vmul.f32 %v254, %v3092
        %v3658 = vmul.f32 %v255, %v3092
        %v3659 = vmul.f32 %v256, %v3096
        %v3660 = vmul.f32 %v257, %v3096
        %v3661 = vmul.f32 %v258, %v3103
        %v3662 = vmul.f32 %v259, %v3103
        %v3663 = vmul.f32 %v260, %v3107
        %v3664 = vmul.f32 %v261, %v3107
        %v3665 = vmul.f32 %v262, %v3111
        %v3666 = vmul.f32 %v263, %v3111
        %v3667 = vmul.f32 %v264, %v3115
        %v3668 = vmul.f32 %v265, %v3115
        %v3669 = vmul.f32 %v266, %v3122
        %v3670 = vmul.f32 %v267, %v3122
        %v3671 = vmul.f32 %v268, %v3126
        %v3672 = vmul.f32 %v269, %v3126
        %v3673 = vmul.f32 %v270, %v3130
        %v3674 = vmul.f32 %v271, %v3130
        %v3675 = vmul.f32 %v272, %v3134
        %v3676 = vmul.f32 %v273, %v3134
        %v3677 = vmul.f32 %v274, %v3141
        %v3678 = vmul.f32 %v275, %v3141
        %v3679 = vmul.f32 %v276, %v3145
        %v3680 = vmul.f32 %v277, %v3145
        %v3681 = vmul.f32 %v278, %v3149
        %v3682 = vmul.f32 %v279, %v3149
        %v3683 = vmul.f32 %v280, %v3153
        %v3684 = vmul.f32 %v281, %v3153
        %v3685 = vmul.f32 %v282, %v3160
        %v3686 = vmul.f32 %v283, %v3160
        %v3687 = vmul.f32 %v284, %v3164
        %v3688 = vmul.f32 %v285, %v3164
        %v3689 = vmul.f32 %v286, %v3168
        %v3690 = vmul.f32 %v287, %v3168
        %v3691 = vmul.f32 %v288, %v3172
        %v3692 = vmul.f32 %v289, %v3172
        %v3693 = vmul.f32 %v290, %v3179
        %v3694 = vmul.f32 %v291, %v3179
        %v3695 = vmul.f32 %v292, %v3183
        %v3696 = vmul.f32 %v293, %v3183
        %v3697 = vmul.f32 %v294, %v3187
        %v3698 = vmul.f32 %v295, %v3187
        %v3699 = vmul.f32 %v296, %v3191
        %v3700 = vmul.f32 %v297, %v3191
        %v3701 = vmul.f32 %v298, %v3198
        %v3702 = vmul.f32 %v299, %v3198
        %v3703 = vmul.f32 %v300, %v3202
        %v3704 = vmul.f32 %v301, %v3202
        %v3705 = vmul.f32 %v302, %v3206
        %v3706 = vmul.f32 %v303, %v3206
        %v3707 = vmul.f32 %v304, %v3210
        %v3708 = vmul.f32 %v305, %v3210
        %v3709 = vmul.f32 %v306, %v3217
        %v3710 = vmul.f32 %v307, %v3217
        %v3711 = vmul.f32 %v308, %v3221
        %v3712 = vmul.f32 %v309, %v3221
        %v3713 = vmul.f32 %v310, %v3225
        %v3714 = vmul.f32 %v311, %v3225
        %v3715 = vmul.f32 %v312, %v3229
        %v3716 = vmul.f32 %v313, %v3229
        %v3717 = vmul.f32 %v314, %v3236
        %v3718 = vmul.f32 %v315, %v3236
        %v3719 = vmul.f32 %v316, %v3240
        %v3720 = vmul.f32 %v317, %v3240
        %v3721 = vmul.f32 %v318, %v3244
        %v3722 = vmul.f32 %v319, %v3244
        %v3723 = vmul.f32 %v320, %v3248
        %v3724 = vmul.f32 %v321, %v3248
        %v3725 = vmul.f32 %v322, %v3255
        %v3726 = vmul.f32 %v323, %v3255
        %v3727 = vmul.f32 %v324, %v3259
        %v3728 = vmul.f32 %v325, %v3259
        %v3729 = vmul.f32 %v326, %v3263
        %v3730 = vmul.f32 %v327, %v3263
        %v3731 = vmul.f32 %v328, %v3267
        %v3732 = vmul.f32 %v329, %v3267
        %v3733 = vmul.f32 %v330, %v3274
        %v3734 = vmul.f32 %v331, %v3274
        %v3735 = vmul.f32 %v332, %v3278
        %v3736 = vmul.f32 %v333, %v3278
        %v3737 = vmul.f32 %v334, %v3282
        %v3738 = vmul.f32 %v335, %v3282
        %v3739 = vmul.f32 %v336, %v3286
        %v3740 = vmul.f32 %v337, %v3286
        %v3741 = vmul.f32 %v338, %v3293
        %v3742 = vmul.f32 %v339, %v3293
        %v3743 = vmul.f32 %v340, %v3297
        %v3744 = vmul.f32 %v341, %v3297
        %v3745 = vmul.f32 %v342, %v3301
        %v3746 = vmul.f32 %v343, %v3301
        %v3747 = vmul.f32 %v344, %v3305
        %v3748 = vmul.f32 %v345, %v3305
        %v3749 = vmul.f32 %v346, %v3312
        %v3750 = vmul.f32 %v347, %v3312
        %v3751 = vmul.f32 %v348, %v3316
        %v3752 = vmul.f32 %v349, %v3316
        %v3753 = vmul.f32 %v350, %v3320
        %v3754 = vmul.f32 %v351, %v3320
        %v3755 = vmul.f32 %v352, %v3324
        %v3756 = vmul.f32 %v353, %v3324
        %v3757 = vmul.f32 %v354, %v3331
        %v3758 = vmul.f32 %v355, %v3331
        %v3759 = vmul.f32 %v356, %v3335
        %v3760 = vmul.f32 %v357, %v3335
        %v3761 = vmul.f32 %v358, %v3339
        %v3762 = vmul.f32 %v359, %v3339
        %v3763 = vmul.f32 %v360, %v3343
        %v3764 = vmul.f32 %v361, %v3343
        %v3765 = vmul.f32 %v362, %v3350
        %v3766 = vmul.f32 %v363, %v3350
        %v3767 = vmul.f32 %v364, %v3354
        %v3768 = vmul.f32 %v365, %v3354
        %v3769 = vmul.f32 %v366, %v3358
        %v3770 = vmul.f32 %v367, %v3358
        %v3771 = vmul.f32 %v368, %v3362
        %v3772 = vmul.f32 %v369, %v3362
        %v3773 = vmul.f32 %v370, %v3369
        %v3774 = vmul.f32 %v371, %v3369
        %v3775 = vmul.f32 %v372, %v3373
        %v3776 = vmul.f32 %v373, %v3373
        %v3777 = vmul.f32 %v374, %v3377
        %v3778 = vmul.f32 %v375, %v3377
        %v3779 = vmul.f32 %v376, %v3381
        %v3780 = vmul.f32 %v377, %v3381
        %v3781 = vmul.f32 %v378, %v3388
        %v3782 = vmul.f32 %v379, %v3388
        %v3783 = vmul.f32 %v380, %v3392
        %v3784 = vmul.f32 %v381, %v3392
        %v3785 = vmul.f32 %v382, %v3396
        %v3786 = vmul.f32 %v383, %v3396
        %v3787 = vmul.f32 %v384, %v3400
        %v3788 = vmul.f32 %v385, %v3400
        %v3789 = vmul.f32 %v386, %v3407
        %v3790 = vmul.f32 %v387, %v3407
        %v3791 = vmul.f32 %v388, %v3411
        %v3792 = vmul.f32 %v389, %v3411
        %v3793 = vmul.f32 %v390, %v3415
        %v3794 = vmul.f32 %v391, %v3415
        %v3795 = vmul.f32 %v392, %v3419
        %v3796 = vmul.f32 %v393, %v3419
        %v3797 = vmul.f32 %v394, %v3426
        %v3798 = vmul.f32 %v395, %v3426
        %v3799 = vmul.f32 %v396, %v3430
        %v3800 = vmul.f32 %v397, %v3430
        %v3801 = vmul.f32 %v398, %v3434
        %v3802 = vmul.f32 %v399, %v3434
        %v3803 = vmul.f32 %v400, %v3438
        %v3804 = vmul.f32 %v401, %v3438
        %v3805 = vmul.f32 %v402, %v3445
        %v3806 = vmul.f32 %v403, %v3445
        %v3807 = vmul.f32 %v404, %v3449
        %v3808 = vmul.f32 %v405, %v3449
        %v3809 = vmul.f32 %v406, %v3453
        %v3810 = vmul.f32 %v407, %v3453
        %v3811 = vmul.f32 %v408, %v3457
        %v3812 = vmul.f32 %v409, %v3457
        %v3813 = vmul.f32 %v410, %v3464
        %v3814 = vmul.f32 %v411, %v3464
        %v3815 = vmul.f32 %v412, %v3468
        %v3816 = vmul.f32 %v413, %v3468
        %v3817 = vmul.f32 %v414, %v3472
        %v3818 = vmul.f32 %v415, %v3472
        %v3819 = vmul.f32 %v416, %v3476
        %v3820 = vmul.f32 %v417, %v3476
        %v3821 = vmul.f32 %v418, %v3483
        %v3822 = vmul.f32 %v419, %v3483
        %v3823 = vmul.f32 %v420, %v3487
        %v3824 = vmul.f32 %v421, %v3487
        %v3825 = vmul.f32 %v422, %v3491
        %v3826 = vmul.f32 %v423, %v3491
        %v3827 = vmul.f32 %v424, %v3495
        %v3828 = vmul.f32 %v425, %v3495
        %v3829 = vmul.f32 %v426, %v3502
        %v3830 = vmul.f32 %v427, %v3502
        %v3831 = vmul.f32 %v428, %v3506
        %v3832 = vmul.f32 %v429, %v3506
        %v3833 = vmul.f32 %v430, %v3510
        %v3834 = vmul.f32 %v431, %v3510
        %v3835 = vmul.f32 %v432, %v3514
        %v3836 = vmul.f32 %v433, %v3514
        %v3837 = vmul.f32 %v434, %v3521
        %v3838 = vmul.f32 %v435, %v3521
        %v3839 = vmul.f32 %v436, %v3525
        %v3840 = vmul.f32 %v437, %v3525
        %v3841 = vmul.f32 %v438, %v3529
        %v3842 = vmul.f32 %v439, %v3529
        %v3843 = vmul.f32 %v440, %v3533
        %v3844 = vmul.f32 %v441, %v3533
        %v3845 = vmul.f32 %v442, %v3540
        %v3846 = vmul.f32 %v443, %v3540
        %v3847 = vmul.f32 %v444, %v3544
        %v3848 = vmul.f32 %v445, %v3544
        %v3849 = vmul.f32 %v446, %v3548
        %v3850 = vmul.f32 %v447, %v3548
        %v3851 = vmul.f32 %v448, %v3552
        %v3852 = vmul.f32 %v449, %v3552
        %v3853 = vmul.f32 %v450, %v3559
        %v3854 = vmul.f32 %v451, %v3559
        %v3855 = vmul.f32 %v452, %v3563
        %v3856 = vmul.f32 %v453, %v3563
        %v3857 = vmul.f32 %v454, %v3567
        %v3858 = vmul.f32 %v455, %v3567
        %v3859 = vmul.f32 %v456, %v3571
        %v3860 = vmul.f32 %v457, %v3571
        %v3861 = vmul.f32 %v458, %v3578
        %v3862 = vmul.f32 %v459, %v3578
        %v3863 = vmul.f32 %v460, %v3582
        %v3864 = vmul.f32 %v461, %v3582
        %v3865 = vmul.f32 %v462, %v3586
        %v3866 = vmul.f32 %v463, %v3586
        %v3867 = vmul.f32 %v464, %v3590
        %v3868 = vmul.f32 %v465, %v3590
        %v3869 = vmul.f32 %v466, %v3597
        %v3870 = vmul.f32 %v467, %v3597
        %v3871 = vmul.f32 %v468, %v3601
        %v3872 = vmul.f32 %v469, %v3601
        %v3873 = vmul.f32 %v470, %v3605
        %v3874 = vmul.f32 %v471, %v3605
        %v3875 = vmul.f32 %v472, %v3609
        %v3876 = vmul.f32 %v473, %v3609
        %v3877 = vmul.f32 %v474, %v3616
        %v3878 = vmul.f32 %v475, %v3616
        %v3879 = vmul.f32 %v476, %v3620
        %v3880 = vmul.f32 %v477, %v3620
        %v3881 = vmul.f32 %v478, %v3624
        %v3882 = vmul.f32 %v479, %v3624
        %v3883 = vmul.f32 %v480, %v3628
        %v3884 = vmul.f32 %v481, %v3628
        %3885 = vst [vmem:[%s211] sm:$0xff] %v3629
        %3886 = vst [vmem:[%s211 + $0x8] sm:$0xff] %v3630
        %3887 = vst [vmem:[%s211 + $0x10] sm:$0xff] %v3631
        %3888 = vst [vmem:[%s211 + $0x18] sm:$0xff] %v3632
        %3889 = vst [vmem:[%s211 + $0x20] sm:$0xff] %v3633
        %3890 = vst [vmem:[%s211 + $0x28] sm:$0xff] %v3634
        %3891 = vst [vmem:[%s211 + $0x30] sm:$0xff] %v3635
        %3892 = vst [vmem:[%s211 + $0x38] sm:$0xff] %v3636
        %3893 = vst [vmem:[%s211 + $0x40] sm:$0xff] %v3637
        %3894 = vst [vmem:[%s211 + $0x48] sm:$0xff] %v3638
        %3895 = vst [vmem:[%s211 + $0x50] sm:$0xff] %v3639
        %3896 = vst [vmem:[%s211 + $0x58] sm:$0xff] %v3640
        %3897 = vst [vmem:[%s211 + $0x60] sm:$0xff] %v3641
        %3898 = vst [vmem:[%s211 + $0x68] sm:$0xff] %v3642
        %3899 = vst [vmem:[%s211 + $0x70] sm:$0xff] %v3643
        %3900 = vst [vmem:[%s211 + $0x78] sm:$0xff] %v3644
        %3901 = vst [vmem:[%s211 + $0x80] sm:$0xff] %v3645
        %3902 = vst [vmem:[%s211 + $0x88] sm:$0xff] %v3646
        %3903 = vst [vmem:[%s211 + $0x90] sm:$0xff] %v3647
        %3904 = vst [vmem:[%s211 + $0x98] sm:$0xff] %v3648
        %3905 = vst [vmem:[%s211 + $0xa0] sm:$0xff] %v3649
        %3906 = vst [vmem:[%s211 + $0xa8] sm:$0xff] %v3650
        %3907 = vst [vmem:[%s211 + $0xb0] sm:$0xff] %v3651
        %3908 = vst [vmem:[%s211 + $0xb8] sm:$0xff] %v3652
        %3909 = vst [vmem:[%s211 + $0xc0] sm:$0xff] %v3653
        %3910 = vst [vmem:[%s211 + $0xc8] sm:$0xff] %v3654
        %3911 = vst [vmem:[%s211 + $0xd0] sm:$0xff] %v3655
        %3912 = vst [vmem:[%s211 + $0xd8] sm:$0xff] %v3656
        %3913 = vst [vmem:[%s211 + $0xe0] sm:$0xff] %v3657
        %3914 = vst [vmem:[%s211 + $0xe8] sm:$0xff] %v3658
        %3915 = vst [vmem:[%s211 + $0xf0] sm:$0xff] %v3659
        %3916 = vst [vmem:[%s211 + $0xf8] sm:$0xff] %v3660
        %3917 = vst [vmem:[%s211 + $0x100] sm:$0xff] %v3661
        %3918 = vst [vmem:[%s211 + $0x108] sm:$0xff] %v3662
        %3919 = vst [vmem:[%s211 + $0x110] sm:$0xff] %v3663
        %3920 = vst [vmem:[%s211 + $0x118] sm:$0xff] %v3664
        %3921 = vst [vmem:[%s211 + $0x120] sm:$0xff] %v3665
        %3922 = vst [vmem:[%s211 + $0x128] sm:$0xff] %v3666
        %3923 = vst [vmem:[%s211 + $0x130] sm:$0xff] %v3667
        %3924 = vst [vmem:[%s211 + $0x138] sm:$0xff] %v3668
        %3925 = vst [vmem:[%s211 + $0x140] sm:$0xff] %v3669
        %3926 = vst [vmem:[%s211 + $0x148] sm:$0xff] %v3670
        %3927 = vst [vmem:[%s211 + $0x150] sm:$0xff] %v3671
        %3928 = vst [vmem:[%s211 + $0x158] sm:$0xff] %v3672
        %3929 = vst [vmem:[%s211 + $0x160] sm:$0xff] %v3673
        %3930 = vst [vmem:[%s211 + $0x168] sm:$0xff] %v3674
        %3931 = vst [vmem:[%s211 + $0x170] sm:$0xff] %v3675
        %3932 = vst [vmem:[%s211 + $0x178] sm:$0xff] %v3676
        %3933 = vst [vmem:[%s211 + $0x180] sm:$0xff] %v3677
        %3934 = vst [vmem:[%s211 + $0x188] sm:$0xff] %v3678
        %3935 = vst [vmem:[%s211 + $0x190] sm:$0xff] %v3679
        %3936 = vst [vmem:[%s211 + $0x198] sm:$0xff] %v3680
        %3937 = vst [vmem:[%s211 + $0x1a0] sm:$0xff] %v3681
        %3938 = vst [vmem:[%s211 + $0x1a8] sm:$0xff] %v3682
        %3939 = vst [vmem:[%s211 + $0x1b0] sm:$0xff] %v3683
        %3940 = vst [vmem:[%s211 + $0x1b8] sm:$0xff] %v3684
        %3941 = vst [vmem:[%s211 + $0x1c0] sm:$0xff] %v3685
        %3942 = vst [vmem:[%s211 + $0x1c8] sm:$0xff] %v3686
        %3943 = vst [vmem:[%s211 + $0x1d0] sm:$0xff] %v3687
        %3944 = vst [vmem:[%s211 + $0x1d8] sm:$0xff] %v3688
        %3945 = vst [vmem:[%s211 + $0x1e0] sm:$0xff] %v3689
        %3946 = vst [vmem:[%s211 + $0x1e8] sm:$0xff] %v3690
        %3947 = vst [vmem:[%s211 + $0x1f0] sm:$0xff] %v3691
        %3948 = vst [vmem:[%s211 + $0x1f8] sm:$0xff] %v3692
        %3949 = vst [vmem:[%s211 + $0x200] sm:$0xff] %v3693
        %3950 = vst [vmem:[%s211 + $0x208] sm:$0xff] %v3694
        %3951 = vst [vmem:[%s211 + $0x210] sm:$0xff] %v3695
        %3952 = vst [vmem:[%s211 + $0x218] sm:$0xff] %v3696
        %3953 = vst [vmem:[%s211 + $0x220] sm:$0xff] %v3697
        %3954 = vst [vmem:[%s211 + $0x228] sm:$0xff] %v3698
        %3955 = vst [vmem:[%s211 + $0x230] sm:$0xff] %v3699
        %3956 = vst [vmem:[%s211 + $0x238] sm:$0xff] %v3700
        %3957 = vst [vmem:[%s211 + $0x240] sm:$0xff] %v3701
        %3958 = vst [vmem:[%s211 + $0x248] sm:$0xff] %v3702
        %3959 = vst [vmem:[%s211 + $0x250] sm:$0xff] %v3703
        %3960 = vst [vmem:[%s211 + $0x258] sm:$0xff] %v3704
        %3961 = vst [vmem:[%s211 + $0x260] sm:$0xff] %v3705
        %3962 = vst [vmem:[%s211 + $0x268] sm:$0xff] %v3706
        %3963 = vst [vmem:[%s211 + $0x270] sm:$0xff] %v3707
        %3964 = vst [vmem:[%s211 + $0x278] sm:$0xff] %v3708
        %3965 = vst [vmem:[%s211 + $0x280] sm:$0xff] %v3709
        %3966 = vst [vmem:[%s211 + $0x288] sm:$0xff] %v3710
        %3967 = vst [vmem:[%s211 + $0x290] sm:$0xff] %v3711
        %3968 = vst [vmem:[%s211 + $0x298] sm:$0xff] %v3712
        %3969 = vst [vmem:[%s211 + $0x2a0] sm:$0xff] %v3713
        %3970 = vst [vmem:[%s211 + $0x2a8] sm:$0xff] %v3714
        %3971 = vst [vmem:[%s211 + $0x2b0] sm:$0xff] %v3715
        %3972 = vst [vmem:[%s211 + $0x2b8] sm:$0xff] %v3716
        %3973 = vst [vmem:[%s211 + $0x2c0] sm:$0xff] %v3717
        %3974 = vst [vmem:[%s211 + $0x2c8] sm:$0xff] %v3718
        %3975 = vst [vmem:[%s211 + $0x2d0] sm:$0xff] %v3719
        %3976 = vst [vmem:[%s211 + $0x2d8] sm:$0xff] %v3720
        %3977 = vst [vmem:[%s211 + $0x2e0] sm:$0xff] %v3721
        %3978 = vst [vmem:[%s211 + $0x2e8] sm:$0xff] %v3722
        %3979 = vst [vmem:[%s211 + $0x2f0] sm:$0xff] %v3723
        %3980 = vst [vmem:[%s211 + $0x2f8] sm:$0xff] %v3724
        %3981 = vst [vmem:[%s211 + $0x300] sm:$0xff] %v3725
        %3982 = vst [vmem:[%s211 + $0x308] sm:$0xff] %v3726
        %3983 = vst [vmem:[%s211 + $0x310] sm:$0xff] %v3727
        %3984 = vst [vmem:[%s211 + $0x318] sm:$0xff] %v3728
        %3985 = vst [vmem:[%s211 + $0x320] sm:$0xff] %v3729
        %3986 = vst [vmem:[%s211 + $0x328] sm:$0xff] %v3730
        %3987 = vst [vmem:[%s211 + $0x330] sm:$0xff] %v3731
        %3988 = vst [vmem:[%s211 + $0x338] sm:$0xff] %v3732
        %3989 = vst [vmem:[%s211 + $0x340] sm:$0xff] %v3733
        %3990 = vst [vmem:[%s211 + $0x348] sm:$0xff] %v3734
        %3991 = vst [vmem:[%s211 + $0x350] sm:$0xff] %v3735
        %3992 = vst [vmem:[%s211 + $0x358] sm:$0xff] %v3736
        %3993 = vst [vmem:[%s211 + $0x360] sm:$0xff] %v3737
        %3994 = vst [vmem:[%s211 + $0x368] sm:$0xff] %v3738
        %3995 = vst [vmem:[%s211 + $0x370] sm:$0xff] %v3739
        %3996 = vst [vmem:[%s211 + $0x378] sm:$0xff] %v3740
        %3997 = vst [vmem:[%s211 + $0x380] sm:$0xff] %v3741
        %3998 = vst [vmem:[%s211 + $0x388] sm:$0xff] %v3742
        %3999 = vst [vmem:[%s211 + $0x390] sm:$0xff] %v3743
        %4000 = vst [vmem:[%s211 + $0x398] sm:$0xff] %v3744
        %4001 = vst [vmem:[%s211 + $0x3a0] sm:$0xff] %v3745
        %4002 = vst [vmem:[%s211 + $0x3a8] sm:$0xff] %v3746
        %4003 = vst [vmem:[%s211 + $0x3b0] sm:$0xff] %v3747
        %4004 = vst [vmem:[%s211 + $0x3b8] sm:$0xff] %v3748
        %4005 = vst [vmem:[%s211 + $0x3c0] sm:$0xff] %v3749
        %4006 = vst [vmem:[%s211 + $0x3c8] sm:$0xff] %v3750
        %4007 = vst [vmem:[%s211 + $0x3d0] sm:$0xff] %v3751
        %4008 = vst [vmem:[%s211 + $0x3d8] sm:$0xff] %v3752
        %4009 = vst [vmem:[%s211 + $0x3e0] sm:$0xff] %v3753
        %4010 = vst [vmem:[%s211 + $0x3e8] sm:$0xff] %v3754
        %4011 = vst [vmem:[%s211 + $0x3f0] sm:$0xff] %v3755
        %4012 = vst [vmem:[%s211 + $0x3f8] sm:$0xff] %v3756
        %4013 = vst [vmem:[%s211 + $0x400] sm:$0xff] %v3757
        %4014 = vst [vmem:[%s211 + $0x408] sm:$0xff] %v3758
        %4015 = vst [vmem:[%s211 + $0x410] sm:$0xff] %v3759
        %4016 = vst [vmem:[%s211 + $0x418] sm:$0xff] %v3760
        %4017 = vst [vmem:[%s211 + $0x420] sm:$0xff] %v3761
        %4018 = vst [vmem:[%s211 + $0x428] sm:$0xff] %v3762
        %4019 = vst [vmem:[%s211 + $0x430] sm:$0xff] %v3763
        %4020 = vst [vmem:[%s211 + $0x438] sm:$0xff] %v3764
        %4021 = vst [vmem:[%s211 + $0x440] sm:$0xff] %v3765
        %4022 = vst [vmem:[%s211 + $0x448] sm:$0xff] %v3766
        %4023 = vst [vmem:[%s211 + $0x450] sm:$0xff] %v3767
        %4024 = vst [vmem:[%s211 + $0x458] sm:$0xff] %v3768
        %4025 = vst [vmem:[%s211 + $0x460] sm:$0xff] %v3769
        %4026 = vst [vmem:[%s211 + $0x468] sm:$0xff] %v3770
        %4027 = vst [vmem:[%s211 + $0x470] sm:$0xff] %v3771
        %4028 = vst [vmem:[%s211 + $0x478] sm:$0xff] %v3772
        %4029 = vst [vmem:[%s211 + $0x480] sm:$0xff] %v3773
        %4030 = vst [vmem:[%s211 + $0x488] sm:$0xff] %v3774
        %4031 = vst [vmem:[%s211 + $0x490] sm:$0xff] %v3775
        %4032 = vst [vmem:[%s211 + $0x498] sm:$0xff] %v3776
        %4033 = vst [vmem:[%s211 + $0x4a0] sm:$0xff] %v3777
        %4034 = vst [vmem:[%s211 + $0x4a8] sm:$0xff] %v3778
        %4035 = vst [vmem:[%s211 + $0x4b0] sm:$0xff] %v3779
        %4036 = vst [vmem:[%s211 + $0x4b8] sm:$0xff] %v3780
        %4037 = vst [vmem:[%s211 + $0x4c0] sm:$0xff] %v3781
        %4038 = vst [vmem:[%s211 + $0x4c8] sm:$0xff] %v3782
        %4039 = vst [vmem:[%s211 + $0x4d0] sm:$0xff] %v3783
        %4040 = vst [vmem:[%s211 + $0x4d8] sm:$0xff] %v3784
        %4041 = vst [vmem:[%s211 + $0x4e0] sm:$0xff] %v3785
        %4042 = vst [vmem:[%s211 + $0x4e8] sm:$0xff] %v3786
        %4043 = vst [vmem:[%s211 + $0x4f0] sm:$0xff] %v3787
        %4044 = vst [vmem:[%s211 + $0x4f8] sm:$0xff] %v3788
        %4045 = vst [vmem:[%s211 + $0x500] sm:$0xff] %v3789
        %4046 = vst [vmem:[%s211 + $0x508] sm:$0xff] %v3790
        %4047 = vst [vmem:[%s211 + $0x510] sm:$0xff] %v3791
        %4048 = vst [vmem:[%s211 + $0x518] sm:$0xff] %v3792
        %4049 = vst [vmem:[%s211 + $0x520] sm:$0xff] %v3793
        %4050 = vst [vmem:[%s211 + $0x528] sm:$0xff] %v3794
        %4051 = vst [vmem:[%s211 + $0x530] sm:$0xff] %v3795
        %4052 = vst [vmem:[%s211 + $0x538] sm:$0xff] %v3796
        %4053 = vst [vmem:[%s211 + $0x540] sm:$0xff] %v3797
        %4054 = vst [vmem:[%s211 + $0x548] sm:$0xff] %v3798
        %4055 = vst [vmem:[%s211 + $0x550] sm:$0xff] %v3799
        %4056 = vst [vmem:[%s211 + $0x558] sm:$0xff] %v3800
        %4057 = vst [vmem:[%s211 + $0x560] sm:$0xff] %v3801
        %4058 = vst [vmem:[%s211 + $0x568] sm:$0xff] %v3802
        %4059 = vst [vmem:[%s211 + $0x570] sm:$0xff] %v3803
        %4060 = vst [vmem:[%s211 + $0x578] sm:$0xff] %v3804
        %4061 = vst [vmem:[%s211 + $0x580] sm:$0xff] %v3805
        %4062 = vst [vmem:[%s211 + $0x588] sm:$0xff] %v3806
        %4063 = vst [vmem:[%s211 + $0x590] sm:$0xff] %v3807
        %4064 = vst [vmem:[%s211 + $0x598] sm:$0xff] %v3808
        %4065 = vst [vmem:[%s211 + $0x5a0] sm:$0xff] %v3809
        %4066 = vst [vmem:[%s211 + $0x5a8] sm:$0xff] %v3810
        %4067 = vst [vmem:[%s211 + $0x5b0] sm:$0xff] %v3811
        %4068 = vst [vmem:[%s211 + $0x5b8] sm:$0xff] %v3812
        %4069 = vst [vmem:[%s211 + $0x5c0] sm:$0xff] %v3813
        %4070 = vst [vmem:[%s211 + $0x5c8] sm:$0xff] %v3814
        %4071 = vst [vmem:[%s211 + $0x5d0] sm:$0xff] %v3815
        %4072 = vst [vmem:[%s211 + $0x5d8] sm:$0xff] %v3816
        %4073 = vst [vmem:[%s211 + $0x5e0] sm:$0xff] %v3817
        %4074 = vst [vmem:[%s211 + $0x5e8] sm:$0xff] %v3818
        %4075 = vst [vmem:[%s211 + $0x5f0] sm:$0xff] %v3819
        %4076 = vst [vmem:[%s211 + $0x5f8] sm:$0xff] %v3820
        %4077 = vst [vmem:[%s211 + $0x600] sm:$0xff] %v3821
        %4078 = vst [vmem:[%s211 + $0x608] sm:$0xff] %v3822
        %4079 = vst [vmem:[%s211 + $0x610] sm:$0xff] %v3823
        %4080 = vst [vmem:[%s211 + $0x618] sm:$0xff] %v3824
        %4081 = vst [vmem:[%s211 + $0x620] sm:$0xff] %v3825
        %4082 = vst [vmem:[%s211 + $0x628] sm:$0xff] %v3826
        %4083 = vst [vmem:[%s211 + $0x630] sm:$0xff] %v3827
        %4084 = vst [vmem:[%s211 + $0x638] sm:$0xff] %v3828
        %4085 = vst [vmem:[%s211 + $0x640] sm:$0xff] %v3829
        %4086 = vst [vmem:[%s211 + $0x648] sm:$0xff] %v3830
        %4087 = vst [vmem:[%s211 + $0x650] sm:$0xff] %v3831
        %4088 = vst [vmem:[%s211 + $0x658] sm:$0xff] %v3832
        %4089 = vst [vmem:[%s211 + $0x660] sm:$0xff] %v3833
        %4090 = vst [vmem:[%s211 + $0x668] sm:$0xff] %v3834
        %4091 = vst [vmem:[%s211 + $0x670] sm:$0xff] %v3835
        %4092 = vst [vmem:[%s211 + $0x678] sm:$0xff] %v3836
        %4093 = vst [vmem:[%s211 + $0x680] sm:$0xff] %v3837
        %4094 = vst [vmem:[%s211 + $0x688] sm:$0xff] %v3838
        %4095 = vst [vmem:[%s211 + $0x690] sm:$0xff] %v3839
        %4096 = vst [vmem:[%s211 + $0x698] sm:$0xff] %v3840
        %4097 = vst [vmem:[%s211 + $0x6a0] sm:$0xff] %v3841
        %4098 = vst [vmem:[%s211 + $0x6a8] sm:$0xff] %v3842
        %4099 = vst [vmem:[%s211 + $0x6b0] sm:$0xff] %v3843
        %4100 = vst [vmem:[%s211 + $0x6b8] sm:$0xff] %v3844
        %4101 = vst [vmem:[%s211 + $0x6c0] sm:$0xff] %v3845
        %4102 = vst [vmem:[%s211 + $0x6c8] sm:$0xff] %v3846
        %4103 = vst [vmem:[%s211 + $0x6d0] sm:$0xff] %v3847
        %4104 = vst [vmem:[%s211 + $0x6d8] sm:$0xff] %v3848
        %4105 = vst [vmem:[%s211 + $0x6e0] sm:$0xff] %v3849
        %4106 = vst [vmem:[%s211 + $0x6e8] sm:$0xff] %v3850
        %4107 = vst [vmem:[%s211 + $0x6f0] sm:$0xff] %v3851
        %4108 = vst [vmem:[%s211 + $0x6f8] sm:$0xff] %v3852
        %4109 = vst [vmem:[%s211 + $0x700] sm:$0xff] %v3853
        %4110 = vst [vmem:[%s211 + $0x708] sm:$0xff] %v3854
        %4111 = vst [vmem:[%s211 + $0x710] sm:$0xff] %v3855
        %4112 = vst [vmem:[%s211 + $0x718] sm:$0xff] %v3856
        %4113 = vst [vmem:[%s211 + $0x720] sm:$0xff] %v3857
        %4114 = vst [vmem:[%s211 + $0x728] sm:$0xff] %v3858
        %4115 = vst [vmem:[%s211 + $0x730] sm:$0xff] %v3859
        %4116 = vst [vmem:[%s211 + $0x738] sm:$0xff] %v3860
        %4117 = vst [vmem:[%s211 + $0x740] sm:$0xff] %v3861
        %4118 = vst [vmem:[%s211 + $0x748] sm:$0xff] %v3862
        %4119 = vst [vmem:[%s211 + $0x750] sm:$0xff] %v3863
        %4120 = vst [vmem:[%s211 + $0x758] sm:$0xff] %v3864
        %4121 = vst [vmem:[%s211 + $0x760] sm:$0xff] %v3865
        %4122 = vst [vmem:[%s211 + $0x768] sm:$0xff] %v3866
        %4123 = vst [vmem:[%s211 + $0x770] sm:$0xff] %v3867
        %4124 = vst [vmem:[%s211 + $0x778] sm:$0xff] %v3868
        %4125 = vst [vmem:[%s211 + $0x780] sm:$0xff] %v3869
        %4126 = vst [vmem:[%s211 + $0x788] sm:$0xff] %v3870
        %4127 = vst [vmem:[%s211 + $0x790] sm:$0xff] %v3871
        %4128 = vst [vmem:[%s211 + $0x798] sm:$0xff] %v3872
        %4129 = vst [vmem:[%s211 + $0x7a0] sm:$0xff] %v3873
        %4130 = vst [vmem:[%s211 + $0x7a8] sm:$0xff] %v3874
        %4131 = vst [vmem:[%s211 + $0x7b0] sm:$0xff] %v3875
        %4132 = vst [vmem:[%s211 + $0x7b8] sm:$0xff] %v3876
        %4133 = vst [vmem:[%s211 + $0x7c0] sm:$0xff] %v3877
        %4134 = vst [vmem:[%s211 + $0x7c8] sm:$0xff] %v3878
        %4135 = vst [vmem:[%s211 + $0x7d0] sm:$0xff] %v3879
        %4136 = vst [vmem:[%s211 + $0x7d8] sm:$0xff] %v3880
        %4137 = vst [vmem:[%s211 + $0x7e0] sm:$0xff] %v3881
        %4138 = vst [vmem:[%s211 + $0x7e8] sm:$0xff] %v3882
        %4139 = vst [vmem:[%s211 + $0x7f0] sm:$0xff] %v3883
        %4140 = vst [vmem:[%s211 + $0x7f8] sm:$0xff] %v3884
        %s4141 = sand.u32 %s97, 1
        %s4142 = scalar_lea.sflag [#allocation4], %s4141
        %s4143 = sand.u32 %s97, 1
        %s4144 = smul.addr %s4143, 2048
        %s4145 = scalar_lea.vmem [#allocation7], %s4144
        // Predicated region
        $region41: #{tpu_custom_call.1} parent=31 // pred_check
          %p4146 = pneg %p107
        $region42: #{tpu_custom_call.1} parent=31 // pred_check_branch
          %4148 = sbr.rel (%p4146) target = $region44
        $region43: #{tpu_custom_call.1} parent=31 // pred_region
          %s4149 = smul.u32 32, %s21
          %s4150 = ssub.s32 33, %s4149
          %p4151 = scmp.lt.s32.totalorder %s4150, 32
          %s4152 = scalar_select %p4151, %s4150, 32
          %s4153 = smul.u32 128, %s4152
          %s4154 = smul.u32 %s4153, 4
          %s4155 = smul.u32 %s4154, 2
          %s4157 = ssub.s32 32768, %s4155
          %4158 = vsyncadd %s4142, %s4157
          %p4159 = scmp.ne.s32.totalorder 0, %s4155
          %s4160 = smul.addr %s4149, 8
          %s4161 = smul.addr %s4160, 128
          %s4162 = scalar_lea.hbm %s3, %s4161
          %s4163 = smul.u32 %s4152, 4
          %s4164 = smul.u32 16, %s4163
          %s4165 = sshll.u32 %s4145, 4
          %s4166 = int_to_ptr.vmem [resolvable:$true] %s4165
          %s4167 = sshll.u32 %s4164, 4
          %4171 = dma.vmem_to_hbm [thread:$0]  (%p4159), %s4166, %s4167, %s4162, %s4142, 256, 256, 16
        $region44: #{tpu_custom_call.1} parent=31 // pred_fallthru
          _
      $region32: #{tpu_custom_call.1} parent=5 // pred_fallthru
        _
      %p4172 = scmp.le.s32.totalorder 2, %s16
      // Predicated region
      $region45: #{tpu_custom_call.1} parent=5 // pred_check
        %p4173 = pneg %p4172
      $region46: #{tpu_custom_call.1} parent=5 // pred_check_branch
        %4175 = sbr.rel (%p4173) target = $region48
      $region47: #{tpu_custom_call.1} parent=5 // pred_region
        %s4176 = ssub.s32 %s16, 2
        // Predicated region
        $region49: #{tpu_custom_call.1} parent=47 // pred_check
          %p4177 = pneg %p113
        $region50: #{tpu_custom_call.1} parent=47 // pred_check_branch
          %4179 = sbr.rel (%p4177) target = $region52
        $region51: #{tpu_custom_call.1} parent=47 // pred_region
          %s4180 = sand.u32 %s98, 1
          %s4181 = scalar_lea.sflag [#allocation4], %s4180
          %s4182 = sand.u32 %s98, 1
          %s4183 = smul.addr %s4182, 2048
          %s4184 = scalar_lea.vmem [#allocation7], %s4183
          %4185 = dma.done %s4181, 32768
        $region52: #{tpu_custom_call.1} parent=47 // pred_fallthru
          _
      $region48: #{tpu_custom_call.1} parent=5 // pred_fallthru
        _
    $region6: #{tpu_custom_call.1} parent=1 // loop_footer
      %s20 = sadd.s32 1, %s16
    $region7: #{tpu_custom_call.1} parent=1 // loop_footer_branch
      %15 = sbr.rel target = $region3
    $region8: #{tpu_custom_call.1} parent=1 // loop_exit
      _
    %4186 = vsyncpa [#allocation3], 1
    %s4187 = scalar_lea.sflag [#allocation3], 1
    %4188 = vsyncpa %s4187, 1
    %4189 = vsyncpa [#allocation6], 1
    %4190 = vsyncpa [#allocation4], 1
    %s4191 = scalar_lea.sflag [#allocation4], 1
    %4192 = vsyncpa %s4191, 1

</llo_original>
